<compile_context>
chip_gen: v7x
topology: tpu7x:2x2x1
jax: 0.10.0
libtpu: 0.0.40
codegen_flags: <defaults>
</compile_context>

<pallas_src>
import jax
import jax.numpy as jnp
from jax.experimental import pallas as pl
from jax.experimental.pallas import tpu as pltpu


# =============================================================================
# Kernel 1: per-channel sum / sum-of-squares (BatchNorm batch statistics),
# tiled grid reduction over rows.
# =============================================================================
def _stats_kernel(x_ref, s_ref, ss_ref):
    x = x_ref[...].astype(jnp.float32)                  # (TM, Cf)
    ps = jnp.sum(x, axis=0, keepdims=True)
    pss = jnp.sum(x * x, axis=0, keepdims=True)

    @pl.when(pl.program_id(0) == 0)
    def _():
        s_ref[...] = jnp.zeros_like(s_ref)
        ss_ref[...] = jnp.zeros_like(ss_ref)

    s_ref[...] += ps
    ss_ref[...] += pss


def _bn_batch_stats(x2d):
    """x2d: (M, C). Returns per-channel (mean, biased variance) in f32."""
    M, C = x2d.shape
    # Fold rows into lanes so this purely mem-bound reduction streams full
    # 128-lane vregs even when C < 128 (lane-dense loads).
    fold = 1
    if C < 128 and 128 % C == 0 and M % (128 // C) == 0:
        fold = 128 // C
    xf = x2d.reshape(M // fold, fold * C)
    Mf, Cf = xf.shape

    tm = Mf
    for cand in (1024, 512, 2048, 256, 4096, 8192, 128, 64, 32, 16, 8):
        if Mf % cand == 0 and cand * Cf * 4 <= (2 << 20):
            tm = cand
            break

    s, ss = pl.pallas_call(
        _stats_kernel,
        grid=(Mf // tm,),
        in_specs=[pl.BlockSpec((tm, Cf), lambda i: (i, 0))],
        out_specs=(pl.BlockSpec((1, Cf), lambda i: (0, 0)),
                   pl.BlockSpec((1, Cf), lambda i: (0, 0))),
        out_shape=(jax.ShapeDtypeStruct((1, Cf), jnp.float32),
                   jax.ShapeDtypeStruct((1, Cf), jnp.float32)),
        compiler_params=pltpu.CompilerParams(dimension_semantics=("arbitrary",)),
    )(xf)

    s = s.reshape(fold, C).sum(axis=0)
    ss = ss.reshape(fold, C).sum(axis=0)
    mean = s / M
    var = jnp.maximum(ss / M - mean * mean, 0.0)          # biased variance
    return mean, var


def bn_scale_shift(x2d, gamma, beta, eps):
    """Fold training-mode BatchNorm into per-channel scale/shift, f32 (1, C)."""
    # TODO(synk): running_mean/running_var tracking (momentum update, eval-mode
    # statistics) is not implemented; normalization uses per-batch statistics
    # like nn.BatchNorm3d in training mode.
    mean, var = _bn_batch_stats(x2d)
    inv = jax.lax.rsqrt(var + eps)
    scale = gamma.astype(jnp.float32) * inv
    shift = beta.astype(jnp.float32) - mean * scale
    return scale.reshape(1, -1), shift.reshape(1, -1)


# =============================================================================
# Kernel 2: fused (BN-apply + LeakyReLU + 3x3x3 Conv3d + bias [+ residual]).
# Grid (N, D, 3): one output plane per (n, d); kd is the reduction axis.
# =============================================================================
def _make_fused_conv_kernel(D, H, W, Cin, Cout, slope, add_residual):
    HW = H * W
    K9 = 9 * Cin

    def kernel(x_ref, scale_ref, shift_ref, w_ref, b_ref, *rest):
        if add_residual:
            res_ref, o_ref, acc_ref, xpad_ref = rest
        else:
            o_ref, acc_ref, xpad_ref = rest

        d = pl.program_id(1)
        kd = pl.program_id(2)
        dz = d + kd - 1                                    # input plane of this tap
        valid = jnp.logical_and(dz >= 0, dz < D)           # else zero-pad along D

        @pl.when(kd == 0)
        def _init():
            # Zero border of the H/W-padded scratch == conv zero padding of the
            # *normalized* activation; init the f32 accumulator with the bias.
            xpad_ref[...] = jnp.zeros_like(xpad_ref)
            acc_ref[...] = jnp.broadcast_to(b_ref[...], (HW, Cout))

        @pl.when(valid)
        def _accumulate():
            # Fused BatchNorm apply + LeakyReLU on the raw input plane (f32).
            x = x_ref[...].astype(jnp.float32)             # (H, W, Cin)
            xn = x * scale_ref[...] + shift_ref[...]
            xn = jnp.where(xn >= 0, xn, slope * xn)
            xpad_ref[1:H + 1, 1:W + 1, :] = xn

            # Merge the 9 (kh, kw) taps into the contraction dim: a single
            # (HW, 9*Cin) x (9*Cin, Cout) bf16 MXU matmul per kd.
            taps = [xpad_ref[kh:kh + H, kw:kw + W, :]
                    for kh in range(3) for kw in range(3)]
            patch = jnp.concatenate(taps, axis=-1).reshape(HW, K9)
            patch = patch.astype(jnp.bfloat16)
            acc_ref[...] += jnp.dot(patch, w_ref[kd],
                                    preferred_element_type=jnp.float32)

        @pl.when(kd == 2)
        def _store():
            out = acc_ref[...]
            if add_residual:
                out = out + res_ref[...].astype(jnp.float32)
            o_ref[...] = out.astype(o_ref.dtype)

    return kernel


def fused_bn_conv3d(x_ndhwc, scale, shift, w, b, *, slope, residual=None):
    """Conv3d(LeakyReLU(scale*x+shift), w, b) [+ residual]; 3x3x3, stride 1, pad 1.

    x_ndhwc:  (N, D, H, W, Cin) f32
    w:        (3, 3, 3, Cin, Cout)
    residual: (N, D, H, W, Cout) or None
    """
    N, D, H, W, Cin = x_ndhwc.shape
    Cout = w.shape[-1]
    HW = H * W
    K9 = 9 * Cin

    w3 = w.reshape(3, K9, Cout).astype(jnp.bfloat16)       # bf16 MXU operand
    b2 = b.reshape(1, Cout).astype(jnp.float32)

    def x_map(n, d, kd):
        # Clamped plane index; out-of-range taps are masked in-kernel (pl.when).
        return (n, jnp.clip(d + kd - 1, 0, D - 1), 0, 0, 0)

    in_specs = [
        pl.BlockSpec((None, None, H, W, Cin), x_map),
        pl.BlockSpec((1, Cin), lambda n, d, kd: (0, 0)),
        pl.BlockSpec((1, Cin), lambda n, d, kd: (0, 0)),
        pl.BlockSpec((3, K9, Cout), lambda n, d, kd: (0, 0, 0)),   # stays resident
        pl.BlockSpec((1, Cout), lambda n, d, kd: (0, 0)),
    ]
    args = [x_ndhwc, scale, shift, w3, b2]
    if residual is not None:
        assert residual.shape == (N, D, H, W, Cout), (
            "residual must match the conv output shape")
        in_specs.append(
            pl.BlockSpec((None, None, HW, Cout), lambda n, d, kd: (n, d, 0, 0)))
        args.append(residual.reshape(N, D, HW, Cout))

    out = pl.pallas_call(
        _make_fused_conv_kernel(D, H, W, Cin, Cout, slope, residual is not None),
        grid=(N, D, 3),
        in_specs=in_specs,
        out_specs=pl.BlockSpec((None, None, HW, Cout), lambda n, d, kd: (n, d, 0, 0)),
        out_shape=jax.ShapeDtypeStruct((N, D, HW, Cout), x_ndhwc.dtype),
        scratch_shapes=[
            pltpu.VMEM((HW, Cout), jnp.float32),           # f32 accumulator
            pltpu.VMEM((H + 2, W + 2, Cin), jnp.float32),  # zero-bordered plane
        ],
        compiler_params=pltpu.CompilerParams(
            dimension_semantics=("parallel", "parallel", "arbitrary"),
            vmem_limit_bytes=32 * 1024 * 1024),
    )(*args)
    return out.reshape(N, D, H, W, Cout)


# =============================================================================
# VoxRes forward (PyTorch NCDHW in / out).
# =============================================================================
@jax.jit
def voxres_forward(img_ncdhw, params):
    eps, slope = 1e-5, 1e-5
    x = jnp.transpose(img_ncdhw, (0, 2, 3, 4, 1)).astype(jnp.float32)   # NDHWC
    N, D, H, W, C = x.shape
    assert C == params["w2"].shape[-1], (
        "VoxRes residual (x += img) requires in_dims == conv_2 output channels")

    # bn_1 + LeakyReLU folded into conv_1
    s1, t1 = bn_scale_shift(x.reshape(N * D * H * W, C),
                            params["g1"], params["b1"], eps)
    y = fused_bn_conv3d(x, s1, t1, params["w1"], params["c1"], slope=slope)

    # bn_2 + LeakyReLU folded into conv_2, residual add fused
    C2 = y.shape[-1]
    s2, t2 = bn_scale_shift(y.reshape(N * D * H * W, C2),
                            params["g2"], params["b2"], eps)
    out = fused_bn_conv3d(y, s2, t2, params["w2"], params["c2"],
                          slope=slope, residual=x)
    return jnp.transpose(out, (0, 4, 1, 2, 3))                          # NCDHW


# =============================================================================
# Pure-JAX reference for the correctness check.
# =============================================================================
def _reference(x_ndhwc, params, eps, slope):
    def bn_lrelu(v, g, b):
        mean = v.mean(axis=(0, 1, 2, 3), keepdims=True)
        var = v.var(axis=(0, 1, 2, 3), keepdims=True)     # biased
        y = (v - mean) * jax.lax.rsqrt(var + eps) * g + b
        return jnp.where(y >= 0, y, slope * y)

    def conv(v, w, b):
        return jax.lax.conv_general_dilated(
            v, w, window_strides=(1, 1, 1), padding="SAME",
            dimension_numbers=("NDHWC", "DHWIO", "NDHWC")) + b

    y = conv(bn_lrelu(x_ndhwc, params["g1"], params["b1"]),
             params["w1"], params["c1"])
    z = conv(bn_lrelu(y, params["g2"], params["b2"]),
             params["w2"], params["c2"])
    return z + x_ndhwc


def init_params(key, in_dims):
    k = jax.random.split(key, 8)
    std1 = (2.0 / (in_dims * 27)) ** 0.5                  # kaiming-normal-ish
    std2 = (2.0 / (64 * 27)) ** 0.5
    return {
        "g1": 1.0 + 0.05 * jax.random.normal(k[0], (in_dims,), jnp.float32),
        "b1": 0.05 * jax.random.normal(k[1], (in_dims,), jnp.float32),
        "w1": std1 * jax.random.normal(k[2], (3, 3, 3, in_dims, 64), jnp.float32),
        "c1": 0.01 * jax.random.normal(k[3], (64,), jnp.float32),
        "g2": 1.0 + 0.05 * jax.random.normal(k[4], (64,), jnp.float32),
        "b2": 0.05 * jax.random.normal(k[5], (64,), jnp.float32),
        "w2": std2 * jax.random.normal(k[6], (3, 3, 3, 64, 64), jnp.float32),
        "c2": 0.01 * jax.random.normal(k[7], (64,), jnp.float32),
    }


if __name__ == "__main__":
    # The VoxRes residual (x += img) requires in_dims == 64 (conv_2 out
    # channels), matching how the block is used in the original network.
    # Distinct D/H/W exercise all three spatial axes.
    N, C, D, H, W = 2, 64, 8, 16, 8
    key = jax.random.PRNGKey(0)
    kx, kp = jax.random.split(key)
    img = jax.random.normal(kx, (N, C, D, H, W), jnp.float32)
    params = init_params(kp, in_dims=C)

    out = jax.block_until_ready(voxres_forward(img, params))
    assert out.shape == (N, 64, D, H, W) and out.dtype == jnp.float32

    ref = _reference(jnp.transpose(img, (0, 2, 3, 4, 1)), params,
                     eps=1e-5, slope=1e-5)
    ref = jnp.transpose(ref, (0, 4, 1, 2, 3))
    err = float(jnp.max(jnp.abs(out - ref)))
    assert err < 0.25, f"max |pallas - reference| too large: {err}"
    print("KERNEL_OK")
</pallas_src>

<mosaic_0001>
module attributes {stable_mosaic.version = 11 : i64} {
  func.func @_stats_kernel(%arg0: i32, %arg1: memref<1024x128xf32, #tpu.memory_space<vmem>>, %arg2: memref<1x128xf32, #tpu.memory_space<vmem>>, %arg3: memref<1x128xf32, #tpu.memory_space<vmem>>) attributes {dimension_semantics = [#tpu.dimension_semantics<arbitrary>], iteration_bounds = array<i64: 1>, scalar_prefetch = 0 : i64, scratch_operands = 0 : i64, tpu.core_type = #tpu.core_type<tc>, window_params = [{transform_indices = @transform_0, window_bounds = array<i64: 1024, 128>}, {pipeline_mode = #tpu.pipeline_mode<synchronous>, transform_indices = @transform_1, window_bounds = array<i64: 1, 128>}, {pipeline_mode = #tpu.pipeline_mode<synchronous>, transform_indices = @transform_2, window_bounds = array<i64: 1, 128>}]} {
    %c0 = arith.constant 0 : index
    %c0_0 = arith.constant 0 : index
    %0 = vector.load %arg1[%c0, %c0_0] : memref<1024x128xf32, #tpu.memory_space<vmem>>, vector<1024x128xf32>
    %cst = arith.constant dense<0.000000e+00> : vector<128xf32>
    %1 = vector.multi_reduction <add>, %0, %cst [0] : vector<1024x128xf32> to vector<128xf32>
    %2 = vector.shape_cast %1 : vector<128xf32> to vector<1x128xf32>
    %3 = arith.mulf %0, %0 : vector<1024x128xf32>
    %cst_1 = arith.constant dense<0.000000e+00> : vector<128xf32>
    %4 = vector.multi_reduction <add>, %3, %cst_1 [0] : vector<1024x128xf32> to vector<128xf32>
    %5 = vector.shape_cast %4 : vector<128xf32> to vector<1x128xf32>
    %c0_i32 = arith.constant 0 : i32
    %6 = arith.cmpi eq, %arg0, %c0_i32 : i32
    %7 = arith.extui %6 : i1 to i32
    %c0_i32_2 = arith.constant 0 : i32
    %8 = arith.cmpi ne, %7, %c0_i32_2 : i32
    scf.if %8 {
      %cst_11 = arith.constant 0.000000e+00 : f32
      %15 = vector.broadcast %cst_11 : f32 to vector<1x128xf32>
      %c0_12 = arith.constant 0 : index
      %c0_13 = arith.constant 0 : index
      %16 = vector.load %arg2[%c0_12, %c0_13] : memref<1x128xf32, #tpu.memory_space<vmem>>, vector<1x128xf32>
      tpu.vector_store %arg2[%c0_12, %c0_13], %15 {strides = array<i32>} : memref<1x128xf32, #tpu.memory_space<vmem>>, vector<1x128xf32>,
      %cst_14 = arith.constant 0.000000e+00 : f32
      %17 = vector.broadcast %cst_14 : f32 to vector<1x128xf32>
      %c0_15 = arith.constant 0 : index
      %c0_16 = arith.constant 0 : index
      %18 = vector.load %arg3[%c0_15, %c0_16] : memref<1x128xf32, #tpu.memory_space<vmem>>, vector<1x128xf32>
      tpu.vector_store %arg3[%c0_15, %c0_16], %17 {strides = array<i32>} : memref<1x128xf32, #tpu.memory_space<vmem>>, vector<1x128xf32>,
    } else {
    }
    %c0_3 = arith.constant 0 : index
    %c0_4 = arith.constant 0 : index
    %9 = vector.load %arg2[%c0_3, %c0_4] : memref<1x128xf32, #tpu.memory_space<vmem>>, vector<1x128xf32>
    %10 = arith.addf %9, %2 : vector<1x128xf32>
    %c0_5 = arith.constant 0 : index
    %c0_6 = arith.constant 0 : index
    %11 = vector.load %arg2[%c0_5, %c0_6] : memref<1x128xf32, #tpu.memory_space<vmem>>, vector<1x128xf32>
    tpu.vector_store %arg2[%c0_5, %c0_6], %10 {strides = array<i32>} : memref<1x128xf32, #tpu.memory_space<vmem>>, vector<1x128xf32>,
    %c0_7 = arith.constant 0 : index
    %c0_8 = arith.constant 0 : index
    %12 = vector.load %arg3[%c0_7, %c0_8] : memref<1x128xf32, #tpu.memory_space<vmem>>, vector<1x128xf32>
    %13 = arith.addf %12, %5 : vector<1x128xf32>
    %c0_9 = arith.constant 0 : index
    %c0_10 = arith.constant 0 : index
    %14 = vector.load %arg3[%c0_9, %c0_10] : memref<1x128xf32, #tpu.memory_space<vmem>>, vector<1x128xf32>
    tpu.vector_store %arg3[%c0_9, %c0_10], %13 {strides = array<i32>} : memref<1x128xf32, #tpu.memory_space<vmem>>, vector<1x128xf32>,
    return
  }
  func.func @transform_0(%arg0: i32) -> (i32, i32) {
    %c0_i32 = arith.constant 0 : i32
    %c0_i32_0 = arith.constant 0 : i32
    return %arg0, %c0_i32 : i32, i32
  }
  func.func @transform_1(%arg0: i32) -> (i32, i32) {
    %c0_i32 = arith.constant 0 : i32
    %c0_i32_0 = arith.constant 0 : i32
    %c0_i32_1 = arith.constant 0 : i32
    return %c0_i32, %c0_i32_0 : i32, i32
  }
  func.func @transform_2(%arg0: i32) -> (i32, i32) {
    %c0_i32 = arith.constant 0 : i32
    %c0_i32_0 = arith.constant 0 : i32
    %c0_i32_1 = arith.constant 0 : i32
    return %c0_i32, %c0_i32_0 : i32, i32
  }
}

module attributes {stable_mosaic.version = 11 : i64} {
  func.func @kernel(%arg0: i32, %arg1: i32, %arg2: i32, %arg3: memref<1x1x16x8x64xf32, #tpu.memory_space<vmem>>, %arg4: memref<1x64xf32, #tpu.memory_space<vmem>>, %arg5: memref<1x64xf32, #tpu.memory_space<vmem>>, %arg6: memref<3x576x64xbf16, #tpu.memory_space<vmem>>, %arg7: memref<1x64xf32, #tpu.memory_space<vmem>>, %arg8: memref<1x1x128x64xf32, #tpu.memory_space<vmem>>, %arg9: memref<128x64xf32, #tpu.memory_space<vmem>>, %arg10: memref<18x10x64xf32, #tpu.memory_space<vmem>>) attributes {dimension_semantics = [#tpu.dimension_semantics<parallel>, #tpu.dimension_semantics<parallel>, #tpu.dimension_semantics<arbitrary>], iteration_bounds = array<i64: 2, 8, 3>, scalar_prefetch = 0 : i64, scratch_operands = 2 : i64, tpu.core_type = #tpu.core_type<tc>, window_params = [{transform_indices = @transform_0, window_bounds = array<i64: 1, 1, 16, 8, 64>}, {pipeline_mode = #tpu.pipeline_mode<synchronous>, transform_indices = @transform_1, window_bounds = array<i64: 1, 64>}, {pipeline_mode = #tpu.pipeline_mode<synchronous>, transform_indices = @transform_2, window_bounds = array<i64: 1, 64>}, {pipeline_mode = #tpu.pipeline_mode<synchronous>, transform_indices = @transform_3, window_bounds = array<i64: 3, 576, 64>}, {pipeline_mode = #tpu.pipeline_mode<synchronous>, transform_indices = @transform_4, window_bounds = array<i64: 1, 64>}, {transform_indices = @transform_5, window_bounds = array<i64: 1, 1, 128, 64>}]} {
    %0 = arith.addi %arg1, %arg2 : i32
    %c1_i32 = arith.constant 1 : i32
    %1 = arith.subi %0, %c1_i32 : i32
    %c0_i32 = arith.constant 0 : i32
    %2 = arith.cmpi sge, %1, %c0_i32 : i32
    %c8_i32 = arith.constant 8 : i32
    %3 = arith.cmpi slt, %1, %c8_i32 : i32
    %4 = arith.andi %2, %3 : i1
    %c0_i32_0 = arith.constant 0 : i32
    %5 = arith.cmpi eq, %arg2, %c0_i32_0 : i32
    %6 = arith.extui %5 : i1 to i32
    %c0_i32_1 = arith.constant 0 : i32
    %7 = arith.cmpi ne, %6, %c0_i32_1 : i32
    scf.if %7 {
      %cst = arith.constant 0.000000e+00 : f32
      %13 = vector.broadcast %cst : f32 to vector<18x10x64xf32>
      %c0 = arith.constant 0 : index
      %c0_4 = arith.constant 0 : index
      %c0_5 = arith.constant 0 : index
      %14 = vector.load %arg10[%c0, %c0_4, %c0_5] : memref<18x10x64xf32, #tpu.memory_space<vmem>>, vector<18x10x64xf32>
      tpu.vector_store %arg10[%c0, %c0_4, %c0_5], %13 {strides = array<i32>} : memref<18x10x64xf32, #tpu.memory_space<vmem>>, vector<18x10x64xf32>,
      %c0_6 = arith.constant 0 : index
      %c0_7 = arith.constant 0 : index
      %15 = vector.load %arg7[%c0_6, %c0_7] : memref<1x64xf32, #tpu.memory_space<vmem>>, vector<1x64xf32>
      %16 = vector.shape_cast %15 : vector<1x64xf32> to vector<1x64xf32>
      %17 = vector.broadcast %16 : vector<1x64xf32> to vector<128x64xf32>
      %c0_8 = arith.constant 0 : index
      %c0_9 = arith.constant 0 : index
      %18 = vector.load %arg9[%c0_8, %c0_9] : memref<128x64xf32, #tpu.memory_space<vmem>>, vector<128x64xf32>
      tpu.vector_store %arg9[%c0_8, %c0_9], %17 {strides = array<i32>} : memref<128x64xf32, #tpu.memory_space<vmem>>, vector<128x64xf32>,
    } else {
    }
    %8 = arith.extui %4 : i1 to i32
    %c0_i32_2 = arith.constant 0 : i32
    %9 = arith.cmpi ne, %8, %c0_i32_2 : i32
    scf.if %9 {
      %c0 = arith.constant 0 : index
      %c0_4 = arith.constant 0 : index
      %c0_5 = arith.constant 0 : index
      %c0_6 = arith.constant 0 : index
      %c0_7 = arith.constant 0 : index
      %13 = vector.load %arg3[%c0, %c0_4, %c0_5, %c0_6, %c0_7] : memref<1x1x16x8x64xf32, #tpu.memory_space<vmem>>, vector<1x1x16x8x64xf32>
      %14 = vector.shape_cast %13 : vector<1x1x16x8x64xf32> to vector<16x8x64xf32>
      %c0_8 = arith.constant 0 : index
      %c0_9 = arith.constant 0 : index
      %15 = vector.load %arg4[%c0_8, %c0_9] : memref<1x64xf32, #tpu.memory_space<vmem>>, vector<1x64xf32>
      %16 = vector.shape_cast %15 : vector<1x64xf32> to vector<1x1x64xf32>
      %17 = vector.broadcast %16 : vector<1x1x64xf32> to vector<16x8x64xf32>
      %18 = arith.mulf %14, %17 : vector<16x8x64xf32>
      %c0_10 = arith.constant 0 : index
      %c0_11 = arith.constant 0 : index
      %19 = vector.load %arg5[%c0_10, %c0_11] : memref<1x64xf32, #tpu.memory_space<vmem>>, vector<1x64xf32>
      %20 = vector.shape_cast %19 : vector<1x64xf32> to vector<1x1x64xf32>
      %21 = vector.broadcast %20 : vector<1x1x64xf32> to vector<16x8x64xf32>
      %22 = arith.addf %18, %21 : vector<16x8x64xf32>
      %cst = arith.constant 0.000000e+00 : f32
      %23 = vector.broadcast %cst : f32 to vector<16x8x64xf32>
      %24 = arith.cmpf oge, %22, %23 : vector<16x8x64xf32>
      %cst_12 = arith.constant 9.99999974E-6 : f32
      %25 = vector.broadcast %cst_12 : f32 to vector<16x8x64xf32>
      %26 = arith.mulf %25, %22 : vector<16x8x64xf32>
      %27 = arith.select %24, %22, %26 : vector<16x8x64xi1>, vector<16x8x64xf32>
      %c1 = arith.constant 1 : index
      %c1_13 = arith.constant 1 : index
      %c0_14 = arith.constant 0 : index
      %28 = vector.load %arg10[%c1, %c1_13, %c0_14] : memref<18x10x64xf32, #tpu.memory_space<vmem>>, vector<16x8x64xf32>
      tpu.vector_store %arg10[%c1, %c1_13, %c0_14], %27 {strides = array<i32>} : memref<18x10x64xf32, #tpu.memory_space<vmem>>, vector<16x8x64xf32>,
      %c0_15 = arith.constant 0 : index
      %c0_16 = arith.constant 0 : index
      %c0_17 = arith.constant 0 : index
      %29 = vector.load %arg10[%c0_15, %c0_16, %c0_17] : memref<18x10x64xf32, #tpu.memory_space<vmem>>, vector<16x8x64xf32>
      %c0_18 = arith.constant 0 : index
      %c1_19 = arith.constant 1 : index
      %c0_20 = arith.constant 0 : index
      %30 = vector.load %arg10[%c0_18, %c1_19, %c0_20] : memref<18x10x64xf32, #tpu.memory_space<vmem>>, vector<16x8x64xf32>
      %c0_21 = arith.constant 0 : index
      %c2 = arith.constant 2 : index
      %c0_22 = arith.constant 0 : index
      %31 = vector.load %arg10[%c0_21, %c2, %c0_22] : memref<18x10x64xf32, #tpu.memory_space<vmem>>, vector<16x8x64xf32>
      %c1_23 = arith.constant 1 : index
      %c0_24 = arith.constant 0 : index
      %c0_25 = arith.constant 0 : index
      %32 = vector.load %arg10[%c1_23, %c0_24, %c0_25] : memref<18x10x64xf32, #tpu.memory_space<vmem>>, vector<16x8x64xf32>
      %c1_26 = arith.constant 1 : index
      %c1_27 = arith.constant 1 : index
      %c0_28 = arith.constant 0 : index
      %33 = vector.load %arg10[%c1_26, %c1_27, %c0_28] : memref<18x10x64xf32, #tpu.memory_space<vmem>>, vector<16x8x64xf32>
      %c1_29 = arith.constant 1 : index
      %c2_30 = arith.constant 2 : index
      %c0_31 = arith.constant 0 : index
      %34 = vector.load %arg10[%c1_29, %c2_30, %c0_31] : memref<18x10x64xf32, #tpu.memory_space<vmem>>, vector<16x8x64xf32>
      %c2_32 = arith.constant 2 : index
      %c0_33 = arith.constant 0 : index
      %c0_34 = arith.constant 0 : index
      %35 = vector.load %arg10[%c2_32, %c0_33, %c0_34] : memref<18x10x64xf32, #tpu.memory_space<vmem>>, vector<16x8x64xf32>
      %c2_35 = arith.constant 2 : index
      %c1_36 = arith.constant 1 : index
      %c0_37 = arith.constant 0 : index
      %36 = vector.load %arg10[%c2_35, %c1_36, %c0_37] : memref<18x10x64xf32, #tpu.memory_space<vmem>>, vector<16x8x64xf32>
      %c2_38 = arith.constant 2 : index
      %c2_39 = arith.constant 2 : index
      %c0_40 = arith.constant 0 : index
      %37 = vector.load %arg10[%c2_38, %c2_39, %c0_40] : memref<18x10x64xf32, #tpu.memory_space<vmem>>, vector<16x8x64xf32>
      %38 = tpu.concatenate %29, %30, %31, %32, %33, %34, %35, %36, %37 in 2 : vector<16x8x64xf32>, vector<16x8x64xf32>, vector<16x8x64xf32>, vector<16x8x64xf32>, vector<16x8x64xf32>, vector<16x8x64xf32>, vector<16x8x64xf32>, vector<16x8x64xf32>, vector<16x8x64xf32> -> vector<16x8x576xf32>
      %39 = vector.shape_cast %38 : vector<16x8x576xf32> to vector<128x576xf32>
      %40 = arith.truncf %39 : vector<128x576xf32> to vector<128x576xbf16>
      %c0_41 = arith.constant 0 : index
      %c0_42 = arith.constant 0 : index
      %41 = vector.load %arg9[%c0_41, %c0_42] : memref<128x64xf32, #tpu.memory_space<vmem>>, vector<128x64xf32>
      %42 = arith.index_cast %arg2 : i32 to index
      %c0_43 = arith.constant 0 : index
      %c0_44 = arith.constant 0 : index
      %43 = vector.load %arg6[%42, %c0_43, %c0_44] : memref<3x576x64xbf16, #tpu.memory_space<vmem>>, vector<1x576x64xbf16>
      %44 = vector.shape_cast %43 : vector<1x576x64xbf16> to vector<576x64xbf16>
      %cst_45 = arith.constant dense<0.000000e+00> : vector<128x64xf32>
      %45 = tpu.matmul %40, %44, %cst_45 {dimension_numbers = #tpu.dot_dimension_numbers<[1], [0], [0], [1], [0, 0, 1, 1], [], []>} : vector<128x576xbf16>, vector<576x64xbf16>, vector<128x64xf32> -> vector<128x64xf32>
      %46 = arith.addf %41, %45 : vector<128x64xf32>
      %c0_46 = arith.constant 0 : index
      %c0_47 = arith.constant 0 : index
      %47 = vector.load %arg9[%c0_46, %c0_47] : memref<128x64xf32, #tpu.memory_space<vmem>>, vector<128x64xf32>
      tpu.vector_store %arg9[%c0_46, %c0_47], %46 {strides = array<i32>} : memref<128x64xf32, #tpu.memory_space<vmem>>, vector<128x64xf32>,
    } else {
    }
    %c2_i32 = arith.constant 2 : i32
    %10 = arith.cmpi eq, %arg2, %c2_i32 : i32
    %11 = arith.extui %10 : i1 to i32
    %c0_i32_3 = arith.constant 0 : i32
    %12 = arith.cmpi ne, %11, %c0_i32_3 : i32
    scf.if %12 {
      %c0 = arith.constant 0 : index
      %c0_4 = arith.constant 0 : index
      %13 = vector.load %arg9[%c0, %c0_4] : memref<128x64xf32, #tpu.memory_space<vmem>>, vector<128x64xf32>
      %c0_5 = arith.constant 0 : index
      %c0_6 = arith.constant 0 : index
      %c0_7 = arith.constant 0 : index
      %c0_8 = arith.constant 0 : index
      %14 = vector.load %arg8[%c0_5, %c0_6, %c0_7, %c0_8] : memref<1x1x128x64xf32, #tpu.memory_space<vmem>>, vector<1x1x128x64xf32>
      %15 = vector.shape_cast %14 : vector<1x1x128x64xf32> to vector<128x64xf32>
      %16 = vector.shape_cast %13 : vector<128x64xf32> to vector<1x1x128x64xf32>
      tpu.vector_store %arg8[%c0_5, %c0_6, %c0_7, %c0_8], %16 {strides = array<i32>} : memref<1x1x128x64xf32, #tpu.memory_space<vmem>>, vector<1x1x128x64xf32>,
    } else {
    }
    return
  }
  func.func @transform_0(%arg0: i32, %arg1: i32, %arg2: i32) -> (i32, i32, i32, i32, i32) {
    %0 = arith.addi %arg1, %arg2 : i32
    %c1_i32 = arith.constant 1 : i32
    %1 = arith.subi %0, %c1_i32 : i32
    %c0_i32 = arith.constant 0 : i32
    %c7_i32 = arith.constant 7 : i32
    %2 = arith.maxsi %c0_i32, %1 : i32
    %3 = arith.minsi %c7_i32, %2 : i32
    %c0_i32_0 = arith.constant 0 : i32
    %c0_i32_1 = arith.constant 0 : i32
    %c0_i32_2 = arith.constant 0 : i32
    %c0_i32_3 = arith.constant 0 : i32
    return %arg0, %3, %c0_i32_0, %c0_i32_1, %c0_i32_2 : i32, i32, i32, i32, i32
  }
  func.func @transform_1(%arg0: i32, %arg1: i32, %arg2: i32) -> (i32, i32) {
    %c0_i32 = arith.constant 0 : i32
    %c0_i32_0 = arith.constant 0 : i32
    %c0_i32_1 = arith.constant 0 : i32
    return %c0_i32, %c0_i32_0 : i32, i32
  }
  func.func @transform_2(%arg0: i32, %arg1: i32, %arg2: i32) -> (i32, i32) {
    %c0_i32 = arith.constant 0 : i32
    %c0_i32_0 = arith.constant 0 : i32
    %c0_i32_1 = arith.constant 0 : i32
    return %c0_i32, %c0_i32_0 : i32, i32
  }
  func.func @transform_3(%arg0: i32, %arg1: i32, %arg2: i32) -> (i32, i32, i32) {
    %c0_i32 = arith.constant 0 : i32
    %c0_i32_0 = arith.constant 0 : i32
    %c0_i32_1 = arith.constant 0 : i32
    %c0_i32_2 = arith.constant 0 : i32
    return %c0_i32, %c0_i32_0, %c0_i32_1 : i32, i32, i32
  }
  func.func @transform_4(%arg0: i32, %arg1: i32, %arg2: i32) -> (i32, i32) {
    %c0_i32 = arith.constant 0 : i32
    %c0_i32_0 = arith.constant 0 : i32
    %c0_i32_1 = arith.constant 0 : i32
    return %c0_i32, %c0_i32_0 : i32, i32
  }
  func.func @transform_5(%arg0: i32, %arg1: i32, %arg2: i32) -> (i32, i32, i32, i32) {
    %c0_i32 = arith.constant 0 : i32
    %c0_i32_0 = arith.constant 0 : i32
    %c0_i32_1 = arith.constant 0 : i32
    return %arg0, %arg1, %c0_i32, %c0_i32_0 : i32, i32, i32, i32
  }
}

module attributes {stable_mosaic.version = 11 : i64} {
  func.func @kernel(%arg0: i32, %arg1: i32, %arg2: i32, %arg3: memref<1x1x16x8x64xf32, #tpu.memory_space<vmem>>, %arg4: memref<1x64xf32, #tpu.memory_space<vmem>>, %arg5: memref<1x64xf32, #tpu.memory_space<vmem>>, %arg6: memref<3x576x64xbf16, #tpu.memory_space<vmem>>, %arg7: memref<1x64xf32, #tpu.memory_space<vmem>>, %arg8: memref<1x1x128x64xf32, #tpu.memory_space<vmem>>, %arg9: memref<1x1x128x64xf32, #tpu.memory_space<vmem>>, %arg10: memref<128x64xf32, #tpu.memory_space<vmem>>, %arg11: memref<18x10x64xf32, #tpu.memory_space<vmem>>) attributes {dimension_semantics = [#tpu.dimension_semantics<parallel>, #tpu.dimension_semantics<parallel>, #tpu.dimension_semantics<arbitrary>], iteration_bounds = array<i64: 2, 8, 3>, scalar_prefetch = 0 : i64, scratch_operands = 2 : i64, tpu.core_type = #tpu.core_type<tc>, window_params = [{transform_indices = @transform_0, window_bounds = array<i64: 1, 1, 16, 8, 64>}, {pipeline_mode = #tpu.pipeline_mode<synchronous>, transform_indices = @transform_1, window_bounds = array<i64: 1, 64>}, {pipeline_mode = #tpu.pipeline_mode<synchronous>, transform_indices = @transform_2, window_bounds = array<i64: 1, 64>}, {pipeline_mode = #tpu.pipeline_mode<synchronous>, transform_indices = @transform_3, window_bounds = array<i64: 3, 576, 64>}, {pipeline_mode = #tpu.pipeline_mode<synchronous>, transform_indices = @transform_4, window_bounds = array<i64: 1, 64>}, {transform_indices = @transform_5, window_bounds = array<i64: 1, 1, 128, 64>}, {transform_indices = @transform_6, window_bounds = array<i64: 1, 1, 128, 64>}]} {
    %0 = arith.addi %arg1, %arg2 : i32
    %c1_i32 = arith.constant 1 : i32
    %1 = arith.subi %0, %c1_i32 : i32
    %c0_i32 = arith.constant 0 : i32
    %2 = arith.cmpi sge, %1, %c0_i32 : i32
    %c8_i32 = arith.constant 8 : i32
    %3 = arith.cmpi slt, %1, %c8_i32 : i32
    %4 = arith.andi %2, %3 : i1
    %c0_i32_0 = arith.constant 0 : i32
    %5 = arith.cmpi eq, %arg2, %c0_i32_0 : i32
    %6 = arith.extui %5 : i1 to i32
    %c0_i32_1 = arith.constant 0 : i32
    %7 = arith.cmpi ne, %6, %c0_i32_1 : i32
    scf.if %7 {
      %cst = arith.constant 0.000000e+00 : f32
      %13 = vector.broadcast %cst : f32 to vector<18x10x64xf32>
      %c0 = arith.constant 0 : index
      %c0_4 = arith.constant 0 : index
      %c0_5 = arith.constant 0 : index
      %14 = vector.load %arg11[%c0, %c0_4, %c0_5] : memref<18x10x64xf32, #tpu.memory_space<vmem>>, vector<18x10x64xf32>
      tpu.vector_store %arg11[%c0, %c0_4, %c0_5], %13 {strides = array<i32>} : memref<18x10x64xf32, #tpu.memory_space<vmem>>, vector<18x10x64xf32>,
      %c0_6 = arith.constant 0 : index
      %c0_7 = arith.constant 0 : index
      %15 = vector.load %arg7[%c0_6, %c0_7] : memref<1x64xf32, #tpu.memory_space<vmem>>, vector<1x64xf32>
      %16 = vector.shape_cast %15 : vector<1x64xf32> to vector<1x64xf32>
      %17 = vector.broadcast %16 : vector<1x64xf32> to vector<128x64xf32>
      %c0_8 = arith.constant 0 : index
      %c0_9 = arith.constant 0 : index
      %18 = vector.load %arg10[%c0_8, %c0_9] : memref<128x64xf32, #tpu.memory_space<vmem>>, vector<128x64xf32>
      tpu.vector_store %arg10[%c0_8, %c0_9], %17 {strides = array<i32>} : memref<128x64xf32, #tpu.memory_space<vmem>>, vector<128x64xf32>,
    } else {
    }
    %8 = arith.extui %4 : i1 to i32
    %c0_i32_2 = arith.constant 0 : i32
    %9 = arith.cmpi ne, %8, %c0_i32_2 : i32
    scf.if %9 {
      %c0 = arith.constant 0 : index
      %c0_4 = arith.constant 0 : index
      %c0_5 = arith.constant 0 : index
      %c0_6 = arith.constant 0 : index
      %c0_7 = arith.constant 0 : index
      %13 = vector.load %arg3[%c0, %c0_4, %c0_5, %c0_6, %c0_7] : memref<1x1x16x8x64xf32, #tpu.memory_space<vmem>>, vector<1x1x16x8x64xf32>
      %14 = vector.shape_cast %13 : vector<1x1x16x8x64xf32> to vector<16x8x64xf32>
      %c0_8 = arith.constant 0 : index
      %c0_9 = arith.constant 0 : index
      %15 = vector.load %arg4[%c0_8, %c0_9] : memref<1x64xf32, #tpu.memory_space<vmem>>, vector<1x64xf32>
      %16 = vector.shape_cast %15 : vector<1x64xf32> to vector<1x1x64xf32>
      %17 = vector.broadcast %16 : vector<1x1x64xf32> to vector<16x8x64xf32>
      %18 = arith.mulf %14, %17 : vector<16x8x64xf32>
      %c0_10 = arith.constant 0 : index
      %c0_11 = arith.constant 0 : index
      %19 = vector.load %arg5[%c0_10, %c0_11] : memref<1x64xf32, #tpu.memory_space<vmem>>, vector<1x64xf32>
      %20 = vector.shape_cast %19 : vector<1x64xf32> to vector<1x1x64xf32>
      %21 = vector.broadcast %20 : vector<1x1x64xf32> to vector<16x8x64xf32>
      %22 = arith.addf %18, %21 : vector<16x8x64xf32>
      %cst = arith.constant 0.000000e+00 : f32
      %23 = vector.broadcast %cst : f32 to vector<16x8x64xf32>
      %24 = arith.cmpf oge, %22, %23 : vector<16x8x64xf32>
      %cst_12 = arith.constant 9.99999974E-6 : f32
      %25 = vector.broadcast %cst_12 : f32 to vector<16x8x64xf32>
      %26 = arith.mulf %25, %22 : vector<16x8x64xf32>
      %27 = arith.select %24, %22, %26 : vector<16x8x64xi1>, vector<16x8x64xf32>
      %c1 = arith.constant 1 : index
      %c1_13 = arith.constant 1 : index
      %c0_14 = arith.constant 0 : index
      %28 = vector.load %arg11[%c1, %c1_13, %c0_14] : memref<18x10x64xf32, #tpu.memory_space<vmem>>, vector<16x8x64xf32>
      tpu.vector_store %arg11[%c1, %c1_13, %c0_14], %27 {strides = array<i32>} : memref<18x10x64xf32, #tpu.memory_space<vmem>>, vector<16x8x64xf32>,
      %c0_15 = arith.constant 0 : index
      %c0_16 = arith.constant 0 : index
      %c0_17 = arith.constant 0 : index
      %29 = vector.load %arg11[%c0_15, %c0_16, %c0_17] : memref<18x10x64xf32, #tpu.memory_space<vmem>>, vector<16x8x64xf32>
      %c0_18 = arith.constant 0 : index
      %c1_19 = arith.constant 1 : index
      %c0_20 = arith.constant 0 : index
      %30 = vector.load %arg11[%c0_18, %c1_19, %c0_20] : memref<18x10x64xf32, #tpu.memory_space<vmem>>, vector<16x8x64xf32>
      %c0_21 = arith.constant 0 : index
      %c2 = arith.constant 2 : index
      %c0_22 = arith.constant 0 : index
      %31 = vector.load %arg11[%c0_21, %c2, %c0_22] : memref<18x10x64xf32, #tpu.memory_space<vmem>>, vector<16x8x64xf32>
      %c1_23 = arith.constant 1 : index
      %c0_24 = arith.constant 0 : index
      %c0_25 = arith.constant 0 : index
      %32 = vector.load %arg11[%c1_23, %c0_24, %c0_25] : memref<18x10x64xf32, #tpu.memory_space<vmem>>, vector<16x8x64xf32>
      %c1_26 = arith.constant 1 : index
      %c1_27 = arith.constant 1 : index
      %c0_28 = arith.constant 0 : index
      %33 = vector.load %arg11[%c1_26, %c1_27, %c0_28] : memref<18x10x64xf32, #tpu.memory_space<vmem>>, vector<16x8x64xf32>
      %c1_29 = arith.constant 1 : index
      %c2_30 = arith.constant 2 : index
      %c0_31 = arith.constant 0 : index
      %34 = vector.load %arg11[%c1_29, %c2_30, %c0_31] : memref<18x10x64xf32, #tpu.memory_space<vmem>>, vector<16x8x64xf32>
      %c2_32 = arith.constant 2 : index
      %c0_33 = arith.constant 0 : index
      %c0_34 = arith.constant 0 : index
      %35 = vector.load %arg11[%c2_32, %c0_33, %c0_34] : memref<18x10x64xf32, #tpu.memory_space<vmem>>, vector<16x8x64xf32>
      %c2_35 = arith.constant 2 : index
      %c1_36 = arith.constant 1 : index
      %c0_37 = arith.constant 0 : index
      %36 = vector.load %arg11[%c2_35, %c1_36, %c0_37] : memref<18x10x64xf32, #tpu.memory_space<vmem>>, vector<16x8x64xf32>
      %c2_38 = arith.constant 2 : index
      %c2_39 = arith.constant 2 : index
      %c0_40 = arith.constant 0 : index
      %37 = vector.load %arg11[%c2_38, %c2_39, %c0_40] : memref<18x10x64xf32, #tpu.memory_space<vmem>>, vector<16x8x64xf32>
      %38 = tpu.concatenate %29, %30, %31, %32, %33, %34, %35, %36, %37 in 2 : vector<16x8x64xf32>, vector<16x8x64xf32>, vector<16x8x64xf32>, vector<16x8x64xf32>, vector<16x8x64xf32>, vector<16x8x64xf32>, vector<16x8x64xf32>, vector<16x8x64xf32>, vector<16x8x64xf32> -> vector<16x8x576xf32>
      %39 = vector.shape_cast %38 : vector<16x8x576xf32> to vector<128x576xf32>
      %40 = arith.truncf %39 : vector<128x576xf32> to vector<128x576xbf16>
      %c0_41 = arith.constant 0 : index
      %c0_42 = arith.constant 0 : index
      %41 = vector.load %arg10[%c0_41, %c0_42] : memref<128x64xf32, #tpu.memory_space<vmem>>, vector<128x64xf32>
      %42 = arith.index_cast %arg2 : i32 to index
      %c0_43 = arith.constant 0 : index
      %c0_44 = arith.constant 0 : index
      %43 = vector.load %arg6[%42, %c0_43, %c0_44] : memref<3x576x64xbf16, #tpu.memory_space<vmem>>, vector<1x576x64xbf16>
      %44 = vector.shape_cast %43 : vector<1x576x64xbf16> to vector<576x64xbf16>
      %cst_45 = arith.constant dense<0.000000e+00> : vector<128x64xf32>
      %45 = tpu.matmul %40, %44, %cst_45 {dimension_numbers = #tpu.dot_dimension_numbers<[1], [0], [0], [1], [0, 0, 1, 1], [], []>} : vector<128x576xbf16>, vector<576x64xbf16>, vector<128x64xf32> -> vector<128x64xf32>
      %46 = arith.addf %41, %45 : vector<128x64xf32>
      %c0_46 = arith.constant 0 : index
      %c0_47 = arith.constant 0 : index
      %47 = vector.load %arg10[%c0_46, %c0_47] : memref<128x64xf32, #tpu.memory_space<vmem>>, vector<128x64xf32>
      tpu.vector_store %arg10[%c0_46, %c0_47], %46 {strides = array<i32>} : memref<128x64xf32, #tpu.memory_space<vmem>>, vector<128x64xf32>,
    } else {
    }
    %c2_i32 = arith.constant 2 : i32
    %10 = arith.cmpi eq, %arg2, %c2_i32 : i32
    %11 = arith.extui %10 : i1 to i32
    %c0_i32_3 = arith.constant 0 : i32
    %12 = arith.cmpi ne, %11, %c0_i32_3 : i32
    scf.if %12 {
      %c0 = arith.constant 0 : index
      %c0_4 = arith.constant 0 : index
      %13 = vector.load %arg10[%c0, %c0_4] : memref<128x64xf32, #tpu.memory_space<vmem>>, vector<128x64xf32>
      %c0_5 = arith.constant 0 : index
      %c0_6 = arith.constant 0 : index
      %c0_7 = arith.constant 0 : index
      %c0_8 = arith.constant 0 : index
      %14 = vector.load %arg8[%c0_5, %c0_6, %c0_7, %c0_8] : memref<1x1x128x64xf32, #tpu.memory_space<vmem>>, vector<1x1x128x64xf32>
      %15 = vector.shape_cast %14 : vector<1x1x128x64xf32> to vector<128x64xf32>
      %16 = arith.addf %13, %15 : vector<128x64xf32>
      %c0_9 = arith.constant 0 : index
      %c0_10 = arith.constant 0 : index
      %c0_11 = arith.constant 0 : index
      %c0_12 = arith.constant 0 : index
      %17 = vector.load %arg9[%c0_9, %c0_10, %c0_11, %c0_12] : memref<1x1x128x64xf32, #tpu.memory_space<vmem>>, vector<1x1x128x64xf32>
      %18 = vector.shape_cast %17 : vector<1x1x128x64xf32> to vector<128x64xf32>
      %19 = vector.shape_cast %16 : vector<128x64xf32> to vector<1x1x128x64xf32>
      tpu.vector_store %arg9[%c0_9, %c0_10, %c0_11, %c0_12], %19 {strides = array<i32>} : memref<1x1x128x64xf32, #tpu.memory_space<vmem>>, vector<1x1x128x64xf32>,
    } else {
    }
    return
  }
  func.func @transform_0(%arg0: i32, %arg1: i32, %arg2: i32) -> (i32, i32, i32, i32, i32) {
    %0 = arith.addi %arg1, %arg2 : i32
    %c1_i32 = arith.constant 1 : i32
    %1 = arith.subi %0, %c1_i32 : i32
    %c0_i32 = arith.constant 0 : i32
    %c7_i32 = arith.constant 7 : i32
    %2 = arith.maxsi %c0_i32, %1 : i32
    %3 = arith.minsi %c7_i32, %2 : i32
    %c0_i32_0 = arith.constant 0 : i32
    %c0_i32_1 = arith.constant 0 : i32
    %c0_i32_2 = arith.constant 0 : i32
    %c0_i32_3 = arith.constant 0 : i32
    return %arg0, %3, %c0_i32_0, %c0_i32_1, %c0_i32_2 : i32, i32, i32, i32, i32
  }
  func.func @transform_1(%arg0: i32, %arg1: i32, %arg2: i32) -> (i32, i32) {
    %c0_i32 = arith.constant 0 : i32
    %c0_i32_0 = arith.constant 0 : i32
    %c0_i32_1 = arith.constant 0 : i32
    return %c0_i32, %c0_i32_0 : i32, i32
  }
  func.func @transform_2(%arg0: i32, %arg1: i32, %arg2: i32) -> (i32, i32) {
    %c0_i32 = arith.constant 0 : i32
    %c0_i32_0 = arith.constant 0 : i32
    %c0_i32_1 = arith.constant 0 : i32
    return %c0_i32, %c0_i32_0 : i32, i32
  }
  func.func @transform_3(%arg0: i32, %arg1: i32, %arg2: i32) -> (i32, i32, i32) {
    %c0_i32 = arith.constant 0 : i32
    %c0_i32_0 = arith.constant 0 : i32
    %c0_i32_1 = arith.constant 0 : i32
    %c0_i32_2 = arith.constant 0 : i32
    return %c0_i32, %c0_i32_0, %c0_i32_1 : i32, i32, i32
  }
  func.func @transform_4(%arg0: i32, %arg1: i32, %arg2: i32) -> (i32, i32) {
    %c0_i32 = arith.constant 0 : i32
    %c0_i32_0 = arith.constant 0 : i32
    %c0_i32_1 = arith.constant 0 : i32
    return %c0_i32, %c0_i32_0 : i32, i32
  }
  func.func @transform_5(%arg0: i32, %arg1: i32, %arg2: i32) -> (i32, i32, i32, i32) {
    %c0_i32 = arith.constant 0 : i32
    %c0_i32_0 = arith.constant 0 : i32
    %c0_i32_1 = arith.constant 0 : i32
    return %arg0, %arg1, %c0_i32, %c0_i32_0 : i32, i32, i32, i32
  }
  func.func @transform_6(%arg0: i32, %arg1: i32, %arg2: i32) -> (i32, i32, i32, i32) {
    %c0_i32 = arith.constant 0 : i32
    %c0_i32_0 = arith.constant 0 : i32
    %c0_i32_1 = arith.constant 0 : i32
    return %arg0, %arg1, %c0_i32, %c0_i32_0 : i32, i32, i32, i32
  }
}

</mosaic_0001>

<llo_original>
// kernel: voxres_forward.4
$region0: #{voxres_forward.4}
  #allocation0 [shape = 'u32[]', space=smem, size = 0x4, offset = 0x4, fixed_abs, tag = 'smem constant byte address 0x4 - core index']
  #allocation1 [shape = 'u32[144,128]{1,0:T(1,128)}', space=vmem, size = 0x12000, scoped, tag = 'internal scratch']
  %s0 = inlined_call_operand.vmem [shape: f32[1024,128], index: 0, kind: input, shape index: {}]
  %s1 = inlined_call_operand.vmem [shape: f32[1,128], index: 1, kind: output, shape index: {0}]
  %s2 = inlined_call_operand.vmem [shape: f32[1,128], index: 2, kind: output, shape index: {1}]
  %3 = xla_tuple %s1, %s2
  %s4 = sld [smem:[#allocation0]]
  $region26: #{voxres_forward.4} parent=0
    _
  %s6 = ssub.s32 1, %s4
  %s7 = scalar_select 0, %s6, %s4
  // Predicated region
  $region2: #{voxres_forward.4} parent=0 // pred_check
    _
  $region3: #{voxres_forward.4} parent=0 // pred_check_branch
    %9 = sbr.rel (0) target = $region5
  $region4: #{voxres_forward.4} parent=0 // pred_region
    _
  $region5: #{voxres_forward.4} parent=0 // pred_fallthru
    _
  %v10 = vld [vmem:[%s0] sm:$0xff]
  %v11 = vld [vmem:[%s0 + $0x8] sm:$0xff]
  %v12 = vld [vmem:[%s0 + $0x10] sm:$0xff]
  %v13 = vld [vmem:[%s0 + $0x18] sm:$0xff]
  %v14 = vld [vmem:[%s0 + $0x20] sm:$0xff]
  %v15 = vld [vmem:[%s0 + $0x28] sm:$0xff]
  %v16 = vld [vmem:[%s0 + $0x30] sm:$0xff]
  %v17 = vld [vmem:[%s0 + $0x38] sm:$0xff]
  %v18 = vld [vmem:[%s0 + $0x40] sm:$0xff]
  %v19 = vld [vmem:[%s0 + $0x48] sm:$0xff]
  %v20 = vld [vmem:[%s0 + $0x50] sm:$0xff]
  %v21 = vld [vmem:[%s0 + $0x58] sm:$0xff]
  %v22 = vld [vmem:[%s0 + $0x60] sm:$0xff]
  %v23 = vld [vmem:[%s0 + $0x68] sm:$0xff]
  %v24 = vld [vmem:[%s0 + $0x70] sm:$0xff]
  %v25 = vld [vmem:[%s0 + $0x78] sm:$0xff]
  %v26 = vld [vmem:[%s0 + $0x80] sm:$0xff]
  %v27 = vld [vmem:[%s0 + $0x88] sm:$0xff]
  %v28 = vld [vmem:[%s0 + $0x90] sm:$0xff]
  %v29 = vld [vmem:[%s0 + $0x98] sm:$0xff]
  %v30 = vld [vmem:[%s0 + $0xa0] sm:$0xff]
  %v31 = vld [vmem:[%s0 + $0xa8] sm:$0xff]
  %v32 = vld [vmem:[%s0 + $0xb0] sm:$0xff]
  %v33 = vld [vmem:[%s0 + $0xb8] sm:$0xff]
  %v34 = vld [vmem:[%s0 + $0xc0] sm:$0xff]
  %v35 = vld [vmem:[%s0 + $0xc8] sm:$0xff]
  %v36 = vld [vmem:[%s0 + $0xd0] sm:$0xff]
  %v37 = vld [vmem:[%s0 + $0xd8] sm:$0xff]
  %v38 = vld [vmem:[%s0 + $0xe0] sm:$0xff]
  %v39 = vld [vmem:[%s0 + $0xe8] sm:$0xff]
  %v40 = vld [vmem:[%s0 + $0xf0] sm:$0xff]
  %v41 = vld [vmem:[%s0 + $0xf8] sm:$0xff]
  %v42 = vld [vmem:[%s0 + $0x100] sm:$0xff]
  %v43 = vld [vmem:[%s0 + $0x108] sm:$0xff]
  %v44 = vld [vmem:[%s0 + $0x110] sm:$0xff]
  %v45 = vld [vmem:[%s0 + $0x118] sm:$0xff]
  %v46 = vld [vmem:[%s0 + $0x120] sm:$0xff]
  %v47 = vld [vmem:[%s0 + $0x128] sm:$0xff]
  %v48 = vld [vmem:[%s0 + $0x130] sm:$0xff]
  %v49 = vld [vmem:[%s0 + $0x138] sm:$0xff]
  %v50 = vld [vmem:[%s0 + $0x140] sm:$0xff]
  %v51 = vld [vmem:[%s0 + $0x148] sm:$0xff]
  %v52 = vld [vmem:[%s0 + $0x150] sm:$0xff]
  %v53 = vld [vmem:[%s0 + $0x158] sm:$0xff]
  %v54 = vld [vmem:[%s0 + $0x160] sm:$0xff]
  %v55 = vld [vmem:[%s0 + $0x168] sm:$0xff]
  %v56 = vld [vmem:[%s0 + $0x170] sm:$0xff]
  %v57 = vld [vmem:[%s0 + $0x178] sm:$0xff]
  %v58 = vld [vmem:[%s0 + $0x180] sm:$0xff]
  %v59 = vld [vmem:[%s0 + $0x188] sm:$0xff]
  %v60 = vld [vmem:[%s0 + $0x190] sm:$0xff]
  %v61 = vld [vmem:[%s0 + $0x198] sm:$0xff]
  %v62 = vld [vmem:[%s0 + $0x1a0] sm:$0xff]
  %v63 = vld [vmem:[%s0 + $0x1a8] sm:$0xff]
  %v64 = vld [vmem:[%s0 + $0x1b0] sm:$0xff]
  %v65 = vld [vmem:[%s0 + $0x1b8] sm:$0xff]
  %v66 = vld [vmem:[%s0 + $0x1c0] sm:$0xff]
  %v67 = vld [vmem:[%s0 + $0x1c8] sm:$0xff]
  %v68 = vld [vmem:[%s0 + $0x1d0] sm:$0xff]
  %v69 = vld [vmem:[%s0 + $0x1d8] sm:$0xff]
  %v70 = vld [vmem:[%s0 + $0x1e0] sm:$0xff]
  %v71 = vld [vmem:[%s0 + $0x1e8] sm:$0xff]
  %v72 = vld [vmem:[%s0 + $0x1f0] sm:$0xff]
  %v73 = vld [vmem:[%s0 + $0x1f8] sm:$0xff]
  %v74 = vld [vmem:[%s0 + $0x200] sm:$0xff]
  %v75 = vld [vmem:[%s0 + $0x208] sm:$0xff]
  %v76 = vld [vmem:[%s0 + $0x210] sm:$0xff]
  %v77 = vld [vmem:[%s0 + $0x218] sm:$0xff]
  %v78 = vld [vmem:[%s0 + $0x220] sm:$0xff]
  %v79 = vld [vmem:[%s0 + $0x228] sm:$0xff]
  %v80 = vld [vmem:[%s0 + $0x230] sm:$0xff]
  %v81 = vld [vmem:[%s0 + $0x238] sm:$0xff]
  %v82 = vld [vmem:[%s0 + $0x240] sm:$0xff]
  %v83 = vld [vmem:[%s0 + $0x248] sm:$0xff]
  %v84 = vld [vmem:[%s0 + $0x250] sm:$0xff]
  %v85 = vld [vmem:[%s0 + $0x258] sm:$0xff]
  %v86 = vld [vmem:[%s0 + $0x260] sm:$0xff]
  %v87 = vld [vmem:[%s0 + $0x268] sm:$0xff]
  %v88 = vld [vmem:[%s0 + $0x270] sm:$0xff]
  %v89 = vld [vmem:[%s0 + $0x278] sm:$0xff]
  %v90 = vld [vmem:[%s0 + $0x280] sm:$0xff]
  %v91 = vld [vmem:[%s0 + $0x288] sm:$0xff]
  %v92 = vld [vmem:[%s0 + $0x290] sm:$0xff]
  %v93 = vld [vmem:[%s0 + $0x298] sm:$0xff]
  %v94 = vld [vmem:[%s0 + $0x2a0] sm:$0xff]
  %v95 = vld [vmem:[%s0 + $0x2a8] sm:$0xff]
  %v96 = vld [vmem:[%s0 + $0x2b0] sm:$0xff]
  %v97 = vld [vmem:[%s0 + $0x2b8] sm:$0xff]
  %v98 = vld [vmem:[%s0 + $0x2c0] sm:$0xff]
  %v99 = vld [vmem:[%s0 + $0x2c8] sm:$0xff]
  %v100 = vld [vmem:[%s0 + $0x2d0] sm:$0xff]
  %v101 = vld [vmem:[%s0 + $0x2d8] sm:$0xff]
  %v102 = vld [vmem:[%s0 + $0x2e0] sm:$0xff]
  %v103 = vld [vmem:[%s0 + $0x2e8] sm:$0xff]
  %v104 = vld [vmem:[%s0 + $0x2f0] sm:$0xff]
  %v105 = vld [vmem:[%s0 + $0x2f8] sm:$0xff]
  %v106 = vld [vmem:[%s0 + $0x300] sm:$0xff]
  %v107 = vld [vmem:[%s0 + $0x308] sm:$0xff]
  %v108 = vld [vmem:[%s0 + $0x310] sm:$0xff]
  %v109 = vld [vmem:[%s0 + $0x318] sm:$0xff]
  %v110 = vld [vmem:[%s0 + $0x320] sm:$0xff]
  %v111 = vld [vmem:[%s0 + $0x328] sm:$0xff]
  %v112 = vld [vmem:[%s0 + $0x330] sm:$0xff]
  %v113 = vld [vmem:[%s0 + $0x338] sm:$0xff]
  %v114 = vld [vmem:[%s0 + $0x340] sm:$0xff]
  %v115 = vld [vmem:[%s0 + $0x348] sm:$0xff]
  %v116 = vld [vmem:[%s0 + $0x350] sm:$0xff]
  %v117 = vld [vmem:[%s0 + $0x358] sm:$0xff]
  %v118 = vld [vmem:[%s0 + $0x360] sm:$0xff]
  %v119 = vld [vmem:[%s0 + $0x368] sm:$0xff]
  %v120 = vld [vmem:[%s0 + $0x370] sm:$0xff]
  %v121 = vld [vmem:[%s0 + $0x378] sm:$0xff]
  %v122 = vld [vmem:[%s0 + $0x380] sm:$0xff]
  %v123 = vld [vmem:[%s0 + $0x388] sm:$0xff]
  %v124 = vld [vmem:[%s0 + $0x390] sm:$0xff]
  %v125 = vld [vmem:[%s0 + $0x398] sm:$0xff]
  %v126 = vld [vmem:[%s0 + $0x3a0] sm:$0xff]
  %v127 = vld [vmem:[%s0 + $0x3a8] sm:$0xff]
  %v128 = vld [vmem:[%s0 + $0x3b0] sm:$0xff]
  %v129 = vld [vmem:[%s0 + $0x3b8] sm:$0xff]
  %v130 = vld [vmem:[%s0 + $0x3c0] sm:$0xff]
  %v131 = vld [vmem:[%s0 + $0x3c8] sm:$0xff]
  %v132 = vld [vmem:[%s0 + $0x3d0] sm:$0xff]
  %v133 = vld [vmem:[%s0 + $0x3d8] sm:$0xff]
  %v134 = vld [vmem:[%s0 + $0x3e0] sm:$0xff]
  %v135 = vld [vmem:[%s0 + $0x3e8] sm:$0xff]
  %v136 = vld [vmem:[%s0 + $0x3f0] sm:$0xff]
  %v137 = vld [vmem:[%s0 + $0x3f8] sm:$0xff]
  %v138 = vadd.f32 %v10, %v11
  %v139 = vadd.f32 %v138, %v12
  %v140 = vadd.f32 %v139, %v13
  %v141 = vadd.f32 %v140, %v14
  %v142 = vadd.f32 %v141, %v15
  %v143 = vadd.f32 %v142, %v16
  %v144 = vadd.f32 %v143, %v17
  %v145 = vadd.f32 %v144, %v18
  %v146 = vadd.f32 %v145, %v19
  %v147 = vadd.f32 %v146, %v20
  %v148 = vadd.f32 %v147, %v21
  %v149 = vadd.f32 %v148, %v22
  %v150 = vadd.f32 %v149, %v23
  %v151 = vadd.f32 %v150, %v24
  %v152 = vadd.f32 %v151, %v25
  %v153 = vadd.f32 %v152, %v26
  %v154 = vadd.f32 %v153, %v27
  %v155 = vadd.f32 %v154, %v28
  %v156 = vadd.f32 %v155, %v29
  %v157 = vadd.f32 %v156, %v30
  %v158 = vadd.f32 %v157, %v31
  %v159 = vadd.f32 %v158, %v32
  %v160 = vadd.f32 %v159, %v33
  %v161 = vadd.f32 %v160, %v34
  %v162 = vadd.f32 %v161, %v35
  %v163 = vadd.f32 %v162, %v36
  %v164 = vadd.f32 %v163, %v37
  %v165 = vadd.f32 %v164, %v38
  %v166 = vadd.f32 %v165, %v39
  %v167 = vadd.f32 %v166, %v40
  %v168 = vadd.f32 %v167, %v41
  %v169 = vadd.f32 %v168, %v42
  %v170 = vadd.f32 %v169, %v43
  %v171 = vadd.f32 %v170, %v44
  %v172 = vadd.f32 %v171, %v45
  %v173 = vadd.f32 %v172, %v46
  %v174 = vadd.f32 %v173, %v47
  %v175 = vadd.f32 %v174, %v48
  %v176 = vadd.f32 %v175, %v49
  %v177 = vadd.f32 %v176, %v50
  %v178 = vadd.f32 %v177, %v51
  %v179 = vadd.f32 %v178, %v52
  %v180 = vadd.f32 %v179, %v53
  %v181 = vadd.f32 %v180, %v54
  %v182 = vadd.f32 %v181, %v55
  %v183 = vadd.f32 %v182, %v56
  %v184 = vadd.f32 %v183, %v57
  %v185 = vadd.f32 %v184, %v58
  %v186 = vadd.f32 %v185, %v59
  %v187 = vadd.f32 %v186, %v60
  %v188 = vadd.f32 %v187, %v61
  %v189 = vadd.f32 %v188, %v62
  %v190 = vadd.f32 %v189, %v63
  %v191 = vadd.f32 %v190, %v64
  %v192 = vadd.f32 %v191, %v65
  %v193 = vadd.f32 %v192, %v66
  %v194 = vadd.f32 %v193, %v67
  %v195 = vadd.f32 %v194, %v68
  %v196 = vadd.f32 %v195, %v69
  %v197 = vadd.f32 %v196, %v70
  %v198 = vadd.f32 %v197, %v71
  %v199 = vadd.f32 %v198, %v72
  %v200 = vadd.f32 %v199, %v73
  %v201 = vadd.f32 %v200, %v74
  %v202 = vadd.f32 %v201, %v75
  %v203 = vadd.f32 %v202, %v76
  %v204 = vadd.f32 %v203, %v77
  %v205 = vadd.f32 %v204, %v78
  %v206 = vadd.f32 %v205, %v79
  %v207 = vadd.f32 %v206, %v80
  %v208 = vadd.f32 %v207, %v81
  %v209 = vadd.f32 %v208, %v82
  %v210 = vadd.f32 %v209, %v83
  %v211 = vadd.f32 %v210, %v84
  %v212 = vadd.f32 %v211, %v85
  %v213 = vadd.f32 %v212, %v86
  %v214 = vadd.f32 %v213, %v87
  %v215 = vadd.f32 %v214, %v88
  %v216 = vadd.f32 %v215, %v89
  %v217 = vadd.f32 %v216, %v90
  %v218 = vadd.f32 %v217, %v91
  %v219 = vadd.f32 %v218, %v92
  %v220 = vadd.f32 %v219, %v93
  %v221 = vadd.f32 %v220, %v94
  %v222 = vadd.f32 %v221, %v95
  %v223 = vadd.f32 %v222, %v96
  %v224 = vadd.f32 %v223, %v97
  %v225 = vadd.f32 %v224, %v98
  %v226 = vadd.f32 %v225, %v99
  %v227 = vadd.f32 %v226, %v100
  %v228 = vadd.f32 %v227, %v101
  %v229 = vadd.f32 %v228, %v102
  %v230 = vadd.f32 %v229, %v103
  %v231 = vadd.f32 %v230, %v104
  %v232 = vadd.f32 %v231, %v105
  %v233 = vadd.f32 %v232, %v106
  %v234 = vadd.f32 %v233, %v107
  %v235 = vadd.f32 %v234, %v108
  %v236 = vadd.f32 %v235, %v109
  %v237 = vadd.f32 %v236, %v110
  %v238 = vadd.f32 %v237, %v111
  %v239 = vadd.f32 %v238, %v112
  %v240 = vadd.f32 %v239, %v113
  %v241 = vadd.f32 %v240, %v114
  %v242 = vadd.f32 %v241, %v115
  %v243 = vadd.f32 %v242, %v116
  %v244 = vadd.f32 %v243, %v117
  %v245 = vadd.f32 %v244, %v118
  %v246 = vadd.f32 %v245, %v119
  %v247 = vadd.f32 %v246, %v120
  %v248 = vadd.f32 %v247, %v121
  %v249 = vadd.f32 %v248, %v122
  %v250 = vadd.f32 %v249, %v123
  %v251 = vadd.f32 %v250, %v124
  %v252 = vadd.f32 %v251, %v125
  %v253 = vadd.f32 %v252, %v126
  %v254 = vadd.f32 %v253, %v127
  %v255 = vadd.f32 %v254, %v128
  %v256 = vadd.f32 %v255, %v129
  %v257 = vadd.f32 %v256, %v130
  %v258 = vadd.f32 %v257, %v131
  %v259 = vadd.f32 %v258, %v132
  %v260 = vadd.f32 %v259, %v133
  %v261 = vadd.f32 %v260, %v134
  %v262 = vadd.f32 %v261, %v135
  %v263 = vadd.f32 %v262, %v136
  %v264 = vadd.f32 %v263, %v137
  %v265 = vrot.slane %v264, 4
  %v266 = vadd.f32 %v264, %v265
  %v267 = vrot.slane %v266, 2
  %v268 = vadd.f32 %v266, %v267
  %v269 = vrot.slane %v268, 1
  %v270 = vadd.f32 %v268, %v269
  %v271 = vmul.f32 %v10, %v10
  %v272 = vmul.f32 %v11, %v11
  %v273 = vmul.f32 %v12, %v12
  %v274 = vmul.f32 %v13, %v13
  %v275 = vmul.f32 %v14, %v14
  %v276 = vmul.f32 %v15, %v15
  %v277 = vmul.f32 %v16, %v16
  %v278 = vmul.f32 %v17, %v17
  %v279 = vmul.f32 %v18, %v18
  %v280 = vmul.f32 %v19, %v19
  %v281 = vmul.f32 %v20, %v20
  %v282 = vmul.f32 %v21, %v21
  %v283 = vmul.f32 %v22, %v22
  %v284 = vmul.f32 %v23, %v23
  %v285 = vmul.f32 %v24, %v24
  %v286 = vmul.f32 %v25, %v25
  %v287 = vmul.f32 %v26, %v26
  %v288 = vmul.f32 %v27, %v27
  %v289 = vmul.f32 %v28, %v28
  %v290 = vmul.f32 %v29, %v29
  %v291 = vmul.f32 %v30, %v30
  %v292 = vmul.f32 %v31, %v31
  %v293 = vmul.f32 %v32, %v32
  %v294 = vmul.f32 %v33, %v33
  %v295 = vmul.f32 %v34, %v34
  %v296 = vmul.f32 %v35, %v35
  %v297 = vmul.f32 %v36, %v36
  %v298 = vmul.f32 %v37, %v37
  %v299 = vmul.f32 %v38, %v38
  %v300 = vmul.f32 %v39, %v39
  %v301 = vmul.f32 %v40, %v40
  %v302 = vmul.f32 %v41, %v41
  %v303 = vmul.f32 %v42, %v42
  %v304 = vmul.f32 %v43, %v43
  %v305 = vmul.f32 %v44, %v44
  %v306 = vmul.f32 %v45, %v45
  %v307 = vmul.f32 %v46, %v46
  %v308 = vmul.f32 %v47, %v47
  %v309 = vmul.f32 %v48, %v48
  %v310 = vmul.f32 %v49, %v49
  %v311 = vmul.f32 %v50, %v50
  %v312 = vmul.f32 %v51, %v51
  %v313 = vmul.f32 %v52, %v52
  %v314 = vmul.f32 %v53, %v53
  %v315 = vmul.f32 %v54, %v54
  %v316 = vmul.f32 %v55, %v55
  %v317 = vmul.f32 %v56, %v56
  %v318 = vmul.f32 %v57, %v57
  %v319 = vmul.f32 %v58, %v58
  %v320 = vmul.f32 %v59, %v59
  %v321 = vmul.f32 %v60, %v60
  %v322 = vmul.f32 %v61, %v61
  %v323 = vmul.f32 %v62, %v62
  %v324 = vmul.f32 %v63, %v63
  %v325 = vmul.f32 %v64, %v64
  %v326 = vmul.f32 %v65, %v65
  %v327 = vmul.f32 %v66, %v66
  %v328 = vmul.f32 %v67, %v67
  %v329 = vmul.f32 %v68, %v68
  %v330 = vmul.f32 %v69, %v69
  %v331 = vmul.f32 %v70, %v70
  %v332 = vmul.f32 %v71, %v71
  %v333 = vmul.f32 %v72, %v72
  %v334 = vmul.f32 %v73, %v73
  %v335 = vmul.f32 %v74, %v74
  %v336 = vmul.f32 %v75, %v75
  %v337 = vmul.f32 %v76, %v76
  %v338 = vmul.f32 %v77, %v77
  %v339 = vmul.f32 %v78, %v78
  %v340 = vmul.f32 %v79, %v79
  %v341 = vmul.f32 %v80, %v80
  %v342 = vmul.f32 %v81, %v81
  %v343 = vmul.f32 %v82, %v82
  %v344 = vmul.f32 %v83, %v83
  %v345 = vmul.f32 %v84, %v84
  %v346 = vmul.f32 %v85, %v85
  %v347 = vmul.f32 %v86, %v86
  %v348 = vmul.f32 %v87, %v87
  %v349 = vmul.f32 %v88, %v88
  %v350 = vmul.f32 %v89, %v89
  %v351 = vmul.f32 %v90, %v90
  %v352 = vmul.f32 %v91, %v91
  %v353 = vmul.f32 %v92, %v92
  %v354 = vmul.f32 %v93, %v93
  %v355 = vmul.f32 %v94, %v94
  %v356 = vmul.f32 %v95, %v95
  %v357 = vmul.f32 %v96, %v96
  %v358 = vmul.f32 %v97, %v97
  %v359 = vmul.f32 %v98, %v98
  %v360 = vmul.f32 %v99, %v99
  %v361 = vmul.f32 %v100, %v100
  %v362 = vmul.f32 %v101, %v101
  %v363 = vmul.f32 %v102, %v102
  %v364 = vmul.f32 %v103, %v103
  %v365 = vmul.f32 %v104, %v104
  %v366 = vmul.f32 %v105, %v105
  %v367 = vmul.f32 %v106, %v106
  %v368 = vmul.f32 %v107, %v107
  %v369 = vmul.f32 %v108, %v108
  %v370 = vmul.f32 %v109, %v109
  %v371 = vmul.f32 %v110, %v110
  %v372 = vmul.f32 %v111, %v111
  %v373 = vmul.f32 %v112, %v112
  %v374 = vmul.f32 %v113, %v113
  %v375 = vmul.f32 %v114, %v114
  %v376 = vmul.f32 %v115, %v115
  %v377 = vmul.f32 %v116, %v116
  %v378 = vmul.f32 %v117, %v117
  %v379 = vmul.f32 %v118, %v118
  %v380 = vmul.f32 %v119, %v119
  %v381 = vmul.f32 %v120, %v120
  %v382 = vmul.f32 %v121, %v121
  %v383 = vmul.f32 %v122, %v122
  %v384 = vmul.f32 %v123, %v123
  %v385 = vmul.f32 %v124, %v124
  %v386 = vmul.f32 %v125, %v125
  %v387 = vmul.f32 %v126, %v126
  %v388 = vmul.f32 %v127, %v127
  %v389 = vmul.f32 %v128, %v128
  %v390 = vmul.f32 %v129, %v129
  %v391 = vmul.f32 %v130, %v130
  %v392 = vmul.f32 %v131, %v131
  %v393 = vmul.f32 %v132, %v132
  %v394 = vmul.f32 %v133, %v133
  %v395 = vmul.f32 %v134, %v134
  %v396 = vmul.f32 %v135, %v135
  %v397 = vmul.f32 %v136, %v136
  %v398 = vmul.f32 %v137, %v137
  %v399 = vadd.f32 %v271, %v272
  %v400 = vadd.f32 %v399, %v273
  %v401 = vadd.f32 %v400, %v274
  %v402 = vadd.f32 %v401, %v275
  %v403 = vadd.f32 %v402, %v276
  %v404 = vadd.f32 %v403, %v277
  %v405 = vadd.f32 %v404, %v278
  %v406 = vadd.f32 %v405, %v279
  %v407 = vadd.f32 %v406, %v280
  %v408 = vadd.f32 %v407, %v281
  %v409 = vadd.f32 %v408, %v282
  %v410 = vadd.f32 %v409, %v283
  %v411 = vadd.f32 %v410, %v284
  %v412 = vadd.f32 %v411, %v285
  %v413 = vadd.f32 %v412, %v286
  %v414 = vadd.f32 %v413, %v287
  %v415 = vadd.f32 %v414, %v288
  %v416 = vadd.f32 %v415, %v289
  %v417 = vadd.f32 %v416, %v290
  %v418 = vadd.f32 %v417, %v291
  %v419 = vadd.f32 %v418, %v292
  %v420 = vadd.f32 %v419, %v293
  %v421 = vadd.f32 %v420, %v294
  %v422 = vadd.f32 %v421, %v295
  %v423 = vadd.f32 %v422, %v296
  %v424 = vadd.f32 %v423, %v297
  %v425 = vadd.f32 %v424, %v298
  %v426 = vadd.f32 %v425, %v299
  %v427 = vadd.f32 %v426, %v300
  %v428 = vadd.f32 %v427, %v301
  %v429 = vadd.f32 %v428, %v302
  %v430 = vadd.f32 %v429, %v303
  %v431 = vadd.f32 %v430, %v304
  %v432 = vadd.f32 %v431, %v305
  %v433 = vadd.f32 %v432, %v306
  %v434 = vadd.f32 %v433, %v307
  %v435 = vadd.f32 %v434, %v308
  %v436 = vadd.f32 %v435, %v309
  %v437 = vadd.f32 %v436, %v310
  %v438 = vadd.f32 %v437, %v311
  %v439 = vadd.f32 %v438, %v312
  %v440 = vadd.f32 %v439, %v313
  %v441 = vadd.f32 %v440, %v314
  %v442 = vadd.f32 %v441, %v315
  %v443 = vadd.f32 %v442, %v316
  %v444 = vadd.f32 %v443, %v317
  %v445 = vadd.f32 %v444, %v318
  %v446 = vadd.f32 %v445, %v319
  %v447 = vadd.f32 %v446, %v320
  %v448 = vadd.f32 %v447, %v321
  %v449 = vadd.f32 %v448, %v322
  %v450 = vadd.f32 %v449, %v323
  %v451 = vadd.f32 %v450, %v324
  %v452 = vadd.f32 %v451, %v325
  %v453 = vadd.f32 %v452, %v326
  %v454 = vadd.f32 %v453, %v327
  %v455 = vadd.f32 %v454, %v328
  %v456 = vadd.f32 %v455, %v329
  %v457 = vadd.f32 %v456, %v330
  %v458 = vadd.f32 %v457, %v331
  %v459 = vadd.f32 %v458, %v332
  %v460 = vadd.f32 %v459, %v333
  %v461 = vadd.f32 %v460, %v334
  %v462 = vadd.f32 %v461, %v335
  %v463 = vadd.f32 %v462, %v336
  %v464 = vadd.f32 %v463, %v337
  %v465 = vadd.f32 %v464, %v338
  %v466 = vadd.f32 %v465, %v339
  %v467 = vadd.f32 %v466, %v340
  %v468 = vadd.f32 %v467, %v341
  %v469 = vadd.f32 %v468, %v342
  %v470 = vadd.f32 %v469, %v343
  %v471 = vadd.f32 %v470, %v344
  %v472 = vadd.f32 %v471, %v345
  %v473 = vadd.f32 %v472, %v346
  %v474 = vadd.f32 %v473, %v347
  %v475 = vadd.f32 %v474, %v348
  %v476 = vadd.f32 %v475, %v349
  %v477 = vadd.f32 %v476, %v350
  %v478 = vadd.f32 %v477, %v351
  %v479 = vadd.f32 %v478, %v352
  %v480 = vadd.f32 %v479, %v353
  %v481 = vadd.f32 %v480, %v354
  %v482 = vadd.f32 %v481, %v355
  %v483 = vadd.f32 %v482, %v356
  %v484 = vadd.f32 %v483, %v357
  %v485 = vadd.f32 %v484, %v358
  %v486 = vadd.f32 %v485, %v359
  %v487 = vadd.f32 %v486, %v360
  %v488 = vadd.f32 %v487, %v361
  %v489 = vadd.f32 %v488, %v362
  %v490 = vadd.f32 %v489, %v363
  %v491 = vadd.f32 %v490, %v364
  %v492 = vadd.f32 %v491, %v365
  %v493 = vadd.f32 %v492, %v366
  %v494 = vadd.f32 %v493, %v367
  %v495 = vadd.f32 %v494, %v368
  %v496 = vadd.f32 %v495, %v369
  %v497 = vadd.f32 %v496, %v370
  %v498 = vadd.f32 %v497, %v371
  %v499 = vadd.f32 %v498, %v372
  %v500 = vadd.f32 %v499, %v373
  %v501 = vadd.f32 %v500, %v374
  %v502 = vadd.f32 %v501, %v375
  %v503 = vadd.f32 %v502, %v376
  %v504 = vadd.f32 %v503, %v377
  %v505 = vadd.f32 %v504, %v378
  %v506 = vadd.f32 %v505, %v379
  %v507 = vadd.f32 %v506, %v380
  %v508 = vadd.f32 %v507, %v381
  %v509 = vadd.f32 %v508, %v382
  %v510 = vadd.f32 %v509, %v383
  %v511 = vadd.f32 %v510, %v384
  %v512 = vadd.f32 %v511, %v385
  %v513 = vadd.f32 %v512, %v386
  %v514 = vadd.f32 %v513, %v387
  %v515 = vadd.f32 %v514, %v388
  %v516 = vadd.f32 %v515, %v389
  %v517 = vadd.f32 %v516, %v390
  %v518 = vadd.f32 %v517, %v391
  %v519 = vadd.f32 %v518, %v392
  %v520 = vadd.f32 %v519, %v393
  %v521 = vadd.f32 %v520, %v394
  %v522 = vadd.f32 %v521, %v395
  %v523 = vadd.f32 %v522, %v396
  %v524 = vadd.f32 %v523, %v397
  %v525 = vadd.f32 %v524, %v398
  %v526 = vrot.slane %v525, 4
  %v527 = vadd.f32 %v525, %v526
  %v528 = vrot.slane %v527, 2
  %v529 = vadd.f32 %v527, %v528
  %v530 = vrot.slane %v529, 1
  %v531 = vadd.f32 %v529, %v530
  %p532 = scmp.eq.s32.totalorder 0, 0
  // Predicated region
  $region6: #{voxres_forward.4} parent=0 // pred_check
    %p533 = pneg %p532
  $region7: #{voxres_forward.4} parent=0 // pred_check_branch
    %535 = sbr.rel (%p533) target = $region9
  $region8: #{voxres_forward.4} parent=0 // pred_region
    %536 = vst [vmem:[%s1] sm:$0x1] 0.0
    %537 = vst [vmem:[%s2] sm:$0x1] 0.0
  $region9: #{voxres_forward.4} parent=0 // pred_fallthru
    _
  %v538 = vld [vmem:[%s1] sm:$0x1]
  %v539 = vadd.f32 %v538, %v270
  %540 = vst [vmem:[%s1] sm:$0x1] %v539
  %v541 = vld [vmem:[%s2] sm:$0x1]
  %v542 = vadd.f32 %v541, %v531
  %543 = vst [vmem:[%s2] sm:$0x1] %v542
  // Predicated region
  $region10: #{voxres_forward.4} parent=0 // pred_check
    _
  $region11: #{voxres_forward.4} parent=0 // pred_check_branch
    %545 = sbr.rel (0) target = $region13
  $region12: #{voxres_forward.4} parent=0 // pred_region
    _
  $region13: #{voxres_forward.4} parent=0 // pred_fallthru
    _
  // Predicated region
  $region14: #{voxres_forward.4} parent=0 // pred_check
    _
  $region15: #{voxres_forward.4} parent=0 // pred_check_branch
    %547 = sbr.rel (0) target = $region17
  $region16: #{voxres_forward.4} parent=0 // pred_region
    _
  $region17: #{voxres_forward.4} parent=0 // pred_fallthru
    _
  // Predicated region
  $region18: #{voxres_forward.4} parent=0 // pred_check
    _
  $region19: #{voxres_forward.4} parent=0 // pred_check_branch
    %549 = sbr.rel (0) target = $region21
  $region20: #{voxres_forward.4} parent=0 // pred_region
    _
  $region21: #{voxres_forward.4} parent=0 // pred_fallthru
    _
  // Predicated region
  $region22: #{voxres_forward.4} parent=0 // pred_check
    _
  $region23: #{voxres_forward.4} parent=0 // pred_check_branch
    %551 = sbr.rel (0) target = $region25
  $region24: #{voxres_forward.4} parent=0 // pred_region
    _
  $region25: #{voxres_forward.4} parent=0 // pred_fallthru
    _

// kernel: voxres_forward.7
$region0: #{voxres_forward.7}
  #allocation0 [shape = 'u32[]', space=smem, size = 0x4, offset = 0x4, fixed_abs, tag = 'smem constant byte address 0x4 - core index']
  #allocation1 [shape = 'u32[144,128]{1,0:T(1,128)}', space=vmem, size = 0x12000, scoped, tag = 'internal scratch']
  #allocation2 [shape = 'f32[128,64]{1,0:T(8,128)}', space=vmem, size = 0x10000, scoped, tag = 'scratch operand']
  #allocation3 [shape = 'f32[18,10,64]{2,1,0:T(8,128)}', space=vmem, size = 0x24000, scoped, tag = 'scratch operand']
  %s0 = inlined_call_operand.vmem [shape: f32[2,8,16,8,64], index: 0, kind: input, shape index: {}]
  %s1 = inlined_call_operand.vmem [shape: f32[1,64], index: 1, kind: input, shape index: {}]
  %s2 = inlined_call_operand.vmem [shape: f32[1,64], index: 2, kind: input, shape index: {}]
  %s3 = inlined_call_operand.vmem [shape: bf16[3,576,64], index: 3, kind: input, shape index: {}]
  %s4 = inlined_call_operand.vmem [shape: f32[1,64], index: 4, kind: input, shape index: {}]
  %s5 = inlined_call_operand.vmem [shape: f32[2,8,128,64], index: 5, kind: input, shape index: {}]
  %s6 = inlined_call_operand.hbm [shape: f32[2,8,128,64], index: 6, kind: output, shape index: {}]
  %s7 = sld [smem:[#allocation0]]
  $region69: #{voxres_forward.7} parent=0
    _
  %s9 = ssub.s32 1, %s7
  %s10 = scalar_select 0, %s9, %s7
  $region1: #{voxres_forward.7} parent=0
    #allocation4 [shape = 'u8[131072]{0}', space=vmem, size = 0x20000, scoped, tag = 'output window, operand 0']
    #allocation5 [shape = 's32[2]{0}', space=sflag, size = 0x8, scoped, tag = 'scoped memory for voxres_forward.7']
    %11 = vsyncpa [#allocation5], 0
    %s12 = scalar_lea.sflag [#allocation5], 1
    %13 = vsyncpa %s12, 0
    loop: start=0, step=1, limit=50
    $region2: #{voxres_forward.7} parent=1 // loop_pre_header
      _
    $region3: #{voxres_forward.7} parent=1 // loop_header
      %s15 = sphi 0, %s19
      %p16 = scmp.ge.s32.totalorder %s15, 50
      %s22 = sphi 0, %s41
      %s23 = sphi 0, %s37
      %s24 = sphi 0, %s33
      %s25 = sphi 0, %s22
      %s26 = sphi 0, %s23
      %s27 = sphi 0, %s24
      %s28 = sphi 0, %s25
      %s29 = sphi 0, %s26
      %s30 = sphi 0, %s27
      %s58 = sphi 0, %s60
      %s61 = sphi 0, %s58
      %s62 = sphi 0, %s61
      %s78 = sphi 0, %s62
      %s82 = sphi 0, %s82
      %s84 = sphi 0, %s82
      %s85 = sphi 0, %s84
      %s99 = sphi 0, %s85
      %s103 = sphi 0, %s103
      %s105 = sphi 0, %s103
      %s106 = sphi 0, %s105
      %s120 = sphi 0, %s106
      %s124 = sphi 0, %s124
      %s126 = sphi 0, %s124
      %s127 = sphi 0, %s126
      %s141 = sphi 0, %s127
      %s145 = sphi 0, %s145
      %s147 = sphi 0, %s145
      %s148 = sphi 0, %s147
      %s162 = sphi 0, %s148
      %s170 = sphi 0, %s172
      %s173 = sphi 0, %s170
      %s174 = sphi 0, %s173
      %s190 = sphi 0, %s174
      %s198 = sphi 0, %s200
      %s201 = sphi 0, %s198
      %s202 = sphi 0, %s201
      %s218 = sphi 0, %s202
    $region4: #{voxres_forward.7} parent=1 // loop_header_branch
      %18 = sbr.rel (%p16) target = $region8
    $region5: #{voxres_forward.7} parent=1 // loop_body
      %s20 = ssub.s32 %s15, 1
      %s21 = ssub.s32 %s15, 2
      %s31 = sadd.s32 1, %s24
      %p32 = scmp.ge.s32.totalorder %s31, 3
      %s33 = scalar_select %p32, 0, %s31
      %s34 = sadd.s32 1, %s23
      %s35 = scalar_select %p32, %s34, %s23
      %p36 = scmp.ge.s32.totalorder %s35, 8
      %s37 = scalar_select %p36, 0, %s35
      %s38 = sadd.s32 1, %s22
      %s39 = scalar_select %p36, %s38, %s22
      %p40 = scmp.ge.s32.totalorder %s39, 2
      %s41 = scalar_select %p40, 0, %s39
      %s42 = sadd.s32 %s23, %s24
      %s43 = ssub.s32 %s42, 1
      %p44 = scmp.gt.s32.totalorder %s43, 0
      %s45 = scalar_select %p44, %s43, 0
      %p46 = scmp.lt.s32.totalorder %s45, 7
      %s47 = scalar_select %p46, %s45, 7
      %s48 = sadd.s32 %s37, %s33
      %s49 = ssub.s32 %s48, 1
      %p50 = scmp.gt.s32.totalorder %s49, 0
      %s51 = scalar_select %p50, %s49, 0
      %p52 = scmp.lt.s32.totalorder %s51, 7
      %s53 = scalar_select %p52, %s51, 7
      %s54 = ssub.s32 %s22, %s41
      %s55 = ssub.s32 %s47, %s53
      %s56 = sor.u32 %s54, %s55
      %p57 = scmp.eq.s32.totalorder %s56, 0
      %s59 = sadd.s32 %s58, 1
      %s60 = scalar_select %p57, %s58, %s59
      %p63 = pneg %p57
      %p64 = scmp.eq.s32.totalorder %s15, 47
      %p65 = por %p63, %p64
      %p66 = scmp.ne.s32.totalorder %s58, %s61
      %p67 = scmp.eq.s32.totalorder %s15, 0
      %p68 = por %p66, %p67
      %p69 = scmp.ne.s32.totalorder %s58, %s61
      %p70 = scmp.eq.s32.totalorder %s20, 47
      %p71 = por %p69, %p70
      %p72 = scmp.ne.s32.totalorder %s61, %s62
      %p73 = scmp.eq.s32.totalorder %s20, 0
      %p74 = por %p72, %p73
      %p75 = scmp.ne.s32.totalorder %s61, %s62
      %p76 = scmp.eq.s32.totalorder %s21, 47
      %p77 = por %p75, %p76
      %p79 = scmp.ne.s32.totalorder %s62, %s78
      %p80 = scmp.eq.s32.totalorder %s21, 0
      %p81 = por %p79, %p80
      %s83 = sadd.s32 %s82, 1
      %p86 = scmp.eq.s32.totalorder %s15, 47
      %p87 = scmp.ne.s32.totalorder %s82, %s84
      %p88 = scmp.eq.s32.totalorder %s15, 0
      %p89 = por %p87, %p88
      %p90 = scmp.ne.s32.totalorder %s82, %s84
      %p91 = scmp.eq.s32.totalorder %s20, 47
      %p92 = por %p90, %p91
      %p93 = scmp.ne.s32.totalorder %s84, %s85
      %p94 = scmp.eq.s32.totalorder %s20, 0
      %p95 = por %p93, %p94
      %p96 = scmp.ne.s32.totalorder %s84, %s85
      %p97 = scmp.eq.s32.totalorder %s21, 47
      %p98 = por %p96, %p97
      %p100 = scmp.ne.s32.totalorder %s85, %s99
      %p101 = scmp.eq.s32.totalorder %s21, 0
      %p102 = por %p100, %p101
      %s104 = sadd.s32 %s103, 1
      %p107 = scmp.eq.s32.totalorder %s15, 47
      %p108 = scmp.ne.s32.totalorder %s103, %s105
      %p109 = scmp.eq.s32.totalorder %s15, 0
      %p110 = por %p108, %p109
      %p111 = scmp.ne.s32.totalorder %s103, %s105
      %p112 = scmp.eq.s32.totalorder %s20, 47
      %p113 = por %p111, %p112
      %p114 = scmp.ne.s32.totalorder %s105, %s106
      %p115 = scmp.eq.s32.totalorder %s20, 0
      %p116 = por %p114, %p115
      %p117 = scmp.ne.s32.totalorder %s105, %s106
      %p118 = scmp.eq.s32.totalorder %s21, 47
      %p119 = por %p117, %p118
      %p121 = scmp.ne.s32.totalorder %s106, %s120
      %p122 = scmp.eq.s32.totalorder %s21, 0
      %p123 = por %p121, %p122
      %s125 = sadd.s32 %s124, 1
      %p128 = scmp.eq.s32.totalorder %s15, 47
      %p129 = scmp.ne.s32.totalorder %s124, %s126
      %p130 = scmp.eq.s32.totalorder %s15, 0
      %p131 = por %p129, %p130
      %p132 = scmp.ne.s32.totalorder %s124, %s126
      %p133 = scmp.eq.s32.totalorder %s20, 47
      %p134 = por %p132, %p133
      %p135 = scmp.ne.s32.totalorder %s126, %s127
      %p136 = scmp.eq.s32.totalorder %s20, 0
      %p137 = por %p135, %p136
      %p138 = scmp.ne.s32.totalorder %s126, %s127
      %p139 = scmp.eq.s32.totalorder %s21, 47
      %p140 = por %p138, %p139
      %p142 = scmp.ne.s32.totalorder %s127, %s141
      %p143 = scmp.eq.s32.totalorder %s21, 0
      %p144 = por %p142, %p143
      %s146 = sadd.s32 %s145, 1
      %p149 = scmp.eq.s32.totalorder %s15, 47
      %p150 = scmp.ne.s32.totalorder %s145, %s147
      %p151 = scmp.eq.s32.totalorder %s15, 0
      %p152 = por %p150, %p151
      %p153 = scmp.ne.s32.totalorder %s145, %s147
      %p154 = scmp.eq.s32.totalorder %s20, 47
      %p155 = por %p153, %p154
      %p156 = scmp.ne.s32.totalorder %s147, %s148
      %p157 = scmp.eq.s32.totalorder %s20, 0
      %p158 = por %p156, %p157
      %p159 = scmp.ne.s32.totalorder %s147, %s148
      %p160 = scmp.eq.s32.totalorder %s21, 47
      %p161 = por %p159, %p160
      %p163 = scmp.ne.s32.totalorder %s148, %s162
      %p164 = scmp.eq.s32.totalorder %s21, 0
      %p165 = por %p163, %p164
      %s166 = ssub.s32 %s22, %s41
      %s167 = ssub.s32 %s23, %s37
      %s168 = sor.u32 %s166, %s167
      %p169 = scmp.eq.s32.totalorder %s168, 0
      %s171 = sadd.s32 %s170, 1
      %s172 = scalar_select %p169, %s170, %s171
      %p175 = pneg %p169
      %p176 = scmp.eq.s32.totalorder %s15, 47
      %p177 = por %p175, %p176
      %p178 = scmp.ne.s32.totalorder %s170, %s173
      %p179 = scmp.eq.s32.totalorder %s15, 0
      %p180 = por %p178, %p179
      %p181 = scmp.ne.s32.totalorder %s170, %s173
      %p182 = scmp.eq.s32.totalorder %s20, 47
      %p183 = por %p181, %p182
      %p184 = scmp.ne.s32.totalorder %s173, %s174
      %p185 = scmp.eq.s32.totalorder %s20, 0
      %p186 = por %p184, %p185
      %p187 = scmp.ne.s32.totalorder %s173, %s174
      %p188 = scmp.eq.s32.totalorder %s21, 47
      %p189 = por %p187, %p188
      %p191 = scmp.ne.s32.totalorder %s174, %s190
      %p192 = scmp.eq.s32.totalorder %s21, 0
      %p193 = por %p191, %p192
      %s194 = ssub.s32 %s22, %s41
      %s195 = ssub.s32 %s23, %s37
      %s196 = sor.u32 %s194, %s195
      %p197 = scmp.eq.s32.totalorder %s196, 0
      %s199 = sadd.s32 %s198, 1
      %s200 = scalar_select %p197, %s198, %s199
      %p203 = pneg %p197
      %p204 = scmp.eq.s32.totalorder %s15, 47
      %p205 = por %p203, %p204
      %p206 = scmp.ne.s32.totalorder %s198, %s201
      %p207 = scmp.eq.s32.totalorder %s15, 0
      %p208 = por %p206, %p207
      %p209 = scmp.ne.s32.totalorder %s198, %s201
      %p210 = scmp.eq.s32.totalorder %s20, 47
      %p211 = por %p209, %p210
      %p212 = scmp.ne.s32.totalorder %s201, %s202
      %p213 = scmp.eq.s32.totalorder %s20, 0
      %p214 = por %p212, %p213
      %p215 = scmp.ne.s32.totalorder %s201, %s202
      %p216 = scmp.eq.s32.totalorder %s21, 47
      %p217 = por %p215, %p216
      %p219 = scmp.ne.s32.totalorder %s202, %s218
      %p220 = scmp.eq.s32.totalorder %s21, 0
      %p221 = por %p219, %p220
      %p222 = scmp.le.s32.totalorder 1, %s15
      %p223 = scmp.lt.s32.totalorder %s15, 49
      %p224 = pnand %p222, %p223
      %p225 = pneg %p224
      // Predicated region
      $region9: #{voxres_forward.7} parent=5 // pred_check
        _
      $region10: #{voxres_forward.7} parent=5 // pred_check_branch
        %227 = sbr.rel (%p224) target = $region12
      $region11: #{voxres_forward.7} parent=5 // pred_region
        %s228 = ssub.s32 %s15, 1
        // Predicated region
        $region13: #{voxres_forward.7} parent=11 // pred_check
          %p229 = pneg %p95
        $region14: #{voxres_forward.7} parent=11 // pred_check_branch
          %231 = sbr.rel (%p229) target = $region16
        $region15: #{voxres_forward.7} parent=11 // pred_region
          _
        $region16: #{voxres_forward.7} parent=11 // pred_fallthru
          _
        // Predicated region
        $region17: #{voxres_forward.7} parent=11 // pred_check
          %p232 = pneg %p116
        $region18: #{voxres_forward.7} parent=11 // pred_check_branch
          %234 = sbr.rel (%p232) target = $region20
        $region19: #{voxres_forward.7} parent=11 // pred_region
          _
        $region20: #{voxres_forward.7} parent=11 // pred_fallthru
          _
        // Predicated region
        $region21: #{voxres_forward.7} parent=11 // pred_check
          %p235 = pneg %p137
        $region22: #{voxres_forward.7} parent=11 // pred_check_branch
          %237 = sbr.rel (%p235) target = $region24
        $region23: #{voxres_forward.7} parent=11 // pred_region
          _
        $region24: #{voxres_forward.7} parent=11 // pred_fallthru
          _
        // Predicated region
        $region25: #{voxres_forward.7} parent=11 // pred_check
          %p238 = pneg %p158
        $region26: #{voxres_forward.7} parent=11 // pred_check_branch
          %240 = sbr.rel (%p238) target = $region28
        $region27: #{voxres_forward.7} parent=11 // pred_region
          _
        $region28: #{voxres_forward.7} parent=11 // pred_fallthru
          _
      $region12: #{voxres_forward.7} parent=5 // pred_fallthru
        _
      %p241 = scmp.lt.s32.totalorder %s15, 48
      // Predicated region
      $region29: #{voxres_forward.7} parent=5 // pred_check
        %p242 = pneg %p241
      $region30: #{voxres_forward.7} parent=5 // pred_check_branch
        %244 = sbr.rel (%p242) target = $region32
      $region31: #{voxres_forward.7} parent=5 // pred_region
        // Predicated region
        $region33: #{voxres_forward.7} parent=31 // pred_check
          %p245 = pneg %p68
        $region34: #{voxres_forward.7} parent=31 // pred_check_branch
          %247 = sbr.rel (%p245) target = $region36
        $region35: #{voxres_forward.7} parent=31 // pred_region
          %s248 = sadd.s32 %s23, %s24
          %s249 = ssub.s32 %s248, 1
          %p250 = scmp.gt.s32.totalorder %s249, 0
          %s251 = scalar_select %p250, %s249, 0
          %p252 = scmp.lt.s32.totalorder %s251, 7
          %s253 = scalar_select %p252, %s251, 7
          %p254 = scmp.lt.s32.totalorder %s22, 1
          %s255 = scalar_select %p254, %s22, 1
          %p256 = scmp.lt.s32.totalorder %s253, 7
          %s257 = scalar_select %p256, %s253, 7
          %s258 = smul.addr %s257, 16
          %s259 = smul.addr %s255, 128
          %s260 = sadd.s32 %s258, %s259
          %s261 = smul.addr %s260, 8
          %s262 = scalar_lea.vmem %s0, %s261
          %s263 = sadd.s32 %s23, %s24
          %s264 = ssub.s32 %s263, 1
          %p265 = scmp.gt.s32.totalorder %s264, 0
          %s266 = scalar_select %p265, %s264, 0
          %p267 = scmp.lt.s32.totalorder %s266, 7
          %s268 = scalar_select %p267, %s266, 7
        $region36: #{voxres_forward.7} parent=31 // pred_fallthru
          _
        // Predicated region
        $region37: #{voxres_forward.7} parent=31 // pred_check
          %p269 = pneg %p180
        $region38: #{voxres_forward.7} parent=31 // pred_check_branch
          %271 = sbr.rel (%p269) target = $region40
        $region39: #{voxres_forward.7} parent=31 // pred_region
          %p272 = scmp.lt.s32.totalorder %s22, 1
          %s273 = scalar_select %p272, %s22, 1
          %p274 = scmp.lt.s32.totalorder %s23, 7
          %s275 = scalar_select %p274, %s23, 7
          %s276 = smul.addr %s275, 16
          %s277 = smul.addr %s273, 128
          %s278 = sadd.s32 %s276, %s277
          %s279 = smul.addr %s278, 8
          %s280 = scalar_lea.vmem %s5, %s279
        $region40: #{voxres_forward.7} parent=31 // pred_fallthru
          _
      $region32: #{voxres_forward.7} parent=5 // pred_fallthru
        _
      %p281 = scmp.le.s32.totalorder 1, %s15
      %p282 = scmp.lt.s32.totalorder %s15, 49
      %p283 = pnand %p281, %p282
      %p284 = pneg %p283
      // Predicated region
      $region41: #{voxres_forward.7} parent=5 // pred_check
        _
      $region42: #{voxres_forward.7} parent=5 // pred_check_branch
        %286 = sbr.rel (%p283) target = $region44
      $region43: #{voxres_forward.7} parent=5 // pred_region
        %s287 = ssub.s32 %s15, 1
        %s288 = sadd.s32 %s26, %s27
        %s289 = ssub.s32 %s288, 1
        %p290 = scmp.gt.s32.totalorder %s289, 0
        %s291 = scalar_select %p290, %s289, 0
        %p292 = scmp.lt.s32.totalorder %s291, 7
        %s293 = scalar_select %p292, %s291, 7
        %p294 = scmp.lt.s32.totalorder %s25, 1
        %s295 = scalar_select %p294, %s25, 1
        %p296 = scmp.lt.s32.totalorder %s293, 7
        %s297 = scalar_select %p296, %s293, 7
        %s298 = smul.addr %s297, 16
        %s299 = smul.addr %s295, 128
        %s300 = sadd.s32 %s298, %s299
        %s301 = smul.addr %s300, 8
        %s302 = scalar_lea.vmem %s0, %s301
        %p303 = pneg %p74
        %p304 = pneg %p71
        %p305 = pneg %p95
        %p306 = pneg %p92
        %p307 = pneg %p116
        %p308 = pneg %p113
        %p309 = pneg %p137
        %p310 = pneg %p134
        %p311 = pneg %p158
        %p312 = pneg %p155
        %p313 = scmp.lt.s32.totalorder %s25, 1
        %s314 = scalar_select %p313, %s25, 1
        %p315 = scmp.lt.s32.totalorder %s26, 7
        %s316 = scalar_select %p315, %s26, 7
        %s317 = smul.addr %s316, 16
        %s318 = smul.addr %s314, 128
        %s319 = sadd.s32 %s317, %s318
        %s320 = smul.addr %s319, 8
        %s321 = scalar_lea.vmem %s5, %s320
        %p322 = pneg %p186
        %p323 = pneg %p183
        %p324 = pneg %p214
        %p325 = pneg %p211
        %s326 = sand.u32 %s201, 1
        %s327 = scalar_lea.sflag [#allocation5], %s326
        %s328 = sand.u32 %s201, 1
        %s329 = smul.addr %s328, 128
        %s330 = scalar_lea.vmem [#allocation4], %s329
        %s331 = sadd.s32 %s26, %s27
        %s332 = ssub.s32 %s331, 1
        %p333 = scmp.gt.s32.totalorder %s332, 0
        %s334 = scalar_select %p333, %s332, 0
        %p335 = scmp.lt.s32.totalorder %s334, 7
        %s336 = scalar_select %p335, %s334, 7
        %p337 = scmp.lt.s32.totalorder %s25, 1
        %s338 = scalar_select %p337, %s25, 1
        %p339 = scmp.lt.s32.totalorder %s336, 7
        %s340 = scalar_select %p339, %s336, 7
        %s341 = smul.addr %s340, 16
        %s342 = smul.addr %s338, 128
        %s343 = sadd.s32 %s341, %s342
        %s344 = smul.addr %s343, 8
        %s345 = scalar_lea.vmem %s0, %s344
        %s346 = sadd.s32 %s26, %s27
        %s347 = ssub.s32 %s346, 1
        %p348 = scmp.gt.s32.totalorder %s347, 0
        %s349 = scalar_select %p348, %s347, 0
        %p350 = scmp.lt.s32.totalorder %s349, 7
        %s351 = scalar_select %p350, %s349, 7
        %p352 = scmp.lt.s32.totalorder %s25, 1
        %s353 = scalar_select %p352, %s25, 1
        %p354 = scmp.lt.s32.totalorder %s26, 7
        %s355 = scalar_select %p354, %s26, 7
        %s356 = smul.addr %s355, 16
        %s357 = smul.addr %s353, 128
        %s358 = sadd.s32 %s356, %s357
        %s359 = smul.addr %s358, 8
        %s360 = scalar_lea.vmem %s5, %s359
        %s362 = sadd.s32 %s26, %s27
        %s363 = ssub.s32 %s362, 1
        %p364 = scmp.ge.s32.totalorder %s363, 0
        %p365 = scmp.lt.s32.totalorder %s363, 8
        %p366 = pnand %p364, %p365
        %p367 = pneg %p366
        %p368 = scmp.eq.s32.totalorder %s27, 0
        // Predicated region
        $region45: #{voxres_forward.7} parent=43 // pred_check
          %p369 = pneg %p368
        $region46: #{voxres_forward.7} parent=43 // pred_check_branch
          %371 = sbr.rel (%p369) target = $region48
        $region47: #{voxres_forward.7} parent=43 // pred_region
          %vm372 = vcmask 523264
          %373 = vst.msk [vmem:[#allocation3] sm:$0xff] %vm372, 0.0
          %vm374 = vcmask 517120
          %375 = vst.msk [vmem:[#allocation3 + $0x8] sm:$0x3] %vm374, 0.0
          %376 = vst.msk [vmem:[#allocation3 + $0x10] sm:$0xff] %vm372, 0.0
          %377 = vst.msk [vmem:[#allocation3 + $0x18] sm:$0x3] %vm374, 0.0
          %378 = vst.msk [vmem:[#allocation3 + $0x20] sm:$0xff] %vm372, 0.0
          %379 = vst.msk [vmem:[#allocation3 + $0x28] sm:$0x3] %vm374, 0.0
          %380 = vst.msk [vmem:[#allocation3 + $0x30] sm:$0xff] %vm372, 0.0
          %381 = vst.msk [vmem:[#allocation3 + $0x38] sm:$0x3] %vm374, 0.0
          %382 = vst.msk [vmem:[#allocation3 + $0x40] sm:$0xff] %vm372, 0.0
          %383 = vst.msk [vmem:[#allocation3 + $0x48] sm:$0x3] %vm374, 0.0
          %384 = vst.msk [vmem:[#allocation3 + $0x50] sm:$0xff] %vm372, 0.0
          %385 = vst.msk [vmem:[#allocation3 + $0x58] sm:$0x3] %vm374, 0.0
          %386 = vst.msk [vmem:[#allocation3 + $0x60] sm:$0xff] %vm372, 0.0
          %387 = vst.msk [vmem:[#allocation3 + $0x68] sm:$0x3] %vm374, 0.0
          %388 = vst.msk [vmem:[#allocation3 + $0x70] sm:$0xff] %vm372, 0.0
          %389 = vst.msk [vmem:[#allocation3 + $0x78] sm:$0x3] %vm374, 0.0
          %390 = vst.msk [vmem:[#allocation3 + $0x80] sm:$0xff] %vm372, 0.0
          %391 = vst.msk [vmem:[#allocation3 + $0x88] sm:$0x3] %vm374, 0.0
          %392 = vst.msk [vmem:[#allocation3 + $0x90] sm:$0xff] %vm372, 0.0
          %393 = vst.msk [vmem:[#allocation3 + $0x98] sm:$0x3] %vm374, 0.0
          %394 = vst.msk [vmem:[#allocation3 + $0xa0] sm:$0xff] %vm372, 0.0
          %395 = vst.msk [vmem:[#allocation3 + $0xa8] sm:$0x3] %vm374, 0.0
          %396 = vst.msk [vmem:[#allocation3 + $0xb0] sm:$0xff] %vm372, 0.0
          %397 = vst.msk [vmem:[#allocation3 + $0xb8] sm:$0x3] %vm374, 0.0
          %398 = vst.msk [vmem:[#allocation3 + $0xc0] sm:$0xff] %vm372, 0.0
          %399 = vst.msk [vmem:[#allocation3 + $0xc8] sm:$0x3] %vm374, 0.0
          %400 = vst.msk [vmem:[#allocation3 + $0xd0] sm:$0xff] %vm372, 0.0
          %401 = vst.msk [vmem:[#allocation3 + $0xd8] sm:$0x3] %vm374, 0.0
          %402 = vst.msk [vmem:[#allocation3 + $0xe0] sm:$0xff] %vm372, 0.0
          %403 = vst.msk [vmem:[#allocation3 + $0xe8] sm:$0x3] %vm374, 0.0
          %404 = vst.msk [vmem:[#allocation3 + $0xf0] sm:$0xff] %vm372, 0.0
          %405 = vst.msk [vmem:[#allocation3 + $0xf8] sm:$0x3] %vm374, 0.0
          %406 = vst.msk [vmem:[#allocation3 + $0x100] sm:$0xff] %vm372, 0.0
          %407 = vst.msk [vmem:[#allocation3 + $0x108] sm:$0x3] %vm374, 0.0
          %408 = vst.msk [vmem:[#allocation3 + $0x110] sm:$0xff] %vm372, 0.0
          %409 = vst.msk [vmem:[#allocation3 + $0x118] sm:$0x3] %vm374, 0.0
          %v410 = vld [vmem:[%s4] sm:$0x1]
          %v412 = vlaneseq
          %v413 = vshrl.u32 %v412, 7
          %v414 = vsub.s32 0, %v413
          %v415 = vrot.slane %v410, %v414
          %417 = vst.msk [vmem:[#allocation2] sm:$0xff] %vm372, %v415
          %418 = vst.msk [vmem:[#allocation2 + $0x8] sm:$0xff] %vm372, %v415
          %419 = vst.msk [vmem:[#allocation2 + $0x10] sm:$0xff] %vm372, %v415
          %420 = vst.msk [vmem:[#allocation2 + $0x18] sm:$0xff] %vm372, %v415
          %421 = vst.msk [vmem:[#allocation2 + $0x20] sm:$0xff] %vm372, %v415
          %422 = vst.msk [vmem:[#allocation2 + $0x28] sm:$0xff] %vm372, %v415
          %423 = vst.msk [vmem:[#allocation2 + $0x30] sm:$0xff] %vm372, %v415
          %424 = vst.msk [vmem:[#allocation2 + $0x38] sm:$0xff] %vm372, %v415
          %425 = vst.msk [vmem:[#allocation2 + $0x40] sm:$0xff] %vm372, %v415
          %426 = vst.msk [vmem:[#allocation2 + $0x48] sm:$0xff] %vm372, %v415
          %427 = vst.msk [vmem:[#allocation2 + $0x50] sm:$0xff] %vm372, %v415
          %428 = vst.msk [vmem:[#allocation2 + $0x58] sm:$0xff] %vm372, %v415
          %429 = vst.msk [vmem:[#allocation2 + $0x60] sm:$0xff] %vm372, %v415
          %430 = vst.msk [vmem:[#allocation2 + $0x68] sm:$0xff] %vm372, %v415
          %431 = vst.msk [vmem:[#allocation2 + $0x70] sm:$0xff] %vm372, %v415
          %432 = vst.msk [vmem:[#allocation2 + $0x78] sm:$0xff] %vm372, %v415
        $region48: #{voxres_forward.7} parent=43 // pred_fallthru
          _
        // Predicated region
        $region49: #{voxres_forward.7} parent=43 // pred_check
          _
        $region50: #{voxres_forward.7} parent=43 // pred_check_branch
          %434 = sbr.rel (%p366) target = $region52
        $region51: #{voxres_forward.7} parent=43 // pred_region
          %v435 = vld [vmem:[%s345] sm:$0xff]
          %v436 = vld [vmem:[%s345 + $0x8] sm:$0xff]
          %v437 = vld [vmem:[%s345 + $0x10] sm:$0xff]
          %v438 = vld [vmem:[%s345 + $0x18] sm:$0xff]
          %v439 = vld [vmem:[%s345 + $0x20] sm:$0xff]
          %v440 = vld [vmem:[%s345 + $0x28] sm:$0xff]
          %v441 = vld [vmem:[%s345 + $0x30] sm:$0xff]
          %v442 = vld [vmem:[%s345 + $0x38] sm:$0xff]
          %v443 = vld [vmem:[%s345 + $0x40] sm:$0xff]
          %v444 = vld [vmem:[%s345 + $0x48] sm:$0xff]
          %v445 = vld [vmem:[%s345 + $0x50] sm:$0xff]
          %v446 = vld [vmem:[%s345 + $0x58] sm:$0xff]
          %v447 = vld [vmem:[%s345 + $0x60] sm:$0xff]
          %v448 = vld [vmem:[%s345 + $0x68] sm:$0xff]
          %v449 = vld [vmem:[%s345 + $0x70] sm:$0xff]
          %v450 = vld [vmem:[%s345 + $0x78] sm:$0xff]
          %v451 = vld [vmem:[%s1] sm:$0x1]
          %v453 = vlaneseq
          %v454 = vshrl.u32 %v453, 7
          %v455 = vsub.s32 0, %v454
          %v456 = vrot.slane %v451, %v455
          %v458 = vmul.f32 %v435, %v456
          %v459 = vmul.f32 %v436, %v456
          %v460 = vmul.f32 %v437, %v456
          %v461 = vmul.f32 %v438, %v456
          %v462 = vmul.f32 %v439, %v456
          %v463 = vmul.f32 %v440, %v456
          %v464 = vmul.f32 %v441, %v456
          %v465 = vmul.f32 %v442, %v456
          %v466 = vmul.f32 %v443, %v456
          %v467 = vmul.f32 %v444, %v456
          %v468 = vmul.f32 %v445, %v456
          %v469 = vmul.f32 %v446, %v456
          %v470 = vmul.f32 %v447, %v456
          %v471 = vmul.f32 %v448, %v456
          %v472 = vmul.f32 %v449, %v456
          %v473 = vmul.f32 %v450, %v456
          %v474 = vld [vmem:[%s2] sm:$0x1]
          %v476 = vlaneseq
          %v477 = vshrl.u32 %v476, 7
          %v478 = vsub.s32 0, %v477
          %v479 = vrot.slane %v474, %v478
          %v481 = vadd.f32 %v458, %v479
          %v482 = vadd.f32 %v459, %v479
          %v483 = vadd.f32 %v460, %v479
          %v484 = vadd.f32 %v461, %v479
          %v485 = vadd.f32 %v462, %v479
          %v486 = vadd.f32 %v463, %v479
          %v487 = vadd.f32 %v464, %v479
          %v488 = vadd.f32 %v465, %v479
          %v489 = vadd.f32 %v466, %v479
          %v490 = vadd.f32 %v467, %v479
          %v491 = vadd.f32 %v468, %v479
          %v492 = vadd.f32 %v469, %v479
          %v493 = vadd.f32 %v470, %v479
          %v494 = vadd.f32 %v471, %v479
          %v495 = vadd.f32 %v472, %v479
          %v496 = vadd.f32 %v473, %v479
          %vm497 = vcmp.ge.f32.partialorder %v481, 0.0
          %vm498 = vcmp.ge.f32.partialorder %v482, 0.0
          %vm499 = vcmp.ge.f32.partialorder %v483, 0.0
          %vm500 = vcmp.ge.f32.partialorder %v484, 0.0
          %vm501 = vcmp.ge.f32.partialorder %v485, 0.0
          %vm502 = vcmp.ge.f32.partialorder %v486, 0.0
          %vm503 = vcmp.ge.f32.partialorder %v487, 0.0
          %vm504 = vcmp.ge.f32.partialorder %v488, 0.0
          %vm505 = vcmp.ge.f32.partialorder %v489, 0.0
          %vm506 = vcmp.ge.f32.partialorder %v490, 0.0
          %vm507 = vcmp.ge.f32.partialorder %v491, 0.0
          %vm508 = vcmp.ge.f32.partialorder %v492, 0.0
          %vm509 = vcmp.ge.f32.partialorder %v493, 0.0
          %vm510 = vcmp.ge.f32.partialorder %v494, 0.0
          %vm511 = vcmp.ge.f32.partialorder %v495, 0.0
          %vm512 = vcmp.ge.f32.partialorder %v496, 0.0
          %v513 = vmul.f32 %v481, 1e-05
          %v514 = vmul.f32 %v482, 1e-05
          %v515 = vmul.f32 %v483, 1e-05
          %v516 = vmul.f32 %v484, 1e-05
          %v517 = vmul.f32 %v485, 1e-05
          %v518 = vmul.f32 %v486, 1e-05
          %v519 = vmul.f32 %v487, 1e-05
          %v520 = vmul.f32 %v488, 1e-05
          %v521 = vmul.f32 %v489, 1e-05
          %v522 = vmul.f32 %v490, 1e-05
          %v523 = vmul.f32 %v491, 1e-05
          %v524 = vmul.f32 %v492, 1e-05
          %v525 = vmul.f32 %v493, 1e-05
          %v526 = vmul.f32 %v494, 1e-05
          %v527 = vmul.f32 %v495, 1e-05
          %v528 = vmul.f32 %v496, 1e-05
          %v529 = vsel %vm497, %v481, %v513
          %v530 = vsel %vm498, %v482, %v514
          %v531 = vsel %vm499, %v483, %v515
          %v532 = vsel %vm500, %v484, %v516
          %v533 = vsel %vm501, %v485, %v517
          %v534 = vsel %vm502, %v486, %v518
          %v535 = vsel %vm503, %v487, %v519
          %v536 = vsel %vm504, %v488, %v520
          %v537 = vsel %vm505, %v489, %v521
          %v538 = vsel %vm506, %v490, %v522
          %v539 = vsel %vm507, %v491, %v523
          %v540 = vsel %vm508, %v492, %v524
          %v541 = vsel %vm509, %v493, %v525
          %v542 = vsel %vm510, %v494, %v526
          %v543 = vsel %vm511, %v495, %v527
          %v544 = vsel %vm512, %v496, %v528
          %s545 = scalar_lea.vmem [#allocation3], 16
          %vm546 = vcmask 523264
          %547 = vst.msk [vmem:[%s545 + $0x1] sm:$0xff] %vm546, %v529
          %548 = vst.msk [vmem:[%s545 + $0x11] sm:$0xff] %vm546, %v530
          %549 = vst.msk [vmem:[%s545 + $0x21] sm:$0xff] %vm546, %v531
          %550 = vst.msk [vmem:[%s545 + $0x31] sm:$0xff] %vm546, %v532
          %551 = vst.msk [vmem:[%s545 + $0x41] sm:$0xff] %vm546, %v533
          %552 = vst.msk [vmem:[%s545 + $0x51] sm:$0xff] %vm546, %v534
          %553 = vst.msk [vmem:[%s545 + $0x61] sm:$0xff] %vm546, %v535
          %554 = vst.msk [vmem:[%s545 + $0x71] sm:$0xff] %vm546, %v536
          %555 = vst.msk [vmem:[%s545 + $0x81] sm:$0xff] %vm546, %v537
          %556 = vst.msk [vmem:[%s545 + $0x91] sm:$0xff] %vm546, %v538
          %557 = vst.msk [vmem:[%s545 + $0xa1] sm:$0xff] %vm546, %v539
          %558 = vst.msk [vmem:[%s545 + $0xb1] sm:$0xff] %vm546, %v540
          %559 = vst.msk [vmem:[%s545 + $0xc1] sm:$0xff] %vm546, %v541
          %560 = vst.msk [vmem:[%s545 + $0xd1] sm:$0xff] %vm546, %v542
          %561 = vst.msk [vmem:[%s545 + $0xe1] sm:$0xff] %vm546, %v543
          %562 = vst.msk [vmem:[%s545 + $0xf1] sm:$0xff] %vm546, %v544
          %v563 = vld [vmem:[#allocation3] sm:$0xff]
          %v564 = vld [vmem:[#allocation3 + $0x10] sm:$0xff]
          %v565 = vld [vmem:[#allocation3 + $0x20] sm:$0xff]
          %v566 = vld [vmem:[#allocation3 + $0x30] sm:$0xff]
          %v567 = vld [vmem:[#allocation3 + $0x40] sm:$0xff]
          %v568 = vld [vmem:[#allocation3 + $0x50] sm:$0xff]
          %v569 = vld [vmem:[#allocation3 + $0x60] sm:$0xff]
          %v570 = vld [vmem:[#allocation3 + $0x70] sm:$0xff]
          %v571 = vld [vmem:[#allocation3 + $0x80] sm:$0xff]
          %v572 = vld [vmem:[#allocation3 + $0x90] sm:$0xff]
          %v573 = vld [vmem:[#allocation3 + $0xa0] sm:$0xff]
          %v574 = vld [vmem:[#allocation3 + $0xb0] sm:$0xff]
          %v575 = vld [vmem:[#allocation3 + $0xc0] sm:$0xff]
          %v576 = vld [vmem:[#allocation3 + $0xd0] sm:$0xff]
          %v577 = vld [vmem:[#allocation3 + $0xe0] sm:$0xff]
          %v578 = vld [vmem:[#allocation3 + $0xf0] sm:$0xff]
          %v579 = vld [vmem:[#allocation3 + $0x1] sm:$0xff]
          %v580 = vld [vmem:[#allocation3 + $0x11] sm:$0xff]
          %v581 = vld [vmem:[#allocation3 + $0x21] sm:$0xff]
          %v582 = vld [vmem:[#allocation3 + $0x31] sm:$0xff]
          %v583 = vld [vmem:[#allocation3 + $0x41] sm:$0xff]
          %v584 = vld [vmem:[#allocation3 + $0x51] sm:$0xff]
          %v585 = vld [vmem:[#allocation3 + $0x61] sm:$0xff]
          %v586 = vld [vmem:[#allocation3 + $0x71] sm:$0xff]
          %v587 = vld [vmem:[#allocation3 + $0x81] sm:$0xff]
          %v588 = vld [vmem:[#allocation3 + $0x91] sm:$0xff]
          %v589 = vld [vmem:[#allocation3 + $0xa1] sm:$0xff]
          %v590 = vld [vmem:[#allocation3 + $0xb1] sm:$0xff]
          %v591 = vld [vmem:[#allocation3 + $0xc1] sm:$0xff]
          %v592 = vld [vmem:[#allocation3 + $0xd1] sm:$0xff]
          %v593 = vld [vmem:[#allocation3 + $0xe1] sm:$0xff]
          %v594 = vld [vmem:[#allocation3 + $0xf1] sm:$0xff]
          %v595 = vld [vmem:[#allocation3 + $0x2] sm:$0xff]
          %v596 = vld [vmem:[#allocation3 + $0x12] sm:$0xff]
          %v597 = vld [vmem:[#allocation3 + $0x22] sm:$0xff]
          %v598 = vld [vmem:[#allocation3 + $0x32] sm:$0xff]
          %v599 = vld [vmem:[#allocation3 + $0x42] sm:$0xff]
          %v600 = vld [vmem:[#allocation3 + $0x52] sm:$0xff]
          %v601 = vld [vmem:[#allocation3 + $0x62] sm:$0xff]
          %v602 = vld [vmem:[#allocation3 + $0x72] sm:$0xff]
          %v603 = vld [vmem:[#allocation3 + $0x82] sm:$0xff]
          %v604 = vld [vmem:[#allocation3 + $0x92] sm:$0xff]
          %v605 = vld [vmem:[#allocation3 + $0xa2] sm:$0xff]
          %v606 = vld [vmem:[#allocation3 + $0xb2] sm:$0xff]
          %v607 = vld [vmem:[#allocation3 + $0xc2] sm:$0xff]
          %v608 = vld [vmem:[#allocation3 + $0xd2] sm:$0xff]
          %v609 = vld [vmem:[#allocation3 + $0xe2] sm:$0xff]
          %v610 = vld [vmem:[#allocation3 + $0xf2] sm:$0xff]
          %v611 = vld [vmem:[%s545] sm:$0xff]
          %v612 = vld [vmem:[%s545 + $0x10] sm:$0xff]
          %v613 = vld [vmem:[%s545 + $0x20] sm:$0xff]
          %v614 = vld [vmem:[%s545 + $0x30] sm:$0xff]
          %v615 = vld [vmem:[%s545 + $0x40] sm:$0xff]
          %v616 = vld [vmem:[%s545 + $0x50] sm:$0xff]
          %v617 = vld [vmem:[%s545 + $0x60] sm:$0xff]
          %v618 = vld [vmem:[%s545 + $0x70] sm:$0xff]
          %v619 = vld [vmem:[%s545 + $0x80] sm:$0xff]
          %v620 = vld [vmem:[%s545 + $0x90] sm:$0xff]
          %v621 = vld [vmem:[%s545 + $0xa0] sm:$0xff]
          %v622 = vld [vmem:[%s545 + $0xb0] sm:$0xff]
          %v623 = vld [vmem:[%s545 + $0xc0] sm:$0xff]
          %v624 = vld [vmem:[%s545 + $0xd0] sm:$0xff]
          %v625 = vld [vmem:[%s545 + $0xe0] sm:$0xff]
          %v626 = vld [vmem:[%s545 + $0xf0] sm:$0xff]
          %v627 = vld [vmem:[%s545 + $0x1] sm:$0xff]
          %v628 = vld [vmem:[%s545 + $0x11] sm:$0xff]
          %v629 = vld [vmem:[%s545 + $0x21] sm:$0xff]
          %v630 = vld [vmem:[%s545 + $0x31] sm:$0xff]
          %v631 = vld [vmem:[%s545 + $0x41] sm:$0xff]
          %v632 = vld [vmem:[%s545 + $0x51] sm:$0xff]
          %v633 = vld [vmem:[%s545 + $0x61] sm:$0xff]
          %v634 = vld [vmem:[%s545 + $0x71] sm:$0xff]
          %v635 = vld [vmem:[%s545 + $0x81] sm:$0xff]
          %v636 = vld [vmem:[%s545 + $0x91] sm:$0xff]
          %v637 = vld [vmem:[%s545 + $0xa1] sm:$0xff]
          %v638 = vld [vmem:[%s545 + $0xb1] sm:$0xff]
          %v639 = vld [vmem:[%s545 + $0xc1] sm:$0xff]
          %v640 = vld [vmem:[%s545 + $0xd1] sm:$0xff]
          %v641 = vld [vmem:[%s545 + $0xe1] sm:$0xff]
          %v642 = vld [vmem:[%s545 + $0xf1] sm:$0xff]
          %v643 = vld [vmem:[%s545 + $0x2] sm:$0xff]
          %v644 = vld [vmem:[%s545 + $0x12] sm:$0xff]
          %v645 = vld [vmem:[%s545 + $0x22] sm:$0xff]
          %v646 = vld [vmem:[%s545 + $0x32] sm:$0xff]
          %v647 = vld [vmem:[%s545 + $0x42] sm:$0xff]
          %v648 = vld [vmem:[%s545 + $0x52] sm:$0xff]
          %v649 = vld [vmem:[%s545 + $0x62] sm:$0xff]
          %v650 = vld [vmem:[%s545 + $0x72] sm:$0xff]
          %v651 = vld [vmem:[%s545 + $0x82] sm:$0xff]
          %v652 = vld [vmem:[%s545 + $0x92] sm:$0xff]
          %v653 = vld [vmem:[%s545 + $0xa2] sm:$0xff]
          %v654 = vld [vmem:[%s545 + $0xb2] sm:$0xff]
          %v655 = vld [vmem:[%s545 + $0xc2] sm:$0xff]
          %v656 = vld [vmem:[%s545 + $0xd2] sm:$0xff]
          %v657 = vld [vmem:[%s545 + $0xe2] sm:$0xff]
          %v658 = vld [vmem:[%s545 + $0xf2] sm:$0xff]
          %s659 = scalar_lea.vmem [#allocation3], 32
          %v660 = vld [vmem:[%s659] sm:$0xff]
          %v661 = vld [vmem:[%s659 + $0x10] sm:$0xff]
          %v662 = vld [vmem:[%s659 + $0x20] sm:$0xff]
          %v663 = vld [vmem:[%s659 + $0x30] sm:$0xff]
          %v664 = vld [vmem:[%s659 + $0x40] sm:$0xff]
          %v665 = vld [vmem:[%s659 + $0x50] sm:$0xff]
          %v666 = vld [vmem:[%s659 + $0x60] sm:$0xff]
          %v667 = vld [vmem:[%s659 + $0x70] sm:$0xff]
          %v668 = vld [vmem:[%s659 + $0x80] sm:$0xff]
          %v669 = vld [vmem:[%s659 + $0x90] sm:$0xff]
          %v670 = vld [vmem:[%s659 + $0xa0] sm:$0xff]
          %v671 = vld [vmem:[%s659 + $0xb0] sm:$0xff]
          %v672 = vld [vmem:[%s659 + $0xc0] sm:$0xff]
          %v673 = vld [vmem:[%s659 + $0xd0] sm:$0xff]
          %v674 = vld [vmem:[%s659 + $0xe0] sm:$0xff]
          %v675 = vld [vmem:[%s659 + $0xf0] sm:$0xff]
          %v676 = vld [vmem:[%s659 + $0x1] sm:$0xff]
          %v677 = vld [vmem:[%s659 + $0x11] sm:$0xff]
          %v678 = vld [vmem:[%s659 + $0x21] sm:$0xff]
          %v679 = vld [vmem:[%s659 + $0x31] sm:$0xff]
          %v680 = vld [vmem:[%s659 + $0x41] sm:$0xff]
          %v681 = vld [vmem:[%s659 + $0x51] sm:$0xff]
          %v682 = vld [vmem:[%s659 + $0x61] sm:$0xff]
          %v683 = vld [vmem:[%s659 + $0x71] sm:$0xff]
          %v684 = vld [vmem:[%s659 + $0x81] sm:$0xff]
          %v685 = vld [vmem:[%s659 + $0x91] sm:$0xff]
          %v686 = vld [vmem:[%s659 + $0xa1] sm:$0xff]
          %v687 = vld [vmem:[%s659 + $0xb1] sm:$0xff]
          %v688 = vld [vmem:[%s659 + $0xc1] sm:$0xff]
          %v689 = vld [vmem:[%s659 + $0xd1] sm:$0xff]
          %v690 = vld [vmem:[%s659 + $0xe1] sm:$0xff]
          %v691 = vld [vmem:[%s659 + $0xf1] sm:$0xff]
          %v692 = vld [vmem:[%s659 + $0x2] sm:$0xff]
          %v693 = vld [vmem:[%s659 + $0x12] sm:$0xff]
          %v694 = vld [vmem:[%s659 + $0x22] sm:$0xff]
          %v695 = vld [vmem:[%s659 + $0x32] sm:$0xff]
          %v696 = vld [vmem:[%s659 + $0x42] sm:$0xff]
          %v697 = vld [vmem:[%s659 + $0x52] sm:$0xff]
          %v698 = vld [vmem:[%s659 + $0x62] sm:$0xff]
          %v699 = vld [vmem:[%s659 + $0x72] sm:$0xff]
          %v700 = vld [vmem:[%s659 + $0x82] sm:$0xff]
          %v701 = vld [vmem:[%s659 + $0x92] sm:$0xff]
          %v702 = vld [vmem:[%s659 + $0xa2] sm:$0xff]
          %v703 = vld [vmem:[%s659 + $0xb2] sm:$0xff]
          %v704 = vld [vmem:[%s659 + $0xc2] sm:$0xff]
          %v705 = vld [vmem:[%s659 + $0xd2] sm:$0xff]
          %v706 = vld [vmem:[%s659 + $0xe2] sm:$0xff]
          %v707 = vld [vmem:[%s659 + $0xf2] sm:$0xff]
          %724 = vrot.lane.b32.xlu0 %v579, 64
          %v725 = vpop.permute.xlu0 %724
          %726 = vrot.lane.b32.xlu0 %v580, 64
          %v727 = vpop.permute.xlu0 %726
          %728 = vrot.lane.b32.xlu0 %v581, 64
          %v729 = vpop.permute.xlu0 %728
          %730 = vrot.lane.b32.xlu0 %v582, 64
          %v731 = vpop.permute.xlu0 %730
          %732 = vrot.lane.b32.xlu0 %v583, 64
          %v733 = vpop.permute.xlu0 %732
          %734 = vrot.lane.b32.xlu0 %v584, 64
          %v735 = vpop.permute.xlu0 %734
          %736 = vrot.lane.b32.xlu0 %v585, 64
          %v737 = vpop.permute.xlu0 %736
          %738 = vrot.lane.b32.xlu0 %v586, 64
          %v739 = vpop.permute.xlu0 %738
          %740 = vrot.lane.b32.xlu0 %v587, 64
          %v741 = vpop.permute.xlu0 %740
          %742 = vrot.lane.b32.xlu0 %v588, 64
          %v743 = vpop.permute.xlu0 %742
          %744 = vrot.lane.b32.xlu0 %v589, 64
          %v745 = vpop.permute.xlu0 %744
          %746 = vrot.lane.b32.xlu0 %v590, 64
          %v747 = vpop.permute.xlu0 %746
          %748 = vrot.lane.b32.xlu0 %v591, 64
          %v749 = vpop.permute.xlu0 %748
          %750 = vrot.lane.b32.xlu0 %v592, 64
          %v751 = vpop.permute.xlu0 %750
          %752 = vrot.lane.b32.xlu0 %v593, 64
          %v753 = vpop.permute.xlu0 %752
          %754 = vrot.lane.b32.xlu0 %v594, 64
          %v755 = vpop.permute.xlu0 %754
          %788 = vrot.lane.b32.xlu0 %v611, 64
          %v789 = vpop.permute.xlu0 %788
          %790 = vrot.lane.b32.xlu0 %v612, 64
          %v791 = vpop.permute.xlu0 %790
          %792 = vrot.lane.b32.xlu0 %v613, 64
          %v793 = vpop.permute.xlu0 %792
          %794 = vrot.lane.b32.xlu0 %v614, 64
          %v795 = vpop.permute.xlu0 %794
          %796 = vrot.lane.b32.xlu0 %v615, 64
          %v797 = vpop.permute.xlu0 %796
          %798 = vrot.lane.b32.xlu0 %v616, 64
          %v799 = vpop.permute.xlu0 %798
          %800 = vrot.lane.b32.xlu0 %v617, 64
          %v801 = vpop.permute.xlu0 %800
          %802 = vrot.lane.b32.xlu0 %v618, 64
          %v803 = vpop.permute.xlu0 %802
          %804 = vrot.lane.b32.xlu0 %v619, 64
          %v805 = vpop.permute.xlu0 %804
          %806 = vrot.lane.b32.xlu0 %v620, 64
          %v807 = vpop.permute.xlu0 %806
          %808 = vrot.lane.b32.xlu0 %v621, 64
          %v809 = vpop.permute.xlu0 %808
          %810 = vrot.lane.b32.xlu0 %v622, 64
          %v811 = vpop.permute.xlu0 %810
          %812 = vrot.lane.b32.xlu0 %v623, 64
          %v813 = vpop.permute.xlu0 %812
          %814 = vrot.lane.b32.xlu0 %v624, 64
          %v815 = vpop.permute.xlu0 %814
          %816 = vrot.lane.b32.xlu0 %v625, 64
          %v817 = vpop.permute.xlu0 %816
          %818 = vrot.lane.b32.xlu0 %v626, 64
          %v819 = vpop.permute.xlu0 %818
          %852 = vrot.lane.b32.xlu0 %v643, 64
          %v853 = vpop.permute.xlu0 %852
          %854 = vrot.lane.b32.xlu0 %v644, 64
          %v855 = vpop.permute.xlu0 %854
          %856 = vrot.lane.b32.xlu0 %v645, 64
          %v857 = vpop.permute.xlu0 %856
          %858 = vrot.lane.b32.xlu0 %v646, 64
          %v859 = vpop.permute.xlu0 %858
          %860 = vrot.lane.b32.xlu0 %v647, 64
          %v861 = vpop.permute.xlu0 %860
          %862 = vrot.lane.b32.xlu0 %v648, 64
          %v863 = vpop.permute.xlu0 %862
          %864 = vrot.lane.b32.xlu0 %v649, 64
          %v865 = vpop.permute.xlu0 %864
          %866 = vrot.lane.b32.xlu0 %v650, 64
          %v867 = vpop.permute.xlu0 %866
          %868 = vrot.lane.b32.xlu0 %v651, 64
          %v869 = vpop.permute.xlu0 %868
          %870 = vrot.lane.b32.xlu0 %v652, 64
          %v871 = vpop.permute.xlu0 %870
          %872 = vrot.lane.b32.xlu0 %v653, 64
          %v873 = vpop.permute.xlu0 %872
          %874 = vrot.lane.b32.xlu0 %v654, 64
          %v875 = vpop.permute.xlu0 %874
          %876 = vrot.lane.b32.xlu0 %v655, 64
          %v877 = vpop.permute.xlu0 %876
          %878 = vrot.lane.b32.xlu0 %v656, 64
          %v879 = vpop.permute.xlu0 %878
          %880 = vrot.lane.b32.xlu0 %v657, 64
          %v881 = vpop.permute.xlu0 %880
          %882 = vrot.lane.b32.xlu0 %v658, 64
          %v883 = vpop.permute.xlu0 %882
          %916 = vrot.lane.b32.xlu0 %v676, 64
          %v917 = vpop.permute.xlu0 %916
          %918 = vrot.lane.b32.xlu0 %v677, 64
          %v919 = vpop.permute.xlu0 %918
          %920 = vrot.lane.b32.xlu0 %v678, 64
          %v921 = vpop.permute.xlu0 %920
          %922 = vrot.lane.b32.xlu0 %v679, 64
          %v923 = vpop.permute.xlu0 %922
          %924 = vrot.lane.b32.xlu0 %v680, 64
          %v925 = vpop.permute.xlu0 %924
          %926 = vrot.lane.b32.xlu0 %v681, 64
          %v927 = vpop.permute.xlu0 %926
          %928 = vrot.lane.b32.xlu0 %v682, 64
          %v929 = vpop.permute.xlu0 %928
          %930 = vrot.lane.b32.xlu0 %v683, 64
          %v931 = vpop.permute.xlu0 %930
          %932 = vrot.lane.b32.xlu0 %v684, 64
          %v933 = vpop.permute.xlu0 %932
          %934 = vrot.lane.b32.xlu0 %v685, 64
          %v935 = vpop.permute.xlu0 %934
          %936 = vrot.lane.b32.xlu0 %v686, 64
          %v937 = vpop.permute.xlu0 %936
          %938 = vrot.lane.b32.xlu0 %v687, 64
          %v939 = vpop.permute.xlu0 %938
          %940 = vrot.lane.b32.xlu0 %v688, 64
          %v941 = vpop.permute.xlu0 %940
          %942 = vrot.lane.b32.xlu0 %v689, 64
          %v943 = vpop.permute.xlu0 %942
          %944 = vrot.lane.b32.xlu0 %v690, 64
          %v945 = vpop.permute.xlu0 %944
          %946 = vrot.lane.b32.xlu0 %v691, 64
          %v947 = vpop.permute.xlu0 %946
          %v964 = vsel %vm546, %v563, %v725
          %v965 = vsel %vm546, %v564, %v727
          %v966 = vsel %vm546, %v565, %v729
          %v967 = vsel %vm546, %v566, %v731
          %v968 = vsel %vm546, %v567, %v733
          %v969 = vsel %vm546, %v568, %v735
          %v970 = vsel %vm546, %v569, %v737
          %v971 = vsel %vm546, %v570, %v739
          %v972 = vsel %vm546, %v571, %v741
          %v973 = vsel %vm546, %v572, %v743
          %v974 = vsel %vm546, %v573, %v745
          %v975 = vsel %vm546, %v574, %v747
          %v976 = vsel %vm546, %v575, %v749
          %v977 = vsel %vm546, %v576, %v751
          %v978 = vsel %vm546, %v577, %v753
          %v979 = vsel %vm546, %v578, %v755
          %v980 = vsel %vm546, %v595, %v789
          %v981 = vsel %vm546, %v596, %v791
          %v982 = vsel %vm546, %v597, %v793
          %v983 = vsel %vm546, %v598, %v795
          %v984 = vsel %vm546, %v599, %v797
          %v985 = vsel %vm546, %v600, %v799
          %v986 = vsel %vm546, %v601, %v801
          %v987 = vsel %vm546, %v602, %v803
          %v988 = vsel %vm546, %v603, %v805
          %v989 = vsel %vm546, %v604, %v807
          %v990 = vsel %vm546, %v605, %v809
          %v991 = vsel %vm546, %v606, %v811
          %v992 = vsel %vm546, %v607, %v813
          %v993 = vsel %vm546, %v608, %v815
          %v994 = vsel %vm546, %v609, %v817
          %v995 = vsel %vm546, %v610, %v819
          %v996 = vsel %vm546, %v627, %v853
          %v997 = vsel %vm546, %v628, %v855
          %v998 = vsel %vm546, %v629, %v857
          %v999 = vsel %vm546, %v630, %v859
          %v1000 = vsel %vm546, %v631, %v861
          %v1001 = vsel %vm546, %v632, %v863
          %v1002 = vsel %vm546, %v633, %v865
          %v1003 = vsel %vm546, %v634, %v867
          %v1004 = vsel %vm546, %v635, %v869
          %v1005 = vsel %vm546, %v636, %v871
          %v1006 = vsel %vm546, %v637, %v873
          %v1007 = vsel %vm546, %v638, %v875
          %v1008 = vsel %vm546, %v639, %v877
          %v1009 = vsel %vm546, %v640, %v879
          %v1010 = vsel %vm546, %v641, %v881
          %v1011 = vsel %vm546, %v642, %v883
          %v1012 = vsel %vm546, %v660, %v917
          %v1013 = vsel %vm546, %v661, %v919
          %v1014 = vsel %vm546, %v662, %v921
          %v1015 = vsel %vm546, %v663, %v923
          %v1016 = vsel %vm546, %v664, %v925
          %v1017 = vsel %vm546, %v665, %v927
          %v1018 = vsel %vm546, %v666, %v929
          %v1019 = vsel %vm546, %v667, %v931
          %v1020 = vsel %vm546, %v668, %v933
          %v1021 = vsel %vm546, %v669, %v935
          %v1022 = vsel %vm546, %v670, %v937
          %v1023 = vsel %vm546, %v671, %v939
          %v1024 = vsel %vm546, %v672, %v941
          %v1025 = vsel %vm546, %v673, %v943
          %v1026 = vsel %vm546, %v674, %v945
          %v1027 = vsel %vm546, %v675, %v947
          %v1028 = vpack.c.bf16 %v965, %v964
          %v1029 = vpack.c.bf16 %v981, %v980
          %v1030 = vpack.c.bf16 %v997, %v996
          %v1031 = vpack.c.bf16 %v1013, %v1012
          %v1032 = vpack.c.bf16 %v693, %v692
          %v1033 = vpack.c.bf16 %v967, %v966
          %v1034 = vpack.c.bf16 %v983, %v982
          %v1035 = vpack.c.bf16 %v999, %v998
          %v1036 = vpack.c.bf16 %v1015, %v1014
          %v1037 = vpack.c.bf16 %v695, %v694
          %v1038 = vpack.c.bf16 %v969, %v968
          %v1039 = vpack.c.bf16 %v985, %v984
          %v1040 = vpack.c.bf16 %v1001, %v1000
          %v1041 = vpack.c.bf16 %v1017, %v1016
          %v1042 = vpack.c.bf16 %v697, %v696
          %v1043 = vpack.c.bf16 %v971, %v970
          %v1044 = vpack.c.bf16 %v987, %v986
          %v1045 = vpack.c.bf16 %v1003, %v1002
          %v1046 = vpack.c.bf16 %v1019, %v1018
          %v1047 = vpack.c.bf16 %v699, %v698
          %v1048 = vpack.c.bf16 %v973, %v972
          %v1049 = vpack.c.bf16 %v989, %v988
          %v1050 = vpack.c.bf16 %v1005, %v1004
          %v1051 = vpack.c.bf16 %v1021, %v1020
          %v1052 = vpack.c.bf16 %v701, %v700
          %v1053 = vpack.c.bf16 %v975, %v974
          %v1054 = vpack.c.bf16 %v991, %v990
          %v1055 = vpack.c.bf16 %v1007, %v1006
          %v1056 = vpack.c.bf16 %v1023, %v1022
          %v1057 = vpack.c.bf16 %v703, %v702
          %v1058 = vpack.c.bf16 %v977, %v976
          %v1059 = vpack.c.bf16 %v993, %v992
          %v1060 = vpack.c.bf16 %v1009, %v1008
          %v1061 = vpack.c.bf16 %v1025, %v1024
          %v1062 = vpack.c.bf16 %v705, %v704
          %v1063 = vpack.c.bf16 %v979, %v978
          %v1064 = vpack.c.bf16 %v995, %v994
          %v1065 = vpack.c.bf16 %v1011, %v1010
          %v1066 = vpack.c.bf16 %v1027, %v1026
          %v1067 = vpack.c.bf16 %v707, %v706
          %v1068 = vld [vmem:[#allocation2] sm:$0xff]
          %v1069 = vld [vmem:[#allocation2 + $0x8] sm:$0xff]
          %v1070 = vld [vmem:[#allocation2 + $0x10] sm:$0xff]
          %v1071 = vld [vmem:[#allocation2 + $0x18] sm:$0xff]
          %v1072 = vld [vmem:[#allocation2 + $0x20] sm:$0xff]
          %v1073 = vld [vmem:[#allocation2 + $0x28] sm:$0xff]
          %v1074 = vld [vmem:[#allocation2 + $0x30] sm:$0xff]
          %v1075 = vld [vmem:[#allocation2 + $0x38] sm:$0xff]
          %v1076 = vld [vmem:[#allocation2 + $0x40] sm:$0xff]
          %v1077 = vld [vmem:[#allocation2 + $0x48] sm:$0xff]
          %v1078 = vld [vmem:[#allocation2 + $0x50] sm:$0xff]
          %v1079 = vld [vmem:[#allocation2 + $0x58] sm:$0xff]
          %v1080 = vld [vmem:[#allocation2 + $0x60] sm:$0xff]
          %v1081 = vld [vmem:[#allocation2 + $0x68] sm:$0xff]
          %v1082 = vld [vmem:[#allocation2 + $0x70] sm:$0xff]
          %v1083 = vld [vmem:[#allocation2 + $0x78] sm:$0xff]
          %s1084 = smul.u32 %s27, 72
          %s1085 = smul.addr %s1084, 4
          %s1086 = scalar_lea.vmem %s3, %s1085
          %v1087 = vld [vmem:[%s1086] sm:$0xf]
          %v1088 = vld [vmem:[%s1086 + $0x4] sm:$0xf]
          %v1089 = vld [vmem:[%s1086 + $0x8] sm:$0xf]
          %v1090 = vld [vmem:[%s1086 + $0xc] sm:$0xf]
          %v1091 = vld [vmem:[%s1086 + $0x10] sm:$0xf]
          %v1092 = vld [vmem:[%s1086 + $0x14] sm:$0xf]
          %v1093 = vld [vmem:[%s1086 + $0x18] sm:$0xf]
          %v1094 = vld [vmem:[%s1086 + $0x1c] sm:$0xf]
          %v1095 = vld [vmem:[%s1086 + $0x20] sm:$0xf]
          %v1096 = vld [vmem:[%s1086 + $0x24] sm:$0xf]
          %v1097 = vld [vmem:[%s1086 + $0x28] sm:$0xf]
          %v1098 = vld [vmem:[%s1086 + $0x2c] sm:$0xf]
          %v1099 = vld [vmem:[%s1086 + $0x30] sm:$0xf]
          %v1100 = vld [vmem:[%s1086 + $0x34] sm:$0xf]
          %v1101 = vld [vmem:[%s1086 + $0x38] sm:$0xf]
          %v1102 = vld [vmem:[%s1086 + $0x3c] sm:$0xf]
          %v1103 = vld [vmem:[%s1086 + $0x40] sm:$0xf]
          %v1104 = vld [vmem:[%s1086 + $0x44] sm:$0xf]
          %v1105 = vld [vmem:[%s1086 + $0x48] sm:$0xf]
          %v1106 = vld [vmem:[%s1086 + $0x4c] sm:$0xf]
          %v1107 = vld [vmem:[%s1086 + $0x50] sm:$0xf]
          %v1108 = vld [vmem:[%s1086 + $0x54] sm:$0xf]
          %v1109 = vld [vmem:[%s1086 + $0x58] sm:$0xf]
          %v1110 = vld [vmem:[%s1086 + $0x5c] sm:$0xf]
          %v1111 = vld [vmem:[%s1086 + $0x60] sm:$0xf]
          %v1112 = vld [vmem:[%s1086 + $0x64] sm:$0xf]
          %v1113 = vld [vmem:[%s1086 + $0x68] sm:$0xf]
          %v1114 = vld [vmem:[%s1086 + $0x6c] sm:$0xf]
          %v1115 = vld [vmem:[%s1086 + $0x70] sm:$0xf]
          %v1116 = vld [vmem:[%s1086 + $0x74] sm:$0xf]
          %v1117 = vld [vmem:[%s1086 + $0x78] sm:$0xf]
          %v1118 = vld [vmem:[%s1086 + $0x7c] sm:$0xf]
          %v1119 = vld [vmem:[%s1086 + $0x80] sm:$0xf]
          %v1120 = vld [vmem:[%s1086 + $0x84] sm:$0xf]
          %v1121 = vld [vmem:[%s1086 + $0x88] sm:$0xf]
          %v1122 = vld [vmem:[%s1086 + $0x8c] sm:$0xf]
          %v1123 = vld [vmem:[%s1086 + $0x90] sm:$0xf]
          %v1124 = vld [vmem:[%s1086 + $0x94] sm:$0xf]
          %v1125 = vld [vmem:[%s1086 + $0x98] sm:$0xf]
          %v1126 = vld [vmem:[%s1086 + $0x9c] sm:$0xf]
          %v1127 = vld [vmem:[%s1086 + $0xa0] sm:$0xf]
          %v1128 = vld [vmem:[%s1086 + $0xa4] sm:$0xf]
          %v1129 = vld [vmem:[%s1086 + $0xa8] sm:$0xf]
          %v1130 = vld [vmem:[%s1086 + $0xac] sm:$0xf]
          %v1131 = vld [vmem:[%s1086 + $0xb0] sm:$0xf]
          %v1132 = vld [vmem:[%s1086 + $0xb4] sm:$0xf]
          %v1133 = vld [vmem:[%s1086 + $0xb8] sm:$0xf]
          %v1134 = vld [vmem:[%s1086 + $0xbc] sm:$0xf]
          %v1135 = vld [vmem:[%s1086 + $0xc0] sm:$0xf]
          %v1136 = vld [vmem:[%s1086 + $0xc4] sm:$0xf]
          %v1137 = vld [vmem:[%s1086 + $0xc8] sm:$0xf]
          %v1138 = vld [vmem:[%s1086 + $0xcc] sm:$0xf]
          %v1139 = vld [vmem:[%s1086 + $0xd0] sm:$0xf]
          %v1140 = vld [vmem:[%s1086 + $0xd4] sm:$0xf]
          %v1141 = vld [vmem:[%s1086 + $0xd8] sm:$0xf]
          %v1142 = vld [vmem:[%s1086 + $0xdc] sm:$0xf]
          %v1143 = vld [vmem:[%s1086 + $0xe0] sm:$0xf]
          %v1144 = vld [vmem:[%s1086 + $0xe4] sm:$0xf]
          %v1145 = vld [vmem:[%s1086 + $0xe8] sm:$0xf]
          %v1146 = vld [vmem:[%s1086 + $0xec] sm:$0xf]
          %v1147 = vld [vmem:[%s1086 + $0xf0] sm:$0xf]
          %v1148 = vld [vmem:[%s1086 + $0xf4] sm:$0xf]
          %v1149 = vld [vmem:[%s1086 + $0xf8] sm:$0xf]
          %v1150 = vld [vmem:[%s1086 + $0xfc] sm:$0xf]
          %v1151 = vld [vmem:[%s1086 + $0x100] sm:$0xf]
          %v1152 = vld [vmem:[%s1086 + $0x104] sm:$0xf]
          %v1153 = vld [vmem:[%s1086 + $0x108] sm:$0xf]
          %v1154 = vld [vmem:[%s1086 + $0x10c] sm:$0xf]
          %v1155 = vld [vmem:[%s1086 + $0x110] sm:$0xf]
          %v1156 = vld [vmem:[%s1086 + $0x114] sm:$0xf]
          %v1157 = vld [vmem:[%s1086 + $0x118] sm:$0xf]
          %v1158 = vld [vmem:[%s1086 + $0x11c] sm:$0xf]
          %v1231 = vunpack.c.l.b16 %v1087
          %v1232 = vunpack.c.l.b16 %v1088
          %v1233 = vunpack.c.l.b16 %v1089
          %v1234 = vunpack.c.l.b16 %v1090
          %v1235 = vunpack.c.l.b16 %v1091
          %v1236 = vunpack.c.l.b16 %v1092
          %v1237 = vunpack.c.l.b16 %v1093
          %v1238 = vunpack.c.l.b16 %v1094
          %v1239 = vunpack.c.l.b16 %v1095
          %v1240 = vunpack.c.l.b16 %v1096
          %v1241 = vunpack.c.l.b16 %v1097
          %v1242 = vunpack.c.l.b16 %v1098
          %v1243 = vunpack.c.l.b16 %v1099
          %v1244 = vunpack.c.l.b16 %v1100
          %v1245 = vunpack.c.l.b16 %v1101
          %v1246 = vunpack.c.l.b16 %v1102
          %v1247 = vunpack.c.l.b16 %v1103
          %v1248 = vunpack.c.l.b16 %v1104
          %v1249 = vunpack.c.l.b16 %v1105
          %v1250 = vunpack.c.l.b16 %v1106
          %v1251 = vunpack.c.l.b16 %v1107
          %v1252 = vunpack.c.l.b16 %v1108
          %v1253 = vunpack.c.l.b16 %v1109
          %v1254 = vunpack.c.l.b16 %v1110
          %v1255 = vunpack.c.l.b16 %v1111
          %v1256 = vunpack.c.l.b16 %v1112
          %v1257 = vunpack.c.l.b16 %v1113
          %v1258 = vunpack.c.l.b16 %v1114
          %v1259 = vunpack.c.l.b16 %v1115
          %v1260 = vunpack.c.l.b16 %v1116
          %v1261 = vunpack.c.l.b16 %v1117
          %v1262 = vunpack.c.l.b16 %v1118
          %v1263 = vunpack.c.l.b16 %v1119
          %v1264 = vunpack.c.l.b16 %v1120
          %v1265 = vunpack.c.l.b16 %v1121
          %v1266 = vunpack.c.l.b16 %v1122
          %v1267 = vunpack.c.l.b16 %v1123
          %v1268 = vunpack.c.l.b16 %v1124
          %v1269 = vunpack.c.l.b16 %v1125
          %v1270 = vunpack.c.l.b16 %v1126
          %v1271 = vunpack.c.l.b16 %v1127
          %v1272 = vunpack.c.l.b16 %v1128
          %v1273 = vunpack.c.l.b16 %v1129
          %v1274 = vunpack.c.l.b16 %v1130
          %v1275 = vunpack.c.l.b16 %v1131
          %v1276 = vunpack.c.l.b16 %v1132
          %v1277 = vunpack.c.l.b16 %v1133
          %v1278 = vunpack.c.l.b16 %v1134
          %v1279 = vunpack.c.l.b16 %v1135
          %v1280 = vunpack.c.l.b16 %v1136
          %v1281 = vunpack.c.l.b16 %v1137
          %v1282 = vunpack.c.l.b16 %v1138
          %v1283 = vunpack.c.l.b16 %v1139
          %v1284 = vunpack.c.l.b16 %v1140
          %v1285 = vunpack.c.l.b16 %v1141
          %v1286 = vunpack.c.l.b16 %v1142
          %v1287 = vunpack.c.l.b16 %v1143
          %v1288 = vunpack.c.l.b16 %v1144
          %v1289 = vunpack.c.l.b16 %v1145
          %v1290 = vunpack.c.l.b16 %v1146
          %v1291 = vunpack.c.l.b16 %v1147
          %v1292 = vunpack.c.l.b16 %v1148
          %v1293 = vunpack.c.l.b16 %v1149
          %v1294 = vunpack.c.l.b16 %v1150
          %v1295 = vunpack.c.l.b16 %v1151
          %v1296 = vunpack.c.l.b16 %v1152
          %v1297 = vunpack.c.l.b16 %v1153
          %v1298 = vunpack.c.l.b16 %v1154
          %v1299 = vunpack.c.l.b16 %v1155
          %v1300 = vunpack.c.l.b16 %v1156
          %v1301 = vunpack.c.l.b16 %v1157
          %v1302 = vunpack.c.l.b16 %v1158
          %v1303 = vpack.c.b16 %v1232, %v1231
          %v1304 = vpack.c.b16 %v1234, %v1233
          %v1305 = vpack.c.b16 %v1236, %v1235
          %v1306 = vpack.c.b16 %v1238, %v1237
          %v1307 = vpack.c.b16 %v1240, %v1239
          %v1308 = vpack.c.b16 %v1242, %v1241
          %v1309 = vpack.c.b16 %v1244, %v1243
          %v1310 = vpack.c.b16 %v1246, %v1245
          %v1311 = vpack.c.b16 %v1248, %v1247
          %v1312 = vpack.c.b16 %v1250, %v1249
          %v1313 = vpack.c.b16 %v1252, %v1251
          %v1314 = vpack.c.b16 %v1254, %v1253
          %v1315 = vpack.c.b16 %v1256, %v1255
          %v1316 = vpack.c.b16 %v1258, %v1257
          %v1317 = vpack.c.b16 %v1260, %v1259
          %v1318 = vpack.c.b16 %v1262, %v1261
          %v1319 = vpack.c.b16 %v1264, %v1263
          %v1320 = vpack.c.b16 %v1266, %v1265
          %v1321 = vpack.c.b16 %v1268, %v1267
          %v1322 = vpack.c.b16 %v1270, %v1269
          %v1323 = vpack.c.b16 %v1272, %v1271
          %v1324 = vpack.c.b16 %v1274, %v1273
          %v1325 = vpack.c.b16 %v1276, %v1275
          %v1326 = vpack.c.b16 %v1278, %v1277
          %v1327 = vpack.c.b16 %v1280, %v1279
          %v1328 = vpack.c.b16 %v1282, %v1281
          %v1329 = vpack.c.b16 %v1284, %v1283
          %v1330 = vpack.c.b16 %v1286, %v1285
          %v1331 = vpack.c.b16 %v1288, %v1287
          %v1332 = vpack.c.b16 %v1290, %v1289
          %v1333 = vpack.c.b16 %v1292, %v1291
          %v1334 = vpack.c.b16 %v1294, %v1293
          %v1335 = vpack.c.b16 %v1296, %v1295
          %v1336 = vpack.c.b16 %v1298, %v1297
          %v1337 = vpack.c.b16 %v1300, %v1299
          %v1338 = vpack.c.b16 %v1302, %v1301
          %v1376 = vsel %vm546, %v1032, 0
          %v1379 = vsel %vm546, %v1037, 0
          %v1382 = vsel %vm546, %v1042, 0
          %v1385 = vsel %vm546, %v1047, 0
          %v1388 = vsel %vm546, %v1052, 0
          %v1391 = vsel %vm546, %v1057, 0
          %v1394 = vsel %vm546, %v1062, 0
          %v1397 = vsel %vm546, %v1067, 0
          %1399 = vmatprep.subr.bf16.mxu0 0
          %1400 = vmatpush1.bf16.msra.mxu0 %v1303
          %1401 = vmatprep.subr.bf16.mxu0 0
          %1402 = vmatpush1.bf16.msra.mxu0 %v1304
          %1403 = vmatprep.subr.bf16.mxu0 0
          %1404 = vmatpush1.bf16.msra.mxu0 %v1305
          %1405 = vmatprep.subr.bf16.mxu0 0
          %1406 = vmatpush1.bf16.msra.mxu0 %v1306
          %1407 = vmatprep.subr.bf16.mxu0 0
          %1408 = vmatpush1.bf16.msra.mxu0 %v1307
          %1409 = vmatprep.subr.bf16.mxu0 0
          %1410 = vmatpush1.bf16.msra.mxu0 %v1308
          %1411 = vmatprep.subr.bf16.mxu0 0
          %1412 = vmatpush1.bf16.msra.mxu0 %v1309
          %1413 = vmatprep.subr.bf16.mxu0 0
          %1414 = vmatpush1.bf16.msra.mxu0 %v1310
          %1415 = vmatprep.subr.bf16.mxu0 0
          %1416 = vmatpush1.bf16.msra.mxu0 %v1311
          %1417 = vmatprep.subr.bf16.mxu0 0
          %1418 = vmatpush1.bf16.msra.mxu0 %v1312
          %1419 = vmatprep.subr.bf16.mxu0 0
          %1420 = vmatpush1.bf16.msra.mxu0 %v1313
          %1421 = vmatprep.subr.bf16.mxu0 0
          %1422 = vmatpush1.bf16.msra.mxu0 %v1314
          %1423 = vmatprep.subr.bf16.mxu0 0
          %1424 = vmatpush1.bf16.msra.mxu0 %v1315
          %1425 = vmatprep.subr.bf16.mxu0 0
          %1426 = vmatpush1.bf16.msra.mxu0 %v1316
          %1427 = vmatprep.subr.bf16.mxu0 0
          %1428 = vmatpush1.bf16.msra.mxu0 %v1317
          %1429 = vmatprep.subr.bf16.mxu0 0
          %1430 = vmatpush1.bf16.msra.mxu0 %v1318
          %1431 = vmatprep.mubr.bf16.mxu0 %v1029
          %1432 = vmatmul.mubr.bf16.gmra.mrb[0].mxu0 %v1028
          %v1433 = vpop.f32.mrb[0].mxu0
          %v1434 = vadd.f32 0.0, %v1433
          %v1435 = vpop.f32.mrb[0].mxu0
          %v1436 = vpop.f32.mrb[0].mxu0
          %v1437 = vadd.f32 0.0, %v1436
          %v1438 = vpop.f32.mrb[0].mxu0
          %1439 = vmatprep.mubr.bf16.mxu0 %v1034
          %1440 = vmatmul.mubr.bf16.gmra.mrb[0].mxu0 %v1033
          %v1441 = vpop.f32.mrb[0].mxu0
          %v1442 = vadd.f32 0.0, %v1441
          %v1443 = vpop.f32.mrb[0].mxu0
          %v1444 = vpop.f32.mrb[0].mxu0
          %v1445 = vadd.f32 0.0, %v1444
          %v1446 = vpop.f32.mrb[0].mxu0
          %1447 = vmatprep.mubr.bf16.mxu0 %v1039
          %1448 = vmatmul.mubr.bf16.gmra.mrb[0].mxu0 %v1038
          %v1449 = vpop.f32.mrb[0].mxu0
          %v1450 = vadd.f32 0.0, %v1449
          %v1451 = vpop.f32.mrb[0].mxu0
          %v1452 = vpop.f32.mrb[0].mxu0
          %v1453 = vadd.f32 0.0, %v1452
          %v1454 = vpop.f32.mrb[0].mxu0
          %1455 = vmatprep.mubr.bf16.mxu0 %v1044
          %1456 = vmatmul.mubr.bf16.gmra.mrb[0].mxu0 %v1043
          %v1457 = vpop.f32.mrb[0].mxu0
          %v1458 = vadd.f32 0.0, %v1457
          %v1459 = vpop.f32.mrb[0].mxu0
          %v1460 = vpop.f32.mrb[0].mxu0
          %v1461 = vadd.f32 0.0, %v1460
          %v1462 = vpop.f32.mrb[0].mxu0
          %1463 = vmatprep.mubr.bf16.mxu0 %v1049
          %1464 = vmatmul.mubr.bf16.gmra.mrb[0].mxu0 %v1048
          %v1465 = vpop.f32.mrb[0].mxu0
          %v1466 = vadd.f32 0.0, %v1465
          %v1467 = vpop.f32.mrb[0].mxu0
          %v1468 = vpop.f32.mrb[0].mxu0
          %v1469 = vadd.f32 0.0, %v1468
          %v1470 = vpop.f32.mrb[0].mxu0
          %1471 = vmatprep.mubr.bf16.mxu0 %v1054
          %1472 = vmatmul.mubr.bf16.gmra.mrb[0].mxu0 %v1053
          %v1473 = vpop.f32.mrb[0].mxu0
          %v1474 = vadd.f32 0.0, %v1473
          %v1475 = vpop.f32.mrb[0].mxu0
          %v1476 = vpop.f32.mrb[0].mxu0
          %v1477 = vadd.f32 0.0, %v1476
          %v1478 = vpop.f32.mrb[0].mxu0
          %1479 = vmatprep.mubr.bf16.mxu0 %v1059
          %1480 = vmatmul.mubr.bf16.gmra.mrb[0].mxu0 %v1058
          %v1481 = vpop.f32.mrb[0].mxu0
          %v1482 = vadd.f32 0.0, %v1481
          %v1483 = vpop.f32.mrb[0].mxu0
          %v1484 = vpop.f32.mrb[0].mxu0
          %v1485 = vadd.f32 0.0, %v1484
          %v1486 = vpop.f32.mrb[0].mxu0
          %1487 = vmatprep.mubr.bf16.mxu0 %v1064
          %1488 = vmatmul.mubr.bf16.gmra.mrb[0].mxu0 %v1063
          %v1489 = vpop.f32.mrb[0].mxu0
          %v1490 = vadd.f32 0.0, %v1489
          %v1491 = vpop.f32.mrb[0].mxu0
          %v1492 = vpop.f32.mrb[0].mxu0
          %v1493 = vadd.f32 0.0, %v1492
          %v1494 = vpop.f32.mrb[0].mxu0
          %1495 = vdwg.mxu0
          %1496 = vmatprep.subr.bf16.mxu0 0
          %1497 = vmatpush1.bf16.msra.mxu0 %v1319
          %1498 = vmatprep.subr.bf16.mxu0 0
          %1499 = vmatpush1.bf16.msra.mxu0 %v1320
          %1500 = vmatprep.subr.bf16.mxu0 0
          %1501 = vmatpush1.bf16.msra.mxu0 %v1321
          %1502 = vmatprep.subr.bf16.mxu0 0
          %1503 = vmatpush1.bf16.msra.mxu0 %v1322
          %1504 = vmatprep.subr.bf16.mxu0 0
          %1505 = vmatpush1.bf16.msra.mxu0 %v1323
          %1506 = vmatprep.subr.bf16.mxu0 0
          %1507 = vmatpush1.bf16.msra.mxu0 %v1324
          %1508 = vmatprep.subr.bf16.mxu0 0
          %1509 = vmatpush1.bf16.msra.mxu0 %v1325
          %1510 = vmatprep.subr.bf16.mxu0 0
          %1511 = vmatpush1.bf16.msra.mxu0 %v1326
          %1512 = vmatprep.subr.bf16.mxu0 0
          %1513 = vmatpush1.bf16.msra.mxu0 %v1327
          %1514 = vmatprep.subr.bf16.mxu0 0
          %1515 = vmatpush1.bf16.msra.mxu0 %v1328
          %1516 = vmatprep.subr.bf16.mxu0 0
          %1517 = vmatpush1.bf16.msra.mxu0 %v1329
          %1518 = vmatprep.subr.bf16.mxu0 0
          %1519 = vmatpush1.bf16.msra.mxu0 %v1330
          %1520 = vmatprep.subr.bf16.mxu0 0
          %1521 = vmatpush1.bf16.msra.mxu0 %v1331
          %1522 = vmatprep.subr.bf16.mxu0 0
          %1523 = vmatpush1.bf16.msra.mxu0 %v1332
          %1524 = vmatprep.subr.bf16.mxu0 0
          %1525 = vmatpush1.bf16.msra.mxu0 %v1333
          %1526 = vmatprep.subr.bf16.mxu0 0
          %1527 = vmatpush1.bf16.msra.mxu0 %v1334
          %1528 = vmatprep.mubr.bf16.mxu0 %v1031
          %1529 = vmatmul.mubr.bf16.gmra.mrb[0].mxu0 %v1030
          %v1530 = vpop.f32.mrb[0].mxu0
          %v1531 = vadd.f32 %v1434, %v1530
          %v1532 = vpop.f32.mrb[0].mxu0
          %v1533 = vpop.f32.mrb[0].mxu0
          %v1534 = vadd.f32 %v1437, %v1533
          %v1535 = vpop.f32.mrb[0].mxu0
          %1536 = vmatprep.mubr.bf16.mxu0 %v1036
          %1537 = vmatmul.mubr.bf16.gmra.mrb[0].mxu0 %v1035
          %v1538 = vpop.f32.mrb[0].mxu0
          %v1539 = vadd.f32 %v1442, %v1538
          %v1540 = vpop.f32.mrb[0].mxu0
          %v1541 = vpop.f32.mrb[0].mxu0
          %v1542 = vadd.f32 %v1445, %v1541
          %v1543 = vpop.f32.mrb[0].mxu0
          %1544 = vmatprep.mubr.bf16.mxu0 %v1041
          %1545 = vmatmul.mubr.bf16.gmra.mrb[0].mxu0 %v1040
          %v1546 = vpop.f32.mrb[0].mxu0
          %v1547 = vadd.f32 %v1450, %v1546
          %v1548 = vpop.f32.mrb[0].mxu0
          %v1549 = vpop.f32.mrb[0].mxu0
          %v1550 = vadd.f32 %v1453, %v1549
          %v1551 = vpop.f32.mrb[0].mxu0
          %1552 = vmatprep.mubr.bf16.mxu0 %v1046
          %1553 = vmatmul.mubr.bf16.gmra.mrb[0].mxu0 %v1045
          %v1554 = vpop.f32.mrb[0].mxu0
          %v1555 = vadd.f32 %v1458, %v1554
          %v1556 = vpop.f32.mrb[0].mxu0
          %v1557 = vpop.f32.mrb[0].mxu0
          %v1558 = vadd.f32 %v1461, %v1557
          %v1559 = vpop.f32.mrb[0].mxu0
          %1560 = vmatprep.mubr.bf16.mxu0 %v1051
          %1561 = vmatmul.mubr.bf16.gmra.mrb[0].mxu0 %v1050
          %v1562 = vpop.f32.mrb[0].mxu0
          %v1563 = vadd.f32 %v1466, %v1562
          %v1564 = vpop.f32.mrb[0].mxu0
          %v1565 = vpop.f32.mrb[0].mxu0
          %v1566 = vadd.f32 %v1469, %v1565
          %v1567 = vpop.f32.mrb[0].mxu0
          %1568 = vmatprep.mubr.bf16.mxu0 %v1056
          %1569 = vmatmul.mubr.bf16.gmra.mrb[0].mxu0 %v1055
          %v1570 = vpop.f32.mrb[0].mxu0
          %v1571 = vadd.f32 %v1474, %v1570
          %v1572 = vpop.f32.mrb[0].mxu0
          %v1573 = vpop.f32.mrb[0].mxu0
          %v1574 = vadd.f32 %v1477, %v1573
          %v1575 = vpop.f32.mrb[0].mxu0
          %1576 = vmatprep.mubr.bf16.mxu0 %v1061
          %1577 = vmatmul.mubr.bf16.gmra.mrb[0].mxu0 %v1060
          %v1578 = vpop.f32.mrb[0].mxu0
          %v1579 = vadd.f32 %v1482, %v1578
          %v1580 = vpop.f32.mrb[0].mxu0
          %v1581 = vpop.f32.mrb[0].mxu0
          %v1582 = vadd.f32 %v1485, %v1581
          %v1583 = vpop.f32.mrb[0].mxu0
          %1584 = vmatprep.mubr.bf16.mxu0 %v1066
          %1585 = vmatmul.mubr.bf16.gmra.mrb[0].mxu0 %v1065
          %v1586 = vpop.f32.mrb[0].mxu0
          %v1587 = vadd.f32 %v1490, %v1586
          %v1588 = vpop.f32.mrb[0].mxu0
          %v1589 = vpop.f32.mrb[0].mxu0
          %v1590 = vadd.f32 %v1493, %v1589
          %v1591 = vpop.f32.mrb[0].mxu0
          %1592 = vdwg.mxu0
          %1593 = vmatprep.subr.bf16.mxu0 0
          %1594 = vmatpush1.bf16.msra.mxu0 %v1335
          %1595 = vmatprep.subr.bf16.mxu0 0
          %1596 = vmatpush1.bf16.msra.mxu0 %v1336
          %1597 = vmatprep.subr.bf16.mxu0 0
          %1598 = vmatpush1.bf16.msra.mxu0 %v1337
          %1599 = vmatprep.subr.bf16.mxu0 0
          %1600 = vmatpush1.bf16.msra.mxu0 %v1338
          %1601 = vmatprep.subr.bf16.mxu0 0
          %1602 = vmatpush1.bf16.msra.mxu0 0
          %1603 = vmatprep.subr.bf16.mxu0 0
          %1604 = vmatpush1.bf16.msra.mxu0 0
          %1605 = vmatprep.subr.bf16.mxu0 0
          %1606 = vmatpush1.bf16.msra.mxu0 0
          %1607 = vmatprep.subr.bf16.mxu0 0
          %1608 = vmatpush1.bf16.msra.mxu0 0
          %1609 = vmatprep.subr.bf16.mxu0 0
          %1610 = vmatpush1.bf16.msra.mxu0 0
          %1611 = vmatprep.subr.bf16.mxu0 0
          %1612 = vmatpush1.bf16.msra.mxu0 0
          %1613 = vmatprep.subr.bf16.mxu0 0
          %1614 = vmatpush1.bf16.msra.mxu0 0
          %1615 = vmatprep.subr.bf16.mxu0 0
          %1616 = vmatpush1.bf16.msra.mxu0 0
          %1617 = vmatprep.subr.bf16.mxu0 0
          %1618 = vmatpush1.bf16.msra.mxu0 0
          %1619 = vmatprep.subr.bf16.mxu0 0
          %1620 = vmatpush1.bf16.msra.mxu0 0
          %1621 = vmatprep.subr.bf16.mxu0 0
          %1622 = vmatpush1.bf16.msra.mxu0 0
          %1623 = vmatprep.subr.bf16.mxu0 0
          %1624 = vmatpush1.bf16.msra.mxu0 0
          %1625 = vmatprep.mubr.bf16.mxu0 0
          %1626 = vmatmul.mubr.bf16.gmra.mrb[0].mxu0 %v1376
          %v1627 = vpop.f32.mrb[0].mxu0
          %v1628 = vadd.f32 %v1531, %v1627
          %v1629 = vpop.f32.mrb[0].mxu0
          %v1630 = vpop.f32.mrb[0].mxu0
          %v1631 = vadd.f32 %v1534, %v1630
          %v1632 = vpop.f32.mrb[0].mxu0
          %1633 = vmatprep.mubr.bf16.mxu0 0
          %1634 = vmatmul.mubr.bf16.gmra.mrb[0].mxu0 %v1379
          %v1635 = vpop.f32.mrb[0].mxu0
          %v1636 = vadd.f32 %v1539, %v1635
          %v1637 = vpop.f32.mrb[0].mxu0
          %v1638 = vpop.f32.mrb[0].mxu0
          %v1639 = vadd.f32 %v1542, %v1638
          %v1640 = vpop.f32.mrb[0].mxu0
          %1641 = vmatprep.mubr.bf16.mxu0 0
          %1642 = vmatmul.mubr.bf16.gmra.mrb[0].mxu0 %v1382
          %v1643 = vpop.f32.mrb[0].mxu0
          %v1644 = vadd.f32 %v1547, %v1643
          %v1645 = vpop.f32.mrb[0].mxu0
          %v1646 = vpop.f32.mrb[0].mxu0
          %v1647 = vadd.f32 %v1550, %v1646
          %v1648 = vpop.f32.mrb[0].mxu0
          %1649 = vmatprep.mubr.bf16.mxu0 0
          %1650 = vmatmul.mubr.bf16.gmra.mrb[0].mxu0 %v1385
          %v1651 = vpop.f32.mrb[0].mxu0
          %v1652 = vadd.f32 %v1555, %v1651
          %v1653 = vpop.f32.mrb[0].mxu0
          %v1654 = vpop.f32.mrb[0].mxu0
          %v1655 = vadd.f32 %v1558, %v1654
          %v1656 = vpop.f32.mrb[0].mxu0
          %1657 = vmatprep.mubr.bf16.mxu0 0
          %1658 = vmatmul.mubr.bf16.gmra.mrb[0].mxu0 %v1388
          %v1659 = vpop.f32.mrb[0].mxu0
          %v1660 = vadd.f32 %v1563, %v1659
          %v1661 = vpop.f32.mrb[0].mxu0
          %v1662 = vpop.f32.mrb[0].mxu0
          %v1663 = vadd.f32 %v1566, %v1662
          %v1664 = vpop.f32.mrb[0].mxu0
          %1665 = vmatprep.mubr.bf16.mxu0 0
          %1666 = vmatmul.mubr.bf16.gmra.mrb[0].mxu0 %v1391
          %v1667 = vpop.f32.mrb[0].mxu0
          %v1668 = vadd.f32 %v1571, %v1667
          %v1669 = vpop.f32.mrb[0].mxu0
          %v1670 = vpop.f32.mrb[0].mxu0
          %v1671 = vadd.f32 %v1574, %v1670
          %v1672 = vpop.f32.mrb[0].mxu0
          %1673 = vmatprep.mubr.bf16.mxu0 0
          %1674 = vmatmul.mubr.bf16.gmra.mrb[0].mxu0 %v1394
          %v1675 = vpop.f32.mrb[0].mxu0
          %v1676 = vadd.f32 %v1579, %v1675
          %v1677 = vpop.f32.mrb[0].mxu0
          %v1678 = vpop.f32.mrb[0].mxu0
          %v1679 = vadd.f32 %v1582, %v1678
          %v1680 = vpop.f32.mrb[0].mxu0
          %1681 = vmatprep.mubr.bf16.mxu0 0
          %1682 = vmatmul.mubr.bf16.gmra.mrb[0].mxu0 %v1397
          %v1683 = vpop.f32.mrb[0].mxu0
          %v1684 = vadd.f32 %v1587, %v1683
          %v1685 = vpop.f32.mrb[0].mxu0
          %v1686 = vpop.f32.mrb[0].mxu0
          %v1687 = vadd.f32 %v1590, %v1686
          %v1688 = vpop.f32.mrb[0].mxu0
          %1689 = vdwg.mxu0
          %v1690 = vadd.f32 %v1068, %v1628
          %v1691 = vadd.f32 %v1069, %v1631
          %v1692 = vadd.f32 %v1070, %v1636
          %v1693 = vadd.f32 %v1071, %v1639
          %v1694 = vadd.f32 %v1072, %v1644
          %v1695 = vadd.f32 %v1073, %v1647
          %v1696 = vadd.f32 %v1074, %v1652
          %v1697 = vadd.f32 %v1075, %v1655
          %v1698 = vadd.f32 %v1076, %v1660
          %v1699 = vadd.f32 %v1077, %v1663
          %v1700 = vadd.f32 %v1078, %v1668
          %v1701 = vadd.f32 %v1079, %v1671
          %v1702 = vadd.f32 %v1080, %v1676
          %v1703 = vadd.f32 %v1081, %v1679
          %v1704 = vadd.f32 %v1082, %v1684
          %v1705 = vadd.f32 %v1083, %v1687
          %1706 = vst.msk [vmem:[#allocation2] sm:$0xff] %vm546, %v1690
          %1707 = vst.msk [vmem:[#allocation2 + $0x8] sm:$0xff] %vm546, %v1691
          %1708 = vst.msk [vmem:[#allocation2 + $0x10] sm:$0xff] %vm546, %v1692
          %1709 = vst.msk [vmem:[#allocation2 + $0x18] sm:$0xff] %vm546, %v1693
          %1710 = vst.msk [vmem:[#allocation2 + $0x20] sm:$0xff] %vm546, %v1694
          %1711 = vst.msk [vmem:[#allocation2 + $0x28] sm:$0xff] %vm546, %v1695
          %1712 = vst.msk [vmem:[#allocation2 + $0x30] sm:$0xff] %vm546, %v1696
          %1713 = vst.msk [vmem:[#allocation2 + $0x38] sm:$0xff] %vm546, %v1697
          %1714 = vst.msk [vmem:[#allocation2 + $0x40] sm:$0xff] %vm546, %v1698
          %1715 = vst.msk [vmem:[#allocation2 + $0x48] sm:$0xff] %vm546, %v1699
          %1716 = vst.msk [vmem:[#allocation2 + $0x50] sm:$0xff] %vm546, %v1700
          %1717 = vst.msk [vmem:[#allocation2 + $0x58] sm:$0xff] %vm546, %v1701
          %1718 = vst.msk [vmem:[#allocation2 + $0x60] sm:$0xff] %vm546, %v1702
          %1719 = vst.msk [vmem:[#allocation2 + $0x68] sm:$0xff] %vm546, %v1703
          %1720 = vst.msk [vmem:[#allocation2 + $0x70] sm:$0xff] %vm546, %v1704
          %1721 = vst.msk [vmem:[#allocation2 + $0x78] sm:$0xff] %vm546, %v1705
        $region52: #{voxres_forward.7} parent=43 // pred_fallthru
          _
        %p1722 = scmp.eq.s32.totalorder %s27, 2
        // Predicated region
        $region53: #{voxres_forward.7} parent=43 // pred_check
          %p1723 = pneg %p1722
        $region54: #{voxres_forward.7} parent=43 // pred_check_branch
          %1725 = sbr.rel (%p1723) target = $region56
        $region55: #{voxres_forward.7} parent=43 // pred_region
          %v1726 = vld [vmem:[#allocation2] sm:$0xff]
          %v1727 = vld [vmem:[#allocation2 + $0x8] sm:$0xff]
          %v1728 = vld [vmem:[#allocation2 + $0x10] sm:$0xff]
          %v1729 = vld [vmem:[#allocation2 + $0x18] sm:$0xff]
          %v1730 = vld [vmem:[#allocation2 + $0x20] sm:$0xff]
          %v1731 = vld [vmem:[#allocation2 + $0x28] sm:$0xff]
          %v1732 = vld [vmem:[#allocation2 + $0x30] sm:$0xff]
          %v1733 = vld [vmem:[#allocation2 + $0x38] sm:$0xff]
          %v1734 = vld [vmem:[#allocation2 + $0x40] sm:$0xff]
          %v1735 = vld [vmem:[#allocation2 + $0x48] sm:$0xff]
          %v1736 = vld [vmem:[#allocation2 + $0x50] sm:$0xff]
          %v1737 = vld [vmem:[#allocation2 + $0x58] sm:$0xff]
          %v1738 = vld [vmem:[#allocation2 + $0x60] sm:$0xff]
          %v1739 = vld [vmem:[#allocation2 + $0x68] sm:$0xff]
          %v1740 = vld [vmem:[#allocation2 + $0x70] sm:$0xff]
          %v1741 = vld [vmem:[#allocation2 + $0x78] sm:$0xff]
          %v1742 = vld [vmem:[%s360] sm:$0xff]
          %v1743 = vld [vmem:[%s360 + $0x8] sm:$0xff]
          %v1744 = vld [vmem:[%s360 + $0x10] sm:$0xff]
          %v1745 = vld [vmem:[%s360 + $0x18] sm:$0xff]
          %v1746 = vld [vmem:[%s360 + $0x20] sm:$0xff]
          %v1747 = vld [vmem:[%s360 + $0x28] sm:$0xff]
          %v1748 = vld [vmem:[%s360 + $0x30] sm:$0xff]
          %v1749 = vld [vmem:[%s360 + $0x38] sm:$0xff]
          %v1750 = vld [vmem:[%s360 + $0x40] sm:$0xff]
          %v1751 = vld [vmem:[%s360 + $0x48] sm:$0xff]
          %v1752 = vld [vmem:[%s360 + $0x50] sm:$0xff]
          %v1753 = vld [vmem:[%s360 + $0x58] sm:$0xff]
          %v1754 = vld [vmem:[%s360 + $0x60] sm:$0xff]
          %v1755 = vld [vmem:[%s360 + $0x68] sm:$0xff]
          %v1756 = vld [vmem:[%s360 + $0x70] sm:$0xff]
          %v1757 = vld [vmem:[%s360 + $0x78] sm:$0xff]
          %v1758 = vadd.f32 %v1726, %v1742
          %v1759 = vadd.f32 %v1727, %v1743
          %v1760 = vadd.f32 %v1728, %v1744
          %v1761 = vadd.f32 %v1729, %v1745
          %v1762 = vadd.f32 %v1730, %v1746
          %v1763 = vadd.f32 %v1731, %v1747
          %v1764 = vadd.f32 %v1732, %v1748
          %v1765 = vadd.f32 %v1733, %v1749
          %v1766 = vadd.f32 %v1734, %v1750
          %v1767 = vadd.f32 %v1735, %v1751
          %v1768 = vadd.f32 %v1736, %v1752
          %v1769 = vadd.f32 %v1737, %v1753
          %v1770 = vadd.f32 %v1738, %v1754
          %v1771 = vadd.f32 %v1739, %v1755
          %v1772 = vadd.f32 %v1740, %v1756
          %v1773 = vadd.f32 %v1741, %v1757
          %vm1774 = vcmask 523264
          %1775 = vst.msk [vmem:[%s330] sm:$0xff] %vm1774, %v1758
          %1776 = vst.msk [vmem:[%s330 + $0x8] sm:$0xff] %vm1774, %v1759
          %1777 = vst.msk [vmem:[%s330 + $0x10] sm:$0xff] %vm1774, %v1760
          %1778 = vst.msk [vmem:[%s330 + $0x18] sm:$0xff] %vm1774, %v1761
          %1779 = vst.msk [vmem:[%s330 + $0x20] sm:$0xff] %vm1774, %v1762
          %1780 = vst.msk [vmem:[%s330 + $0x28] sm:$0xff] %vm1774, %v1763
          %1781 = vst.msk [vmem:[%s330 + $0x30] sm:$0xff] %vm1774, %v1764
          %1782 = vst.msk [vmem:[%s330 + $0x38] sm:$0xff] %vm1774, %v1765
          %1783 = vst.msk [vmem:[%s330 + $0x40] sm:$0xff] %vm1774, %v1766
          %1784 = vst.msk [vmem:[%s330 + $0x48] sm:$0xff] %vm1774, %v1767
          %1785 = vst.msk [vmem:[%s330 + $0x50] sm:$0xff] %vm1774, %v1768
          %1786 = vst.msk [vmem:[%s330 + $0x58] sm:$0xff] %vm1774, %v1769
          %1787 = vst.msk [vmem:[%s330 + $0x60] sm:$0xff] %vm1774, %v1770
          %1788 = vst.msk [vmem:[%s330 + $0x68] sm:$0xff] %vm1774, %v1771
          %1789 = vst.msk [vmem:[%s330 + $0x70] sm:$0xff] %vm1774, %v1772
          %1790 = vst.msk [vmem:[%s330 + $0x78] sm:$0xff] %vm1774, %v1773
        $region56: #{voxres_forward.7} parent=43 // pred_fallthru
          _
        %s1791 = sand.u32 %s201, 1
        %s1792 = scalar_lea.sflag [#allocation5], %s1791
        %s1793 = sand.u32 %s201, 1
        %s1794 = smul.addr %s1793, 128
        %s1795 = scalar_lea.vmem [#allocation4], %s1794
        // Predicated region
        $region57: #{voxres_forward.7} parent=43 // pred_check
          %p1796 = pneg %p211
        $region58: #{voxres_forward.7} parent=43 // pred_check_branch
          %1798 = sbr.rel (%p1796) target = $region60
        $region59: #{voxres_forward.7} parent=43 // pred_region
          %s1800 = ssub.s32 2048, 2048
          %1801 = vsyncadd %s1792, %s1800
          %s1802 = smul.addr %s26, 16
          %s1803 = smul.addr %s25, 128
          %s1804 = sadd.s32 %s1802, %s1803
          %s1805 = smul.addr %s1804, 128
          %s1806 = scalar_lea.hbm %s6, %s1805
          %s1807 = sshll.u32 %s1795, 4
          %s1808 = int_to_ptr.vmem [resolvable:$true] %s1807
          %1813 = dma.vmem_to_hbm [thread:$0]  %s1808, 2048, %s1806, %s1792, 128, 128, 8
        $region60: #{voxres_forward.7} parent=43 // pred_fallthru
          _
      $region44: #{voxres_forward.7} parent=5 // pred_fallthru
        _
      %p1814 = scmp.le.s32.totalorder 2, %s15
      // Predicated region
      $region61: #{voxres_forward.7} parent=5 // pred_check
        %p1815 = pneg %p1814
      $region62: #{voxres_forward.7} parent=5 // pred_check_branch
        %1817 = sbr.rel (%p1815) target = $region64
      $region63: #{voxres_forward.7} parent=5 // pred_region
        %s1818 = ssub.s32 %s15, 2
        // Predicated region
        $region65: #{voxres_forward.7} parent=63 // pred_check
          %p1819 = pneg %p217
        $region66: #{voxres_forward.7} parent=63 // pred_check_branch
          %1821 = sbr.rel (%p1819) target = $region68
        $region67: #{voxres_forward.7} parent=63 // pred_region
          %s1822 = sand.u32 %s202, 1
          %s1823 = scalar_lea.sflag [#allocation5], %s1822
          %s1824 = sand.u32 %s202, 1
          %s1825 = smul.addr %s1824, 128
          %s1826 = scalar_lea.vmem [#allocation4], %s1825
          %1827 = dma.done %s1823, 2048
        $region68: #{voxres_forward.7} parent=63 // pred_fallthru
          _
      $region64: #{voxres_forward.7} parent=5 // pred_fallthru
        _
    $region6: #{voxres_forward.7} parent=1 // loop_footer
      %s19 = sadd.s32 1, %s15
    $region7: #{voxres_forward.7} parent=1 // loop_footer_branch
      %14 = sbr.rel target = $region3
    $region8: #{voxres_forward.7} parent=1 // loop_exit
      _
    %1828 = vsyncpa [#allocation5], 1
    %s1829 = scalar_lea.sflag [#allocation5], 1
    %1830 = vsyncpa %s1829, 1

// kernel: voxres_forward.5
$region0: #{voxres_forward.5}
  #allocation0 [shape = 'u32[]', space=smem, size = 0x4, offset = 0x4, fixed_abs, tag = 'smem constant byte address 0x4 - core index']
  #allocation1 [shape = 'u32[144,128]{1,0:T(1,128)}', space=vmem, size = 0x12000, scoped, tag = 'internal scratch']
  #allocation2 [shape = 'f32[128,64]{1,0:T(8,128)}', space=vmem, size = 0x10000, scoped, tag = 'scratch operand']
  #allocation3 [shape = 'f32[18,10,64]{2,1,0:T(8,128)}', space=vmem, size = 0x24000, scoped, tag = 'scratch operand']
  %s0 = inlined_call_operand.vmem [shape: f32[2,8,16,8,64], index: 0, kind: input, shape index: {}]
  %s1 = inlined_call_operand.vmem [shape: f32[1,64], index: 1, kind: input, shape index: {}]
  %s2 = inlined_call_operand.vmem [shape: f32[1,64], index: 2, kind: input, shape index: {}]
  %s3 = inlined_call_operand.vmem [shape: bf16[3,576,64], index: 3, kind: input, shape index: {}]
  %s4 = inlined_call_operand.vmem [shape: f32[1,64], index: 4, kind: input, shape index: {}]
  %s5 = inlined_call_operand.vmem [shape: f32[2,8,128,64], index: 5, kind: output, shape index: {}]
  %s6 = sld [smem:[#allocation0]]
  $region65: #{voxres_forward.5} parent=0
    _
  %s8 = ssub.s32 1, %s6
  %s9 = scalar_select 0, %s8, %s6
  loop: start=0, step=1, limit=50
  $region2: #{voxres_forward.5} parent=0 // loop_pre_header
    _
  $region3: #{voxres_forward.5} parent=0 // loop_header
    %s11 = sphi 0, %s15
    %p12 = scmp.ge.s32.totalorder %s11, 50
    %s18 = sphi 0, %s37
    %s19 = sphi 0, %s33
    %s20 = sphi 0, %s29
    %s21 = sphi 0, %s18
    %s22 = sphi 0, %s19
    %s23 = sphi 0, %s20
    %s24 = sphi 0, %s21
    %s25 = sphi 0, %s22
    %s26 = sphi 0, %s23
    %s54 = sphi 0, %s56
    %s57 = sphi 0, %s54
    %s58 = sphi 0, %s57
    %s74 = sphi 0, %s58
    %s78 = sphi 0, %s78
    %s80 = sphi 0, %s78
    %s81 = sphi 0, %s80
    %s95 = sphi 0, %s81
    %s99 = sphi 0, %s99
    %s101 = sphi 0, %s99
    %s102 = sphi 0, %s101
    %s116 = sphi 0, %s102
    %s120 = sphi 0, %s120
    %s122 = sphi 0, %s120
    %s123 = sphi 0, %s122
    %s137 = sphi 0, %s123
    %s141 = sphi 0, %s141
    %s143 = sphi 0, %s141
    %s144 = sphi 0, %s143
    %s158 = sphi 0, %s144
    %s166 = sphi 0, %s168
    %s169 = sphi 0, %s166
    %s170 = sphi 0, %s169
    %s186 = sphi 0, %s170
  $region4: #{voxres_forward.5} parent=0 // loop_header_branch
    %14 = sbr.rel (%p12) target = $region8
  $region5: #{voxres_forward.5} parent=0 // loop_body
    %s16 = ssub.s32 %s11, 1
    %s17 = ssub.s32 %s11, 2
    %s27 = sadd.s32 1, %s20
    %p28 = scmp.ge.s32.totalorder %s27, 3
    %s29 = scalar_select %p28, 0, %s27
    %s30 = sadd.s32 1, %s19
    %s31 = scalar_select %p28, %s30, %s19
    %p32 = scmp.ge.s32.totalorder %s31, 8
    %s33 = scalar_select %p32, 0, %s31
    %s34 = sadd.s32 1, %s18
    %s35 = scalar_select %p32, %s34, %s18
    %p36 = scmp.ge.s32.totalorder %s35, 2
    %s37 = scalar_select %p36, 0, %s35
    %s38 = sadd.s32 %s19, %s20
    %s39 = ssub.s32 %s38, 1
    %p40 = scmp.gt.s32.totalorder %s39, 0
    %s41 = scalar_select %p40, %s39, 0
    %p42 = scmp.lt.s32.totalorder %s41, 7
    %s43 = scalar_select %p42, %s41, 7
    %s44 = sadd.s32 %s33, %s29
    %s45 = ssub.s32 %s44, 1
    %p46 = scmp.gt.s32.totalorder %s45, 0
    %s47 = scalar_select %p46, %s45, 0
    %p48 = scmp.lt.s32.totalorder %s47, 7
    %s49 = scalar_select %p48, %s47, 7
    %s50 = ssub.s32 %s18, %s37
    %s51 = ssub.s32 %s43, %s49
    %s52 = sor.u32 %s50, %s51
    %p53 = scmp.eq.s32.totalorder %s52, 0
    %s55 = sadd.s32 %s54, 1
    %s56 = scalar_select %p53, %s54, %s55
    %p59 = pneg %p53
    %p60 = scmp.eq.s32.totalorder %s11, 47
    %p61 = por %p59, %p60
    %p62 = scmp.ne.s32.totalorder %s54, %s57
    %p63 = scmp.eq.s32.totalorder %s11, 0
    %p64 = por %p62, %p63
    %p65 = scmp.ne.s32.totalorder %s54, %s57
    %p66 = scmp.eq.s32.totalorder %s16, 47
    %p67 = por %p65, %p66
    %p68 = scmp.ne.s32.totalorder %s57, %s58
    %p69 = scmp.eq.s32.totalorder %s16, 0
    %p70 = por %p68, %p69
    %p71 = scmp.ne.s32.totalorder %s57, %s58
    %p72 = scmp.eq.s32.totalorder %s17, 47
    %p73 = por %p71, %p72
    %p75 = scmp.ne.s32.totalorder %s58, %s74
    %p76 = scmp.eq.s32.totalorder %s17, 0
    %p77 = por %p75, %p76
    %s79 = sadd.s32 %s78, 1
    %p82 = scmp.eq.s32.totalorder %s11, 47
    %p83 = scmp.ne.s32.totalorder %s78, %s80
    %p84 = scmp.eq.s32.totalorder %s11, 0
    %p85 = por %p83, %p84
    %p86 = scmp.ne.s32.totalorder %s78, %s80
    %p87 = scmp.eq.s32.totalorder %s16, 47
    %p88 = por %p86, %p87
    %p89 = scmp.ne.s32.totalorder %s80, %s81
    %p90 = scmp.eq.s32.totalorder %s16, 0
    %p91 = por %p89, %p90
    %p92 = scmp.ne.s32.totalorder %s80, %s81
    %p93 = scmp.eq.s32.totalorder %s17, 47
    %p94 = por %p92, %p93
    %p96 = scmp.ne.s32.totalorder %s81, %s95
    %p97 = scmp.eq.s32.totalorder %s17, 0
    %p98 = por %p96, %p97
    %s100 = sadd.s32 %s99, 1
    %p103 = scmp.eq.s32.totalorder %s11, 47
    %p104 = scmp.ne.s32.totalorder %s99, %s101
    %p105 = scmp.eq.s32.totalorder %s11, 0
    %p106 = por %p104, %p105
    %p107 = scmp.ne.s32.totalorder %s99, %s101
    %p108 = scmp.eq.s32.totalorder %s16, 47
    %p109 = por %p107, %p108
    %p110 = scmp.ne.s32.totalorder %s101, %s102
    %p111 = scmp.eq.s32.totalorder %s16, 0
    %p112 = por %p110, %p111
    %p113 = scmp.ne.s32.totalorder %s101, %s102
    %p114 = scmp.eq.s32.totalorder %s17, 47
    %p115 = por %p113, %p114
    %p117 = scmp.ne.s32.totalorder %s102, %s116
    %p118 = scmp.eq.s32.totalorder %s17, 0
    %p119 = por %p117, %p118
    %s121 = sadd.s32 %s120, 1
    %p124 = scmp.eq.s32.totalorder %s11, 47
    %p125 = scmp.ne.s32.totalorder %s120, %s122
    %p126 = scmp.eq.s32.totalorder %s11, 0
    %p127 = por %p125, %p126
    %p128 = scmp.ne.s32.totalorder %s120, %s122
    %p129 = scmp.eq.s32.totalorder %s16, 47
    %p130 = por %p128, %p129
    %p131 = scmp.ne.s32.totalorder %s122, %s123
    %p132 = scmp.eq.s32.totalorder %s16, 0
    %p133 = por %p131, %p132
    %p134 = scmp.ne.s32.totalorder %s122, %s123
    %p135 = scmp.eq.s32.totalorder %s17, 47
    %p136 = por %p134, %p135
    %p138 = scmp.ne.s32.totalorder %s123, %s137
    %p139 = scmp.eq.s32.totalorder %s17, 0
    %p140 = por %p138, %p139
    %s142 = sadd.s32 %s141, 1
    %p145 = scmp.eq.s32.totalorder %s11, 47
    %p146 = scmp.ne.s32.totalorder %s141, %s143
    %p147 = scmp.eq.s32.totalorder %s11, 0
    %p148 = por %p146, %p147
    %p149 = scmp.ne.s32.totalorder %s141, %s143
    %p150 = scmp.eq.s32.totalorder %s16, 47
    %p151 = por %p149, %p150
    %p152 = scmp.ne.s32.totalorder %s143, %s144
    %p153 = scmp.eq.s32.totalorder %s16, 0
    %p154 = por %p152, %p153
    %p155 = scmp.ne.s32.totalorder %s143, %s144
    %p156 = scmp.eq.s32.totalorder %s17, 47
    %p157 = por %p155, %p156
    %p159 = scmp.ne.s32.totalorder %s144, %s158
    %p160 = scmp.eq.s32.totalorder %s17, 0
    %p161 = por %p159, %p160
    %s162 = ssub.s32 %s18, %s37
    %s163 = ssub.s32 %s19, %s33
    %s164 = sor.u32 %s162, %s163
    %p165 = scmp.eq.s32.totalorder %s164, 0
    %s167 = sadd.s32 %s166, 1
    %s168 = scalar_select %p165, %s166, %s167
    %p171 = pneg %p165
    %p172 = scmp.eq.s32.totalorder %s11, 47
    %p173 = por %p171, %p172
    %p174 = scmp.ne.s32.totalorder %s166, %s169
    %p175 = scmp.eq.s32.totalorder %s11, 0
    %p176 = por %p174, %p175
    %p177 = scmp.ne.s32.totalorder %s166, %s169
    %p178 = scmp.eq.s32.totalorder %s16, 47
    %p179 = por %p177, %p178
    %p180 = scmp.ne.s32.totalorder %s169, %s170
    %p181 = scmp.eq.s32.totalorder %s16, 0
    %p182 = por %p180, %p181
    %p183 = scmp.ne.s32.totalorder %s169, %s170
    %p184 = scmp.eq.s32.totalorder %s17, 47
    %p185 = por %p183, %p184
    %p187 = scmp.ne.s32.totalorder %s170, %s186
    %p188 = scmp.eq.s32.totalorder %s17, 0
    %p189 = por %p187, %p188
    %p190 = scmp.le.s32.totalorder 1, %s11
    %p191 = scmp.lt.s32.totalorder %s11, 49
    %p192 = pnand %p190, %p191
    %p193 = pneg %p192
    // Predicated region
    $region9: #{voxres_forward.5} parent=5 // pred_check
      _
    $region10: #{voxres_forward.5} parent=5 // pred_check_branch
      %195 = sbr.rel (%p192) target = $region12
    $region11: #{voxres_forward.5} parent=5 // pred_region
      %s196 = ssub.s32 %s11, 1
      // Predicated region
      $region13: #{voxres_forward.5} parent=11 // pred_check
        %p197 = pneg %p91
      $region14: #{voxres_forward.5} parent=11 // pred_check_branch
        %199 = sbr.rel (%p197) target = $region16
      $region15: #{voxres_forward.5} parent=11 // pred_region
        _
      $region16: #{voxres_forward.5} parent=11 // pred_fallthru
        _
      // Predicated region
      $region17: #{voxres_forward.5} parent=11 // pred_check
        %p200 = pneg %p112
      $region18: #{voxres_forward.5} parent=11 // pred_check_branch
        %202 = sbr.rel (%p200) target = $region20
      $region19: #{voxres_forward.5} parent=11 // pred_region
        _
      $region20: #{voxres_forward.5} parent=11 // pred_fallthru
        _
      // Predicated region
      $region21: #{voxres_forward.5} parent=11 // pred_check
        %p203 = pneg %p133
      $region22: #{voxres_forward.5} parent=11 // pred_check_branch
        %205 = sbr.rel (%p203) target = $region24
      $region23: #{voxres_forward.5} parent=11 // pred_region
        _
      $region24: #{voxres_forward.5} parent=11 // pred_fallthru
        _
      // Predicated region
      $region25: #{voxres_forward.5} parent=11 // pred_check
        %p206 = pneg %p154
      $region26: #{voxres_forward.5} parent=11 // pred_check_branch
        %208 = sbr.rel (%p206) target = $region28
      $region27: #{voxres_forward.5} parent=11 // pred_region
        _
      $region28: #{voxres_forward.5} parent=11 // pred_fallthru
        _
    $region12: #{voxres_forward.5} parent=5 // pred_fallthru
      _
    %p209 = scmp.lt.s32.totalorder %s11, 48
    // Predicated region
    $region29: #{voxres_forward.5} parent=5 // pred_check
      %p210 = pneg %p209
    $region30: #{voxres_forward.5} parent=5 // pred_check_branch
      %212 = sbr.rel (%p210) target = $region32
    $region31: #{voxres_forward.5} parent=5 // pred_region
      // Predicated region
      $region33: #{voxres_forward.5} parent=31 // pred_check
        %p213 = pneg %p64
      $region34: #{voxres_forward.5} parent=31 // pred_check_branch
        %215 = sbr.rel (%p213) target = $region36
      $region35: #{voxres_forward.5} parent=31 // pred_region
        %s216 = sadd.s32 %s19, %s20
        %s217 = ssub.s32 %s216, 1
        %p218 = scmp.gt.s32.totalorder %s217, 0
        %s219 = scalar_select %p218, %s217, 0
        %p220 = scmp.lt.s32.totalorder %s219, 7
        %s221 = scalar_select %p220, %s219, 7
        %p222 = scmp.lt.s32.totalorder %s18, 1
        %s223 = scalar_select %p222, %s18, 1
        %p224 = scmp.lt.s32.totalorder %s221, 7
        %s225 = scalar_select %p224, %s221, 7
        %s226 = smul.addr %s225, 16
        %s227 = smul.addr %s223, 128
        %s228 = sadd.s32 %s226, %s227
        %s229 = smul.addr %s228, 8
        %s230 = scalar_lea.vmem %s0, %s229
        %s231 = sadd.s32 %s19, %s20
        %s232 = ssub.s32 %s231, 1
        %p233 = scmp.gt.s32.totalorder %s232, 0
        %s234 = scalar_select %p233, %s232, 0
        %p235 = scmp.lt.s32.totalorder %s234, 7
        %s236 = scalar_select %p235, %s234, 7
      $region36: #{voxres_forward.5} parent=31 // pred_fallthru
        _
    $region32: #{voxres_forward.5} parent=5 // pred_fallthru
      _
    %p237 = scmp.le.s32.totalorder 1, %s11
    %p238 = scmp.lt.s32.totalorder %s11, 49
    %p239 = pnand %p237, %p238
    %p240 = pneg %p239
    // Predicated region
    $region37: #{voxres_forward.5} parent=5 // pred_check
      _
    $region38: #{voxres_forward.5} parent=5 // pred_check_branch
      %242 = sbr.rel (%p239) target = $region40
    $region39: #{voxres_forward.5} parent=5 // pred_region
      %s243 = ssub.s32 %s11, 1
      %s244 = sadd.s32 %s22, %s23
      %s245 = ssub.s32 %s244, 1
      %p246 = scmp.gt.s32.totalorder %s245, 0
      %s247 = scalar_select %p246, %s245, 0
      %p248 = scmp.lt.s32.totalorder %s247, 7
      %s249 = scalar_select %p248, %s247, 7
      %p250 = scmp.lt.s32.totalorder %s21, 1
      %s251 = scalar_select %p250, %s21, 1
      %p252 = scmp.lt.s32.totalorder %s249, 7
      %s253 = scalar_select %p252, %s249, 7
      %s254 = smul.addr %s253, 16
      %s255 = smul.addr %s251, 128
      %s256 = sadd.s32 %s254, %s255
      %s257 = smul.addr %s256, 8
      %s258 = scalar_lea.vmem %s0, %s257
      %p259 = pneg %p70
      %p260 = pneg %p67
      %p261 = pneg %p91
      %p262 = pneg %p88
      %p263 = pneg %p112
      %p264 = pneg %p109
      %p265 = pneg %p133
      %p266 = pneg %p130
      %p267 = pneg %p154
      %p268 = pneg %p151
      %p269 = pneg %p182
      %p270 = pneg %p179
      %p271 = scmp.lt.s32.totalorder %s21, 1
      %s272 = scalar_select %p271, %s21, 1
      %p273 = scmp.lt.s32.totalorder %s22, 7
      %s274 = scalar_select %p273, %s22, 7
      %s275 = smul.addr %s274, 16
      %s276 = smul.addr %s272, 128
      %s277 = sadd.s32 %s275, %s276
      %s278 = smul.addr %s277, 8
      %s279 = scalar_lea.vmem %s5, %s278
      %s280 = sadd.s32 %s22, %s23
      %s281 = ssub.s32 %s280, 1
      %p282 = scmp.gt.s32.totalorder %s281, 0
      %s283 = scalar_select %p282, %s281, 0
      %p284 = scmp.lt.s32.totalorder %s283, 7
      %s285 = scalar_select %p284, %s283, 7
      %p286 = scmp.lt.s32.totalorder %s21, 1
      %s287 = scalar_select %p286, %s21, 1
      %p288 = scmp.lt.s32.totalorder %s285, 7
      %s289 = scalar_select %p288, %s285, 7
      %s290 = smul.addr %s289, 16
      %s291 = smul.addr %s287, 128
      %s292 = sadd.s32 %s290, %s291
      %s293 = smul.addr %s292, 8
      %s294 = scalar_lea.vmem %s0, %s293
      %s295 = sadd.s32 %s22, %s23
      %s296 = ssub.s32 %s295, 1
      %p297 = scmp.gt.s32.totalorder %s296, 0
      %s298 = scalar_select %p297, %s296, 0
      %p299 = scmp.lt.s32.totalorder %s298, 7
      %s300 = scalar_select %p299, %s298, 7
      %p301 = scmp.lt.s32.totalorder %s21, 1
      %s302 = scalar_select %p301, %s21, 1
      %p303 = scmp.lt.s32.totalorder %s22, 7
      %s304 = scalar_select %p303, %s22, 7
      %s305 = smul.addr %s304, 16
      %s306 = smul.addr %s302, 128
      %s307 = sadd.s32 %s305, %s306
      %s308 = smul.addr %s307, 8
      %s309 = scalar_lea.vmem %s5, %s308
      %s311 = sadd.s32 %s22, %s23
      %s312 = ssub.s32 %s311, 1
      %p313 = scmp.ge.s32.totalorder %s312, 0
      %p314 = scmp.lt.s32.totalorder %s312, 8
      %p315 = pnand %p313, %p314
      %p316 = pneg %p315
      %p317 = scmp.eq.s32.totalorder %s23, 0
      // Predicated region
      $region41: #{voxres_forward.5} parent=39 // pred_check
        %p318 = pneg %p317
      $region42: #{voxres_forward.5} parent=39 // pred_check_branch
        %320 = sbr.rel (%p318) target = $region44
      $region43: #{voxres_forward.5} parent=39 // pred_region
        %vm321 = vcmask 523264
        %322 = vst.msk [vmem:[#allocation3] sm:$0xff] %vm321, 0.0
        %vm323 = vcmask 517120
        %324 = vst.msk [vmem:[#allocation3 + $0x8] sm:$0x3] %vm323, 0.0
        %325 = vst.msk [vmem:[#allocation3 + $0x10] sm:$0xff] %vm321, 0.0
        %326 = vst.msk [vmem:[#allocation3 + $0x18] sm:$0x3] %vm323, 0.0
        %327 = vst.msk [vmem:[#allocation3 + $0x20] sm:$0xff] %vm321, 0.0
        %328 = vst.msk [vmem:[#allocation3 + $0x28] sm:$0x3] %vm323, 0.0
        %329 = vst.msk [vmem:[#allocation3 + $0x30] sm:$0xff] %vm321, 0.0
        %330 = vst.msk [vmem:[#allocation3 + $0x38] sm:$0x3] %vm323, 0.0
        %331 = vst.msk [vmem:[#allocation3 + $0x40] sm:$0xff] %vm321, 0.0
        %332 = vst.msk [vmem:[#allocation3 + $0x48] sm:$0x3] %vm323, 0.0
        %333 = vst.msk [vmem:[#allocation3 + $0x50] sm:$0xff] %vm321, 0.0
        %334 = vst.msk [vmem:[#allocation3 + $0x58] sm:$0x3] %vm323, 0.0
        %335 = vst.msk [vmem:[#allocation3 + $0x60] sm:$0xff] %vm321, 0.0
        %336 = vst.msk [vmem:[#allocation3 + $0x68] sm:$0x3] %vm323, 0.0
        %337 = vst.msk [vmem:[#allocation3 + $0x70] sm:$0xff] %vm321, 0.0
        %338 = vst.msk [vmem:[#allocation3 + $0x78] sm:$0x3] %vm323, 0.0
        %339 = vst.msk [vmem:[#allocation3 + $0x80] sm:$0xff] %vm321, 0.0
        %340 = vst.msk [vmem:[#allocation3 + $0x88] sm:$0x3] %vm323, 0.0
        %341 = vst.msk [vmem:[#allocation3 + $0x90] sm:$0xff] %vm321, 0.0
        %342 = vst.msk [vmem:[#allocation3 + $0x98] sm:$0x3] %vm323, 0.0
        %343 = vst.msk [vmem:[#allocation3 + $0xa0] sm:$0xff] %vm321, 0.0
        %344 = vst.msk [vmem:[#allocation3 + $0xa8] sm:$0x3] %vm323, 0.0
        %345 = vst.msk [vmem:[#allocation3 + $0xb0] sm:$0xff] %vm321, 0.0
        %346 = vst.msk [vmem:[#allocation3 + $0xb8] sm:$0x3] %vm323, 0.0
        %347 = vst.msk [vmem:[#allocation3 + $0xc0] sm:$0xff] %vm321, 0.0
        %348 = vst.msk [vmem:[#allocation3 + $0xc8] sm:$0x3] %vm323, 0.0
        %349 = vst.msk [vmem:[#allocation3 + $0xd0] sm:$0xff] %vm321, 0.0
        %350 = vst.msk [vmem:[#allocation3 + $0xd8] sm:$0x3] %vm323, 0.0
        %351 = vst.msk [vmem:[#allocation3 + $0xe0] sm:$0xff] %vm321, 0.0
        %352 = vst.msk [vmem:[#allocation3 + $0xe8] sm:$0x3] %vm323, 0.0
        %353 = vst.msk [vmem:[#allocation3 + $0xf0] sm:$0xff] %vm321, 0.0
        %354 = vst.msk [vmem:[#allocation3 + $0xf8] sm:$0x3] %vm323, 0.0
        %355 = vst.msk [vmem:[#allocation3 + $0x100] sm:$0xff] %vm321, 0.0
        %356 = vst.msk [vmem:[#allocation3 + $0x108] sm:$0x3] %vm323, 0.0
        %357 = vst.msk [vmem:[#allocation3 + $0x110] sm:$0xff] %vm321, 0.0
        %358 = vst.msk [vmem:[#allocation3 + $0x118] sm:$0x3] %vm323, 0.0
        %v359 = vld [vmem:[%s4] sm:$0x1]
        %v361 = vlaneseq
        %v362 = vshrl.u32 %v361, 7
        %v363 = vsub.s32 0, %v362
        %v364 = vrot.slane %v359, %v363
        %366 = vst.msk [vmem:[#allocation2] sm:$0xff] %vm321, %v364
        %367 = vst.msk [vmem:[#allocation2 + $0x8] sm:$0xff] %vm321, %v364
        %368 = vst.msk [vmem:[#allocation2 + $0x10] sm:$0xff] %vm321, %v364
        %369 = vst.msk [vmem:[#allocation2 + $0x18] sm:$0xff] %vm321, %v364
        %370 = vst.msk [vmem:[#allocation2 + $0x20] sm:$0xff] %vm321, %v364
        %371 = vst.msk [vmem:[#allocation2 + $0x28] sm:$0xff] %vm321, %v364
        %372 = vst.msk [vmem:[#allocation2 + $0x30] sm:$0xff] %vm321, %v364
        %373 = vst.msk [vmem:[#allocation2 + $0x38] sm:$0xff] %vm321, %v364
        %374 = vst.msk [vmem:[#allocation2 + $0x40] sm:$0xff] %vm321, %v364
        %375 = vst.msk [vmem:[#allocation2 + $0x48] sm:$0xff] %vm321, %v364
        %376 = vst.msk [vmem:[#allocation2 + $0x50] sm:$0xff] %vm321, %v364
        %377 = vst.msk [vmem:[#allocation2 + $0x58] sm:$0xff] %vm321, %v364
        %378 = vst.msk [vmem:[#allocation2 + $0x60] sm:$0xff] %vm321, %v364
        %379 = vst.msk [vmem:[#allocation2 + $0x68] sm:$0xff] %vm321, %v364
        %380 = vst.msk [vmem:[#allocation2 + $0x70] sm:$0xff] %vm321, %v364
        %381 = vst.msk [vmem:[#allocation2 + $0x78] sm:$0xff] %vm321, %v364
      $region44: #{voxres_forward.5} parent=39 // pred_fallthru
        _
      // Predicated region
      $region45: #{voxres_forward.5} parent=39 // pred_check
        _
      $region46: #{voxres_forward.5} parent=39 // pred_check_branch
        %383 = sbr.rel (%p315) target = $region48
      $region47: #{voxres_forward.5} parent=39 // pred_region
        %v384 = vld [vmem:[%s294] sm:$0xff]
        %v385 = vld [vmem:[%s294 + $0x8] sm:$0xff]
        %v386 = vld [vmem:[%s294 + $0x10] sm:$0xff]
        %v387 = vld [vmem:[%s294 + $0x18] sm:$0xff]
        %v388 = vld [vmem:[%s294 + $0x20] sm:$0xff]
        %v389 = vld [vmem:[%s294 + $0x28] sm:$0xff]
        %v390 = vld [vmem:[%s294 + $0x30] sm:$0xff]
        %v391 = vld [vmem:[%s294 + $0x38] sm:$0xff]
        %v392 = vld [vmem:[%s294 + $0x40] sm:$0xff]
        %v393 = vld [vmem:[%s294 + $0x48] sm:$0xff]
        %v394 = vld [vmem:[%s294 + $0x50] sm:$0xff]
        %v395 = vld [vmem:[%s294 + $0x58] sm:$0xff]
        %v396 = vld [vmem:[%s294 + $0x60] sm:$0xff]
        %v397 = vld [vmem:[%s294 + $0x68] sm:$0xff]
        %v398 = vld [vmem:[%s294 + $0x70] sm:$0xff]
        %v399 = vld [vmem:[%s294 + $0x78] sm:$0xff]
        %v400 = vld [vmem:[%s1] sm:$0x1]
        %v402 = vlaneseq
        %v403 = vshrl.u32 %v402, 7
        %v404 = vsub.s32 0, %v403
        %v405 = vrot.slane %v400, %v404
        %v407 = vmul.f32 %v384, %v405
        %v408 = vmul.f32 %v385, %v405
        %v409 = vmul.f32 %v386, %v405
        %v410 = vmul.f32 %v387, %v405
        %v411 = vmul.f32 %v388, %v405
        %v412 = vmul.f32 %v389, %v405
        %v413 = vmul.f32 %v390, %v405
        %v414 = vmul.f32 %v391, %v405
        %v415 = vmul.f32 %v392, %v405
        %v416 = vmul.f32 %v393, %v405
        %v417 = vmul.f32 %v394, %v405
        %v418 = vmul.f32 %v395, %v405
        %v419 = vmul.f32 %v396, %v405
        %v420 = vmul.f32 %v397, %v405
        %v421 = vmul.f32 %v398, %v405
        %v422 = vmul.f32 %v399, %v405
        %v423 = vld [vmem:[%s2] sm:$0x1]
        %v425 = vlaneseq
        %v426 = vshrl.u32 %v425, 7
        %v427 = vsub.s32 0, %v426
        %v428 = vrot.slane %v423, %v427
        %v430 = vadd.f32 %v407, %v428
        %v431 = vadd.f32 %v408, %v428
        %v432 = vadd.f32 %v409, %v428
        %v433 = vadd.f32 %v410, %v428
        %v434 = vadd.f32 %v411, %v428
        %v435 = vadd.f32 %v412, %v428
        %v436 = vadd.f32 %v413, %v428
        %v437 = vadd.f32 %v414, %v428
        %v438 = vadd.f32 %v415, %v428
        %v439 = vadd.f32 %v416, %v428
        %v440 = vadd.f32 %v417, %v428
        %v441 = vadd.f32 %v418, %v428
        %v442 = vadd.f32 %v419, %v428
        %v443 = vadd.f32 %v420, %v428
        %v444 = vadd.f32 %v421, %v428
        %v445 = vadd.f32 %v422, %v428
        %vm446 = vcmp.ge.f32.partialorder %v430, 0.0
        %vm447 = vcmp.ge.f32.partialorder %v431, 0.0
        %vm448 = vcmp.ge.f32.partialorder %v432, 0.0
        %vm449 = vcmp.ge.f32.partialorder %v433, 0.0
        %vm450 = vcmp.ge.f32.partialorder %v434, 0.0
        %vm451 = vcmp.ge.f32.partialorder %v435, 0.0
        %vm452 = vcmp.ge.f32.partialorder %v436, 0.0
        %vm453 = vcmp.ge.f32.partialorder %v437, 0.0
        %vm454 = vcmp.ge.f32.partialorder %v438, 0.0
        %vm455 = vcmp.ge.f32.partialorder %v439, 0.0
        %vm456 = vcmp.ge.f32.partialorder %v440, 0.0
        %vm457 = vcmp.ge.f32.partialorder %v441, 0.0
        %vm458 = vcmp.ge.f32.partialorder %v442, 0.0
        %vm459 = vcmp.ge.f32.partialorder %v443, 0.0
        %vm460 = vcmp.ge.f32.partialorder %v444, 0.0
        %vm461 = vcmp.ge.f32.partialorder %v445, 0.0
        %v462 = vmul.f32 %v430, 1e-05
        %v463 = vmul.f32 %v431, 1e-05
        %v464 = vmul.f32 %v432, 1e-05
        %v465 = vmul.f32 %v433, 1e-05
        %v466 = vmul.f32 %v434, 1e-05
        %v467 = vmul.f32 %v435, 1e-05
        %v468 = vmul.f32 %v436, 1e-05
        %v469 = vmul.f32 %v437, 1e-05
        %v470 = vmul.f32 %v438, 1e-05
        %v471 = vmul.f32 %v439, 1e-05
        %v472 = vmul.f32 %v440, 1e-05
        %v473 = vmul.f32 %v441, 1e-05
        %v474 = vmul.f32 %v442, 1e-05
        %v475 = vmul.f32 %v443, 1e-05
        %v476 = vmul.f32 %v444, 1e-05
        %v477 = vmul.f32 %v445, 1e-05
        %v478 = vsel %vm446, %v430, %v462
        %v479 = vsel %vm447, %v431, %v463
        %v480 = vsel %vm448, %v432, %v464
        %v481 = vsel %vm449, %v433, %v465
        %v482 = vsel %vm450, %v434, %v466
        %v483 = vsel %vm451, %v435, %v467
        %v484 = vsel %vm452, %v436, %v468
        %v485 = vsel %vm453, %v437, %v469
        %v486 = vsel %vm454, %v438, %v470
        %v487 = vsel %vm455, %v439, %v471
        %v488 = vsel %vm456, %v440, %v472
        %v489 = vsel %vm457, %v441, %v473
        %v490 = vsel %vm458, %v442, %v474
        %v491 = vsel %vm459, %v443, %v475
        %v492 = vsel %vm460, %v444, %v476
        %v493 = vsel %vm461, %v445, %v477
        %s494 = scalar_lea.vmem [#allocation3], 16
        %vm495 = vcmask 523264
        %496 = vst.msk [vmem:[%s494 + $0x1] sm:$0xff] %vm495, %v478
        %497 = vst.msk [vmem:[%s494 + $0x11] sm:$0xff] %vm495, %v479
        %498 = vst.msk [vmem:[%s494 + $0x21] sm:$0xff] %vm495, %v480
        %499 = vst.msk [vmem:[%s494 + $0x31] sm:$0xff] %vm495, %v481
        %500 = vst.msk [vmem:[%s494 + $0x41] sm:$0xff] %vm495, %v482
        %501 = vst.msk [vmem:[%s494 + $0x51] sm:$0xff] %vm495, %v483
        %502 = vst.msk [vmem:[%s494 + $0x61] sm:$0xff] %vm495, %v484
        %503 = vst.msk [vmem:[%s494 + $0x71] sm:$0xff] %vm495, %v485
        %504 = vst.msk [vmem:[%s494 + $0x81] sm:$0xff] %vm495, %v486
        %505 = vst.msk [vmem:[%s494 + $0x91] sm:$0xff] %vm495, %v487
        %506 = vst.msk [vmem:[%s494 + $0xa1] sm:$0xff] %vm495, %v488
        %507 = vst.msk [vmem:[%s494 + $0xb1] sm:$0xff] %vm495, %v489
        %508 = vst.msk [vmem:[%s494 + $0xc1] sm:$0xff] %vm495, %v490
        %509 = vst.msk [vmem:[%s494 + $0xd1] sm:$0xff] %vm495, %v491
        %510 = vst.msk [vmem:[%s494 + $0xe1] sm:$0xff] %vm495, %v492
        %511 = vst.msk [vmem:[%s494 + $0xf1] sm:$0xff] %vm495, %v493
        %v512 = vld [vmem:[#allocation3] sm:$0xff]
        %v513 = vld [vmem:[#allocation3 + $0x10] sm:$0xff]
        %v514 = vld [vmem:[#allocation3 + $0x20] sm:$0xff]
        %v515 = vld [vmem:[#allocation3 + $0x30] sm:$0xff]
        %v516 = vld [vmem:[#allocation3 + $0x40] sm:$0xff]
        %v517 = vld [vmem:[#allocation3 + $0x50] sm:$0xff]
        %v518 = vld [vmem:[#allocation3 + $0x60] sm:$0xff]
        %v519 = vld [vmem:[#allocation3 + $0x70] sm:$0xff]
        %v520 = vld [vmem:[#allocation3 + $0x80] sm:$0xff]
        %v521 = vld [vmem:[#allocation3 + $0x90] sm:$0xff]
        %v522 = vld [vmem:[#allocation3 + $0xa0] sm:$0xff]
        %v523 = vld [vmem:[#allocation3 + $0xb0] sm:$0xff]
        %v524 = vld [vmem:[#allocation3 + $0xc0] sm:$0xff]
        %v525 = vld [vmem:[#allocation3 + $0xd0] sm:$0xff]
        %v526 = vld [vmem:[#allocation3 + $0xe0] sm:$0xff]
        %v527 = vld [vmem:[#allocation3 + $0xf0] sm:$0xff]
        %v528 = vld [vmem:[#allocation3 + $0x1] sm:$0xff]
        %v529 = vld [vmem:[#allocation3 + $0x11] sm:$0xff]
        %v530 = vld [vmem:[#allocation3 + $0x21] sm:$0xff]
        %v531 = vld [vmem:[#allocation3 + $0x31] sm:$0xff]
        %v532 = vld [vmem:[#allocation3 + $0x41] sm:$0xff]
        %v533 = vld [vmem:[#allocation3 + $0x51] sm:$0xff]
        %v534 = vld [vmem:[#allocation3 + $0x61] sm:$0xff]
        %v535 = vld [vmem:[#allocation3 + $0x71] sm:$0xff]
        %v536 = vld [vmem:[#allocation3 + $0x81] sm:$0xff]
        %v537 = vld [vmem:[#allocation3 + $0x91] sm:$0xff]
        %v538 = vld [vmem:[#allocation3 + $0xa1] sm:$0xff]
        %v539 = vld [vmem:[#allocation3 + $0xb1] sm:$0xff]
        %v540 = vld [vmem:[#allocation3 + $0xc1] sm:$0xff]
        %v541 = vld [vmem:[#allocation3 + $0xd1] sm:$0xff]
        %v542 = vld [vmem:[#allocation3 + $0xe1] sm:$0xff]
        %v543 = vld [vmem:[#allocation3 + $0xf1] sm:$0xff]
        %v544 = vld [vmem:[#allocation3 + $0x2] sm:$0xff]
        %v545 = vld [vmem:[#allocation3 + $0x12] sm:$0xff]
        %v546 = vld [vmem:[#allocation3 + $0x22] sm:$0xff]
        %v547 = vld [vmem:[#allocation3 + $0x32] sm:$0xff]
        %v548 = vld [vmem:[#allocation3 + $0x42] sm:$0xff]
        %v549 = vld [vmem:[#allocation3 + $0x52] sm:$0xff]
        %v550 = vld [vmem:[#allocation3 + $0x62] sm:$0xff]
        %v551 = vld [vmem:[#allocation3 + $0x72] sm:$0xff]
        %v552 = vld [vmem:[#allocation3 + $0x82] sm:$0xff]
        %v553 = vld [vmem:[#allocation3 + $0x92] sm:$0xff]
        %v554 = vld [vmem:[#allocation3 + $0xa2] sm:$0xff]
        %v555 = vld [vmem:[#allocation3 + $0xb2] sm:$0xff]
        %v556 = vld [vmem:[#allocation3 + $0xc2] sm:$0xff]
        %v557 = vld [vmem:[#allocation3 + $0xd2] sm:$0xff]
        %v558 = vld [vmem:[#allocation3 + $0xe2] sm:$0xff]
        %v559 = vld [vmem:[#allocation3 + $0xf2] sm:$0xff]
        %v560 = vld [vmem:[%s494] sm:$0xff]
        %v561 = vld [vmem:[%s494 + $0x10] sm:$0xff]
        %v562 = vld [vmem:[%s494 + $0x20] sm:$0xff]
        %v563 = vld [vmem:[%s494 + $0x30] sm:$0xff]
        %v564 = vld [vmem:[%s494 + $0x40] sm:$0xff]
        %v565 = vld [vmem:[%s494 + $0x50] sm:$0xff]
        %v566 = vld [vmem:[%s494 + $0x60] sm:$0xff]
        %v567 = vld [vmem:[%s494 + $0x70] sm:$0xff]
        %v568 = vld [vmem:[%s494 + $0x80] sm:$0xff]
        %v569 = vld [vmem:[%s494 + $0x90] sm:$0xff]
        %v570 = vld [vmem:[%s494 + $0xa0] sm:$0xff]
        %v571 = vld [vmem:[%s494 + $0xb0] sm:$0xff]
        %v572 = vld [vmem:[%s494 + $0xc0] sm:$0xff]
        %v573 = vld [vmem:[%s494 + $0xd0] sm:$0xff]
        %v574 = vld [vmem:[%s494 + $0xe0] sm:$0xff]
        %v575 = vld [vmem:[%s494 + $0xf0] sm:$0xff]
        %v576 = vld [vmem:[%s494 + $0x1] sm:$0xff]
        %v577 = vld [vmem:[%s494 + $0x11] sm:$0xff]
        %v578 = vld [vmem:[%s494 + $0x21] sm:$0xff]
        %v579 = vld [vmem:[%s494 + $0x31] sm:$0xff]
        %v580 = vld [vmem:[%s494 + $0x41] sm:$0xff]
        %v581 = vld [vmem:[%s494 + $0x51] sm:$0xff]
        %v582 = vld [vmem:[%s494 + $0x61] sm:$0xff]
        %v583 = vld [vmem:[%s494 + $0x71] sm:$0xff]
        %v584 = vld [vmem:[%s494 + $0x81] sm:$0xff]
        %v585 = vld [vmem:[%s494 + $0x91] sm:$0xff]
        %v586 = vld [vmem:[%s494 + $0xa1] sm:$0xff]
        %v587 = vld [vmem:[%s494 + $0xb1] sm:$0xff]
        %v588 = vld [vmem:[%s494 + $0xc1] sm:$0xff]
        %v589 = vld [vmem:[%s494 + $0xd1] sm:$0xff]
        %v590 = vld [vmem:[%s494 + $0xe1] sm:$0xff]
        %v591 = vld [vmem:[%s494 + $0xf1] sm:$0xff]
        %v592 = vld [vmem:[%s494 + $0x2] sm:$0xff]
        %v593 = vld [vmem:[%s494 + $0x12] sm:$0xff]
        %v594 = vld [vmem:[%s494 + $0x22] sm:$0xff]
        %v595 = vld [vmem:[%s494 + $0x32] sm:$0xff]
        %v596 = vld [vmem:[%s494 + $0x42] sm:$0xff]
        %v597 = vld [vmem:[%s494 + $0x52] sm:$0xff]
        %v598 = vld [vmem:[%s494 + $0x62] sm:$0xff]
        %v599 = vld [vmem:[%s494 + $0x72] sm:$0xff]
        %v600 = vld [vmem:[%s494 + $0x82] sm:$0xff]
        %v601 = vld [vmem:[%s494 + $0x92] sm:$0xff]
        %v602 = vld [vmem:[%s494 + $0xa2] sm:$0xff]
        %v603 = vld [vmem:[%s494 + $0xb2] sm:$0xff]
        %v604 = vld [vmem:[%s494 + $0xc2] sm:$0xff]
        %v605 = vld [vmem:[%s494 + $0xd2] sm:$0xff]
        %v606 = vld [vmem:[%s494 + $0xe2] sm:$0xff]
        %v607 = vld [vmem:[%s494 + $0xf2] sm:$0xff]
        %s608 = scalar_lea.vmem [#allocation3], 32
        %v609 = vld [vmem:[%s608] sm:$0xff]
        %v610 = vld [vmem:[%s608 + $0x10] sm:$0xff]
        %v611 = vld [vmem:[%s608 + $0x20] sm:$0xff]
        %v612 = vld [vmem:[%s608 + $0x30] sm:$0xff]
        %v613 = vld [vmem:[%s608 + $0x40] sm:$0xff]
        %v614 = vld [vmem:[%s608 + $0x50] sm:$0xff]
        %v615 = vld [vmem:[%s608 + $0x60] sm:$0xff]
        %v616 = vld [vmem:[%s608 + $0x70] sm:$0xff]
        %v617 = vld [vmem:[%s608 + $0x80] sm:$0xff]
        %v618 = vld [vmem:[%s608 + $0x90] sm:$0xff]
        %v619 = vld [vmem:[%s608 + $0xa0] sm:$0xff]
        %v620 = vld [vmem:[%s608 + $0xb0] sm:$0xff]
        %v621 = vld [vmem:[%s608 + $0xc0] sm:$0xff]
        %v622 = vld [vmem:[%s608 + $0xd0] sm:$0xff]
        %v623 = vld [vmem:[%s608 + $0xe0] sm:$0xff]
        %v624 = vld [vmem:[%s608 + $0xf0] sm:$0xff]
        %v625 = vld [vmem:[%s608 + $0x1] sm:$0xff]
        %v626 = vld [vmem:[%s608 + $0x11] sm:$0xff]
        %v627 = vld [vmem:[%s608 + $0x21] sm:$0xff]
        %v628 = vld [vmem:[%s608 + $0x31] sm:$0xff]
        %v629 = vld [vmem:[%s608 + $0x41] sm:$0xff]
        %v630 = vld [vmem:[%s608 + $0x51] sm:$0xff]
        %v631 = vld [vmem:[%s608 + $0x61] sm:$0xff]
        %v632 = vld [vmem:[%s608 + $0x71] sm:$0xff]
        %v633 = vld [vmem:[%s608 + $0x81] sm:$0xff]
        %v634 = vld [vmem:[%s608 + $0x91] sm:$0xff]
        %v635 = vld [vmem:[%s608 + $0xa1] sm:$0xff]
        %v636 = vld [vmem:[%s608 + $0xb1] sm:$0xff]
        %v637 = vld [vmem:[%s608 + $0xc1] sm:$0xff]
        %v638 = vld [vmem:[%s608 + $0xd1] sm:$0xff]
        %v639 = vld [vmem:[%s608 + $0xe1] sm:$0xff]
        %v640 = vld [vmem:[%s608 + $0xf1] sm:$0xff]
        %v641 = vld [vmem:[%s608 + $0x2] sm:$0xff]
        %v642 = vld [vmem:[%s608 + $0x12] sm:$0xff]
        %v643 = vld [vmem:[%s608 + $0x22] sm:$0xff]
        %v644 = vld [vmem:[%s608 + $0x32] sm:$0xff]
        %v645 = vld [vmem:[%s608 + $0x42] sm:$0xff]
        %v646 = vld [vmem:[%s608 + $0x52] sm:$0xff]
        %v647 = vld [vmem:[%s608 + $0x62] sm:$0xff]
        %v648 = vld [vmem:[%s608 + $0x72] sm:$0xff]
        %v649 = vld [vmem:[%s608 + $0x82] sm:$0xff]
        %v650 = vld [vmem:[%s608 + $0x92] sm:$0xff]
        %v651 = vld [vmem:[%s608 + $0xa2] sm:$0xff]
        %v652 = vld [vmem:[%s608 + $0xb2] sm:$0xff]
        %v653 = vld [vmem:[%s608 + $0xc2] sm:$0xff]
        %v654 = vld [vmem:[%s608 + $0xd2] sm:$0xff]
        %v655 = vld [vmem:[%s608 + $0xe2] sm:$0xff]
        %v656 = vld [vmem:[%s608 + $0xf2] sm:$0xff]
        %673 = vrot.lane.b32.xlu0 %v528, 64
        %v674 = vpop.permute.xlu0 %673
        %675 = vrot.lane.b32.xlu0 %v529, 64
        %v676 = vpop.permute.xlu0 %675
        %677 = vrot.lane.b32.xlu0 %v530, 64
        %v678 = vpop.permute.xlu0 %677
        %679 = vrot.lane.b32.xlu0 %v531, 64
        %v680 = vpop.permute.xlu0 %679
        %681 = vrot.lane.b32.xlu0 %v532, 64
        %v682 = vpop.permute.xlu0 %681
        %683 = vrot.lane.b32.xlu0 %v533, 64
        %v684 = vpop.permute.xlu0 %683
        %685 = vrot.lane.b32.xlu0 %v534, 64
        %v686 = vpop.permute.xlu0 %685
        %687 = vrot.lane.b32.xlu0 %v535, 64
        %v688 = vpop.permute.xlu0 %687
        %689 = vrot.lane.b32.xlu0 %v536, 64
        %v690 = vpop.permute.xlu0 %689
        %691 = vrot.lane.b32.xlu0 %v537, 64
        %v692 = vpop.permute.xlu0 %691
        %693 = vrot.lane.b32.xlu0 %v538, 64
        %v694 = vpop.permute.xlu0 %693
        %695 = vrot.lane.b32.xlu0 %v539, 64
        %v696 = vpop.permute.xlu0 %695
        %697 = vrot.lane.b32.xlu0 %v540, 64
        %v698 = vpop.permute.xlu0 %697
        %699 = vrot.lane.b32.xlu0 %v541, 64
        %v700 = vpop.permute.xlu0 %699
        %701 = vrot.lane.b32.xlu0 %v542, 64
        %v702 = vpop.permute.xlu0 %701
        %703 = vrot.lane.b32.xlu0 %v543, 64
        %v704 = vpop.permute.xlu0 %703
        %737 = vrot.lane.b32.xlu0 %v560, 64
        %v738 = vpop.permute.xlu0 %737
        %739 = vrot.lane.b32.xlu0 %v561, 64
        %v740 = vpop.permute.xlu0 %739
        %741 = vrot.lane.b32.xlu0 %v562, 64
        %v742 = vpop.permute.xlu0 %741
        %743 = vrot.lane.b32.xlu0 %v563, 64
        %v744 = vpop.permute.xlu0 %743
        %745 = vrot.lane.b32.xlu0 %v564, 64
        %v746 = vpop.permute.xlu0 %745
        %747 = vrot.lane.b32.xlu0 %v565, 64
        %v748 = vpop.permute.xlu0 %747
        %749 = vrot.lane.b32.xlu0 %v566, 64
        %v750 = vpop.permute.xlu0 %749
        %751 = vrot.lane.b32.xlu0 %v567, 64
        %v752 = vpop.permute.xlu0 %751
        %753 = vrot.lane.b32.xlu0 %v568, 64
        %v754 = vpop.permute.xlu0 %753
        %755 = vrot.lane.b32.xlu0 %v569, 64
        %v756 = vpop.permute.xlu0 %755
        %757 = vrot.lane.b32.xlu0 %v570, 64
        %v758 = vpop.permute.xlu0 %757
        %759 = vrot.lane.b32.xlu0 %v571, 64
        %v760 = vpop.permute.xlu0 %759
        %761 = vrot.lane.b32.xlu0 %v572, 64
        %v762 = vpop.permute.xlu0 %761
        %763 = vrot.lane.b32.xlu0 %v573, 64
        %v764 = vpop.permute.xlu0 %763
        %765 = vrot.lane.b32.xlu0 %v574, 64
        %v766 = vpop.permute.xlu0 %765
        %767 = vrot.lane.b32.xlu0 %v575, 64
        %v768 = vpop.permute.xlu0 %767
        %801 = vrot.lane.b32.xlu0 %v592, 64
        %v802 = vpop.permute.xlu0 %801
        %803 = vrot.lane.b32.xlu0 %v593, 64
        %v804 = vpop.permute.xlu0 %803
        %805 = vrot.lane.b32.xlu0 %v594, 64
        %v806 = vpop.permute.xlu0 %805
        %807 = vrot.lane.b32.xlu0 %v595, 64
        %v808 = vpop.permute.xlu0 %807
        %809 = vrot.lane.b32.xlu0 %v596, 64
        %v810 = vpop.permute.xlu0 %809
        %811 = vrot.lane.b32.xlu0 %v597, 64
        %v812 = vpop.permute.xlu0 %811
        %813 = vrot.lane.b32.xlu0 %v598, 64
        %v814 = vpop.permute.xlu0 %813
        %815 = vrot.lane.b32.xlu0 %v599, 64
        %v816 = vpop.permute.xlu0 %815
        %817 = vrot.lane.b32.xlu0 %v600, 64
        %v818 = vpop.permute.xlu0 %817
        %819 = vrot.lane.b32.xlu0 %v601, 64
        %v820 = vpop.permute.xlu0 %819
        %821 = vrot.lane.b32.xlu0 %v602, 64
        %v822 = vpop.permute.xlu0 %821
        %823 = vrot.lane.b32.xlu0 %v603, 64
        %v824 = vpop.permute.xlu0 %823
        %825 = vrot.lane.b32.xlu0 %v604, 64
        %v826 = vpop.permute.xlu0 %825
        %827 = vrot.lane.b32.xlu0 %v605, 64
        %v828 = vpop.permute.xlu0 %827
        %829 = vrot.lane.b32.xlu0 %v606, 64
        %v830 = vpop.permute.xlu0 %829
        %831 = vrot.lane.b32.xlu0 %v607, 64
        %v832 = vpop.permute.xlu0 %831
        %865 = vrot.lane.b32.xlu0 %v625, 64
        %v866 = vpop.permute.xlu0 %865
        %867 = vrot.lane.b32.xlu0 %v626, 64
        %v868 = vpop.permute.xlu0 %867
        %869 = vrot.lane.b32.xlu0 %v627, 64
        %v870 = vpop.permute.xlu0 %869
        %871 = vrot.lane.b32.xlu0 %v628, 64
        %v872 = vpop.permute.xlu0 %871
        %873 = vrot.lane.b32.xlu0 %v629, 64
        %v874 = vpop.permute.xlu0 %873
        %875 = vrot.lane.b32.xlu0 %v630, 64
        %v876 = vpop.permute.xlu0 %875
        %877 = vrot.lane.b32.xlu0 %v631, 64
        %v878 = vpop.permute.xlu0 %877
        %879 = vrot.lane.b32.xlu0 %v632, 64
        %v880 = vpop.permute.xlu0 %879
        %881 = vrot.lane.b32.xlu0 %v633, 64
        %v882 = vpop.permute.xlu0 %881
        %883 = vrot.lane.b32.xlu0 %v634, 64
        %v884 = vpop.permute.xlu0 %883
        %885 = vrot.lane.b32.xlu0 %v635, 64
        %v886 = vpop.permute.xlu0 %885
        %887 = vrot.lane.b32.xlu0 %v636, 64
        %v888 = vpop.permute.xlu0 %887
        %889 = vrot.lane.b32.xlu0 %v637, 64
        %v890 = vpop.permute.xlu0 %889
        %891 = vrot.lane.b32.xlu0 %v638, 64
        %v892 = vpop.permute.xlu0 %891
        %893 = vrot.lane.b32.xlu0 %v639, 64
        %v894 = vpop.permute.xlu0 %893
        %895 = vrot.lane.b32.xlu0 %v640, 64
        %v896 = vpop.permute.xlu0 %895
        %v913 = vsel %vm495, %v512, %v674
        %v914 = vsel %vm495, %v513, %v676
        %v915 = vsel %vm495, %v514, %v678
        %v916 = vsel %vm495, %v515, %v680
        %v917 = vsel %vm495, %v516, %v682
        %v918 = vsel %vm495, %v517, %v684
        %v919 = vsel %vm495, %v518, %v686
        %v920 = vsel %vm495, %v519, %v688
        %v921 = vsel %vm495, %v520, %v690
        %v922 = vsel %vm495, %v521, %v692
        %v923 = vsel %vm495, %v522, %v694
        %v924 = vsel %vm495, %v523, %v696
        %v925 = vsel %vm495, %v524, %v698
        %v926 = vsel %vm495, %v525, %v700
        %v927 = vsel %vm495, %v526, %v702
        %v928 = vsel %vm495, %v527, %v704
        %v929 = vsel %vm495, %v544, %v738
        %v930 = vsel %vm495, %v545, %v740
        %v931 = vsel %vm495, %v546, %v742
        %v932 = vsel %vm495, %v547, %v744
        %v933 = vsel %vm495, %v548, %v746
        %v934 = vsel %vm495, %v549, %v748
        %v935 = vsel %vm495, %v550, %v750
        %v936 = vsel %vm495, %v551, %v752
        %v937 = vsel %vm495, %v552, %v754
        %v938 = vsel %vm495, %v553, %v756
        %v939 = vsel %vm495, %v554, %v758
        %v940 = vsel %vm495, %v555, %v760
        %v941 = vsel %vm495, %v556, %v762
        %v942 = vsel %vm495, %v557, %v764
        %v943 = vsel %vm495, %v558, %v766
        %v944 = vsel %vm495, %v559, %v768
        %v945 = vsel %vm495, %v576, %v802
        %v946 = vsel %vm495, %v577, %v804
        %v947 = vsel %vm495, %v578, %v806
        %v948 = vsel %vm495, %v579, %v808
        %v949 = vsel %vm495, %v580, %v810
        %v950 = vsel %vm495, %v581, %v812
        %v951 = vsel %vm495, %v582, %v814
        %v952 = vsel %vm495, %v583, %v816
        %v953 = vsel %vm495, %v584, %v818
        %v954 = vsel %vm495, %v585, %v820
        %v955 = vsel %vm495, %v586, %v822
        %v956 = vsel %vm495, %v587, %v824
        %v957 = vsel %vm495, %v588, %v826
        %v958 = vsel %vm495, %v589, %v828
        %v959 = vsel %vm495, %v590, %v830
        %v960 = vsel %vm495, %v591, %v832
        %v961 = vsel %vm495, %v609, %v866
        %v962 = vsel %vm495, %v610, %v868
        %v963 = vsel %vm495, %v611, %v870
        %v964 = vsel %vm495, %v612, %v872
        %v965 = vsel %vm495, %v613, %v874
        %v966 = vsel %vm495, %v614, %v876
        %v967 = vsel %vm495, %v615, %v878
        %v968 = vsel %vm495, %v616, %v880
        %v969 = vsel %vm495, %v617, %v882
        %v970 = vsel %vm495, %v618, %v884
        %v971 = vsel %vm495, %v619, %v886
        %v972 = vsel %vm495, %v620, %v888
        %v973 = vsel %vm495, %v621, %v890
        %v974 = vsel %vm495, %v622, %v892
        %v975 = vsel %vm495, %v623, %v894
        %v976 = vsel %vm495, %v624, %v896
        %v977 = vpack.c.bf16 %v914, %v913
        %v978 = vpack.c.bf16 %v930, %v929
        %v979 = vpack.c.bf16 %v946, %v945
        %v980 = vpack.c.bf16 %v962, %v961
        %v981 = vpack.c.bf16 %v642, %v641
        %v982 = vpack.c.bf16 %v916, %v915
        %v983 = vpack.c.bf16 %v932, %v931
        %v984 = vpack.c.bf16 %v948, %v947
        %v985 = vpack.c.bf16 %v964, %v963
        %v986 = vpack.c.bf16 %v644, %v643
        %v987 = vpack.c.bf16 %v918, %v917
        %v988 = vpack.c.bf16 %v934, %v933
        %v989 = vpack.c.bf16 %v950, %v949
        %v990 = vpack.c.bf16 %v966, %v965
        %v991 = vpack.c.bf16 %v646, %v645
        %v992 = vpack.c.bf16 %v920, %v919
        %v993 = vpack.c.bf16 %v936, %v935
        %v994 = vpack.c.bf16 %v952, %v951
        %v995 = vpack.c.bf16 %v968, %v967
        %v996 = vpack.c.bf16 %v648, %v647
        %v997 = vpack.c.bf16 %v922, %v921
        %v998 = vpack.c.bf16 %v938, %v937
        %v999 = vpack.c.bf16 %v954, %v953
        %v1000 = vpack.c.bf16 %v970, %v969
        %v1001 = vpack.c.bf16 %v650, %v649
        %v1002 = vpack.c.bf16 %v924, %v923
        %v1003 = vpack.c.bf16 %v940, %v939
        %v1004 = vpack.c.bf16 %v956, %v955
        %v1005 = vpack.c.bf16 %v972, %v971
        %v1006 = vpack.c.bf16 %v652, %v651
        %v1007 = vpack.c.bf16 %v926, %v925
        %v1008 = vpack.c.bf16 %v942, %v941
        %v1009 = vpack.c.bf16 %v958, %v957
        %v1010 = vpack.c.bf16 %v974, %v973
        %v1011 = vpack.c.bf16 %v654, %v653
        %v1012 = vpack.c.bf16 %v928, %v927
        %v1013 = vpack.c.bf16 %v944, %v943
        %v1014 = vpack.c.bf16 %v960, %v959
        %v1015 = vpack.c.bf16 %v976, %v975
        %v1016 = vpack.c.bf16 %v656, %v655
        %v1017 = vld [vmem:[#allocation2] sm:$0xff]
        %v1018 = vld [vmem:[#allocation2 + $0x8] sm:$0xff]
        %v1019 = vld [vmem:[#allocation2 + $0x10] sm:$0xff]
        %v1020 = vld [vmem:[#allocation2 + $0x18] sm:$0xff]
        %v1021 = vld [vmem:[#allocation2 + $0x20] sm:$0xff]
        %v1022 = vld [vmem:[#allocation2 + $0x28] sm:$0xff]
        %v1023 = vld [vmem:[#allocation2 + $0x30] sm:$0xff]
        %v1024 = vld [vmem:[#allocation2 + $0x38] sm:$0xff]
        %v1025 = vld [vmem:[#allocation2 + $0x40] sm:$0xff]
        %v1026 = vld [vmem:[#allocation2 + $0x48] sm:$0xff]
        %v1027 = vld [vmem:[#allocation2 + $0x50] sm:$0xff]
        %v1028 = vld [vmem:[#allocation2 + $0x58] sm:$0xff]
        %v1029 = vld [vmem:[#allocation2 + $0x60] sm:$0xff]
        %v1030 = vld [vmem:[#allocation2 + $0x68] sm:$0xff]
        %v1031 = vld [vmem:[#allocation2 + $0x70] sm:$0xff]
        %v1032 = vld [vmem:[#allocation2 + $0x78] sm:$0xff]
        %s1033 = smul.u32 %s23, 72
        %s1034 = smul.addr %s1033, 4
        %s1035 = scalar_lea.vmem %s3, %s1034
        %v1036 = vld [vmem:[%s1035] sm:$0xf]
        %v1037 = vld [vmem:[%s1035 + $0x4] sm:$0xf]
        %v1038 = vld [vmem:[%s1035 + $0x8] sm:$0xf]
        %v1039 = vld [vmem:[%s1035 + $0xc] sm:$0xf]
        %v1040 = vld [vmem:[%s1035 + $0x10] sm:$0xf]
        %v1041 = vld [vmem:[%s1035 + $0x14] sm:$0xf]
        %v1042 = vld [vmem:[%s1035 + $0x18] sm:$0xf]
        %v1043 = vld [vmem:[%s1035 + $0x1c] sm:$0xf]
        %v1044 = vld [vmem:[%s1035 + $0x20] sm:$0xf]
        %v1045 = vld [vmem:[%s1035 + $0x24] sm:$0xf]
        %v1046 = vld [vmem:[%s1035 + $0x28] sm:$0xf]
        %v1047 = vld [vmem:[%s1035 + $0x2c] sm:$0xf]
        %v1048 = vld [vmem:[%s1035 + $0x30] sm:$0xf]
        %v1049 = vld [vmem:[%s1035 + $0x34] sm:$0xf]
        %v1050 = vld [vmem:[%s1035 + $0x38] sm:$0xf]
        %v1051 = vld [vmem:[%s1035 + $0x3c] sm:$0xf]
        %v1052 = vld [vmem:[%s1035 + $0x40] sm:$0xf]
        %v1053 = vld [vmem:[%s1035 + $0x44] sm:$0xf]
        %v1054 = vld [vmem:[%s1035 + $0x48] sm:$0xf]
        %v1055 = vld [vmem:[%s1035 + $0x4c] sm:$0xf]
        %v1056 = vld [vmem:[%s1035 + $0x50] sm:$0xf]
        %v1057 = vld [vmem:[%s1035 + $0x54] sm:$0xf]
        %v1058 = vld [vmem:[%s1035 + $0x58] sm:$0xf]
        %v1059 = vld [vmem:[%s1035 + $0x5c] sm:$0xf]
        %v1060 = vld [vmem:[%s1035 + $0x60] sm:$0xf]
        %v1061 = vld [vmem:[%s1035 + $0x64] sm:$0xf]
        %v1062 = vld [vmem:[%s1035 + $0x68] sm:$0xf]
        %v1063 = vld [vmem:[%s1035 + $0x6c] sm:$0xf]
        %v1064 = vld [vmem:[%s1035 + $0x70] sm:$0xf]
        %v1065 = vld [vmem:[%s1035 + $0x74] sm:$0xf]
        %v1066 = vld [vmem:[%s1035 + $0x78] sm:$0xf]
        %v1067 = vld [vmem:[%s1035 + $0x7c] sm:$0xf]
        %v1068 = vld [vmem:[%s1035 + $0x80] sm:$0xf]
        %v1069 = vld [vmem:[%s1035 + $0x84] sm:$0xf]
        %v1070 = vld [vmem:[%s1035 + $0x88] sm:$0xf]
        %v1071 = vld [vmem:[%s1035 + $0x8c] sm:$0xf]
        %v1072 = vld [vmem:[%s1035 + $0x90] sm:$0xf]
        %v1073 = vld [vmem:[%s1035 + $0x94] sm:$0xf]
        %v1074 = vld [vmem:[%s1035 + $0x98] sm:$0xf]
        %v1075 = vld [vmem:[%s1035 + $0x9c] sm:$0xf]
        %v1076 = vld [vmem:[%s1035 + $0xa0] sm:$0xf]
        %v1077 = vld [vmem:[%s1035 + $0xa4] sm:$0xf]
        %v1078 = vld [vmem:[%s1035 + $0xa8] sm:$0xf]
        %v1079 = vld [vmem:[%s1035 + $0xac] sm:$0xf]
        %v1080 = vld [vmem:[%s1035 + $0xb0] sm:$0xf]
        %v1081 = vld [vmem:[%s1035 + $0xb4] sm:$0xf]
        %v1082 = vld [vmem:[%s1035 + $0xb8] sm:$0xf]
        %v1083 = vld [vmem:[%s1035 + $0xbc] sm:$0xf]
        %v1084 = vld [vmem:[%s1035 + $0xc0] sm:$0xf]
        %v1085 = vld [vmem:[%s1035 + $0xc4] sm:$0xf]
        %v1086 = vld [vmem:[%s1035 + $0xc8] sm:$0xf]
        %v1087 = vld [vmem:[%s1035 + $0xcc] sm:$0xf]
        %v1088 = vld [vmem:[%s1035 + $0xd0] sm:$0xf]
        %v1089 = vld [vmem:[%s1035 + $0xd4] sm:$0xf]
        %v1090 = vld [vmem:[%s1035 + $0xd8] sm:$0xf]
        %v1091 = vld [vmem:[%s1035 + $0xdc] sm:$0xf]
        %v1092 = vld [vmem:[%s1035 + $0xe0] sm:$0xf]
        %v1093 = vld [vmem:[%s1035 + $0xe4] sm:$0xf]
        %v1094 = vld [vmem:[%s1035 + $0xe8] sm:$0xf]
        %v1095 = vld [vmem:[%s1035 + $0xec] sm:$0xf]
        %v1096 = vld [vmem:[%s1035 + $0xf0] sm:$0xf]
        %v1097 = vld [vmem:[%s1035 + $0xf4] sm:$0xf]
        %v1098 = vld [vmem:[%s1035 + $0xf8] sm:$0xf]
        %v1099 = vld [vmem:[%s1035 + $0xfc] sm:$0xf]
        %v1100 = vld [vmem:[%s1035 + $0x100] sm:$0xf]
        %v1101 = vld [vmem:[%s1035 + $0x104] sm:$0xf]
        %v1102 = vld [vmem:[%s1035 + $0x108] sm:$0xf]
        %v1103 = vld [vmem:[%s1035 + $0x10c] sm:$0xf]
        %v1104 = vld [vmem:[%s1035 + $0x110] sm:$0xf]
        %v1105 = vld [vmem:[%s1035 + $0x114] sm:$0xf]
        %v1106 = vld [vmem:[%s1035 + $0x118] sm:$0xf]
        %v1107 = vld [vmem:[%s1035 + $0x11c] sm:$0xf]
        %v1180 = vunpack.c.l.b16 %v1036
        %v1181 = vunpack.c.l.b16 %v1037
        %v1182 = vunpack.c.l.b16 %v1038
        %v1183 = vunpack.c.l.b16 %v1039
        %v1184 = vunpack.c.l.b16 %v1040
        %v1185 = vunpack.c.l.b16 %v1041
        %v1186 = vunpack.c.l.b16 %v1042
        %v1187 = vunpack.c.l.b16 %v1043
        %v1188 = vunpack.c.l.b16 %v1044
        %v1189 = vunpack.c.l.b16 %v1045
        %v1190 = vunpack.c.l.b16 %v1046
        %v1191 = vunpack.c.l.b16 %v1047
        %v1192 = vunpack.c.l.b16 %v1048
        %v1193 = vunpack.c.l.b16 %v1049
        %v1194 = vunpack.c.l.b16 %v1050
        %v1195 = vunpack.c.l.b16 %v1051
        %v1196 = vunpack.c.l.b16 %v1052
        %v1197 = vunpack.c.l.b16 %v1053
        %v1198 = vunpack.c.l.b16 %v1054
        %v1199 = vunpack.c.l.b16 %v1055
        %v1200 = vunpack.c.l.b16 %v1056
        %v1201 = vunpack.c.l.b16 %v1057
        %v1202 = vunpack.c.l.b16 %v1058
        %v1203 = vunpack.c.l.b16 %v1059
        %v1204 = vunpack.c.l.b16 %v1060
        %v1205 = vunpack.c.l.b16 %v1061
        %v1206 = vunpack.c.l.b16 %v1062
        %v1207 = vunpack.c.l.b16 %v1063
        %v1208 = vunpack.c.l.b16 %v1064
        %v1209 = vunpack.c.l.b16 %v1065
        %v1210 = vunpack.c.l.b16 %v1066
        %v1211 = vunpack.c.l.b16 %v1067
        %v1212 = vunpack.c.l.b16 %v1068
        %v1213 = vunpack.c.l.b16 %v1069
        %v1214 = vunpack.c.l.b16 %v1070
        %v1215 = vunpack.c.l.b16 %v1071
        %v1216 = vunpack.c.l.b16 %v1072
        %v1217 = vunpack.c.l.b16 %v1073
        %v1218 = vunpack.c.l.b16 %v1074
        %v1219 = vunpack.c.l.b16 %v1075
        %v1220 = vunpack.c.l.b16 %v1076
        %v1221 = vunpack.c.l.b16 %v1077
        %v1222 = vunpack.c.l.b16 %v1078
        %v1223 = vunpack.c.l.b16 %v1079
        %v1224 = vunpack.c.l.b16 %v1080
        %v1225 = vunpack.c.l.b16 %v1081
        %v1226 = vunpack.c.l.b16 %v1082
        %v1227 = vunpack.c.l.b16 %v1083
        %v1228 = vunpack.c.l.b16 %v1084
        %v1229 = vunpack.c.l.b16 %v1085
        %v1230 = vunpack.c.l.b16 %v1086
        %v1231 = vunpack.c.l.b16 %v1087
        %v1232 = vunpack.c.l.b16 %v1088
        %v1233 = vunpack.c.l.b16 %v1089
        %v1234 = vunpack.c.l.b16 %v1090
        %v1235 = vunpack.c.l.b16 %v1091
        %v1236 = vunpack.c.l.b16 %v1092
        %v1237 = vunpack.c.l.b16 %v1093
        %v1238 = vunpack.c.l.b16 %v1094
        %v1239 = vunpack.c.l.b16 %v1095
        %v1240 = vunpack.c.l.b16 %v1096
        %v1241 = vunpack.c.l.b16 %v1097
        %v1242 = vunpack.c.l.b16 %v1098
        %v1243 = vunpack.c.l.b16 %v1099
        %v1244 = vunpack.c.l.b16 %v1100
        %v1245 = vunpack.c.l.b16 %v1101
        %v1246 = vunpack.c.l.b16 %v1102
        %v1247 = vunpack.c.l.b16 %v1103
        %v1248 = vunpack.c.l.b16 %v1104
        %v1249 = vunpack.c.l.b16 %v1105
        %v1250 = vunpack.c.l.b16 %v1106
        %v1251 = vunpack.c.l.b16 %v1107
        %v1252 = vpack.c.b16 %v1181, %v1180
        %v1253 = vpack.c.b16 %v1183, %v1182
        %v1254 = vpack.c.b16 %v1185, %v1184
        %v1255 = vpack.c.b16 %v1187, %v1186
        %v1256 = vpack.c.b16 %v1189, %v1188
        %v1257 = vpack.c.b16 %v1191, %v1190
        %v1258 = vpack.c.b16 %v1193, %v1192
        %v1259 = vpack.c.b16 %v1195, %v1194
        %v1260 = vpack.c.b16 %v1197, %v1196
        %v1261 = vpack.c.b16 %v1199, %v1198
        %v1262 = vpack.c.b16 %v1201, %v1200
        %v1263 = vpack.c.b16 %v1203, %v1202
        %v1264 = vpack.c.b16 %v1205, %v1204
        %v1265 = vpack.c.b16 %v1207, %v1206
        %v1266 = vpack.c.b16 %v1209, %v1208
        %v1267 = vpack.c.b16 %v1211, %v1210
        %v1268 = vpack.c.b16 %v1213, %v1212
        %v1269 = vpack.c.b16 %v1215, %v1214
        %v1270 = vpack.c.b16 %v1217, %v1216
        %v1271 = vpack.c.b16 %v1219, %v1218
        %v1272 = vpack.c.b16 %v1221, %v1220
        %v1273 = vpack.c.b16 %v1223, %v1222
        %v1274 = vpack.c.b16 %v1225, %v1224
        %v1275 = vpack.c.b16 %v1227, %v1226
        %v1276 = vpack.c.b16 %v1229, %v1228
        %v1277 = vpack.c.b16 %v1231, %v1230
        %v1278 = vpack.c.b16 %v1233, %v1232
        %v1279 = vpack.c.b16 %v1235, %v1234
        %v1280 = vpack.c.b16 %v1237, %v1236
        %v1281 = vpack.c.b16 %v1239, %v1238
        %v1282 = vpack.c.b16 %v1241, %v1240
        %v1283 = vpack.c.b16 %v1243, %v1242
        %v1284 = vpack.c.b16 %v1245, %v1244
        %v1285 = vpack.c.b16 %v1247, %v1246
        %v1286 = vpack.c.b16 %v1249, %v1248
        %v1287 = vpack.c.b16 %v1251, %v1250
        %v1325 = vsel %vm495, %v981, 0
        %v1328 = vsel %vm495, %v986, 0
        %v1331 = vsel %vm495, %v991, 0
        %v1334 = vsel %vm495, %v996, 0
        %v1337 = vsel %vm495, %v1001, 0
        %v1340 = vsel %vm495, %v1006, 0
        %v1343 = vsel %vm495, %v1011, 0
        %v1346 = vsel %vm495, %v1016, 0
        %1348 = vmatprep.subr.bf16.mxu0 0
        %1349 = vmatpush1.bf16.msra.mxu0 %v1252
        %1350 = vmatprep.subr.bf16.mxu0 0
        %1351 = vmatpush1.bf16.msra.mxu0 %v1253
        %1352 = vmatprep.subr.bf16.mxu0 0
        %1353 = vmatpush1.bf16.msra.mxu0 %v1254
        %1354 = vmatprep.subr.bf16.mxu0 0
        %1355 = vmatpush1.bf16.msra.mxu0 %v1255
        %1356 = vmatprep.subr.bf16.mxu0 0
        %1357 = vmatpush1.bf16.msra.mxu0 %v1256
        %1358 = vmatprep.subr.bf16.mxu0 0
        %1359 = vmatpush1.bf16.msra.mxu0 %v1257
        %1360 = vmatprep.subr.bf16.mxu0 0
        %1361 = vmatpush1.bf16.msra.mxu0 %v1258
        %1362 = vmatprep.subr.bf16.mxu0 0
        %1363 = vmatpush1.bf16.msra.mxu0 %v1259
        %1364 = vmatprep.subr.bf16.mxu0 0
        %1365 = vmatpush1.bf16.msra.mxu0 %v1260
        %1366 = vmatprep.subr.bf16.mxu0 0
        %1367 = vmatpush1.bf16.msra.mxu0 %v1261
        %1368 = vmatprep.subr.bf16.mxu0 0
        %1369 = vmatpush1.bf16.msra.mxu0 %v1262
        %1370 = vmatprep.subr.bf16.mxu0 0
        %1371 = vmatpush1.bf16.msra.mxu0 %v1263
        %1372 = vmatprep.subr.bf16.mxu0 0
        %1373 = vmatpush1.bf16.msra.mxu0 %v1264
        %1374 = vmatprep.subr.bf16.mxu0 0
        %1375 = vmatpush1.bf16.msra.mxu0 %v1265
        %1376 = vmatprep.subr.bf16.mxu0 0
        %1377 = vmatpush1.bf16.msra.mxu0 %v1266
        %1378 = vmatprep.subr.bf16.mxu0 0
        %1379 = vmatpush1.bf16.msra.mxu0 %v1267
        %1380 = vmatprep.mubr.bf16.mxu0 %v978
        %1381 = vmatmul.mubr.bf16.gmra.mrb[0].mxu0 %v977
        %v1382 = vpop.f32.mrb[0].mxu0
        %v1383 = vadd.f32 0.0, %v1382
        %v1384 = vpop.f32.mrb[0].mxu0
        %v1385 = vpop.f32.mrb[0].mxu0
        %v1386 = vadd.f32 0.0, %v1385
        %v1387 = vpop.f32.mrb[0].mxu0
        %1388 = vmatprep.mubr.bf16.mxu0 %v983
        %1389 = vmatmul.mubr.bf16.gmra.mrb[0].mxu0 %v982
        %v1390 = vpop.f32.mrb[0].mxu0
        %v1391 = vadd.f32 0.0, %v1390
        %v1392 = vpop.f32.mrb[0].mxu0
        %v1393 = vpop.f32.mrb[0].mxu0
        %v1394 = vadd.f32 0.0, %v1393
        %v1395 = vpop.f32.mrb[0].mxu0
        %1396 = vmatprep.mubr.bf16.mxu0 %v988
        %1397 = vmatmul.mubr.bf16.gmra.mrb[0].mxu0 %v987
        %v1398 = vpop.f32.mrb[0].mxu0
        %v1399 = vadd.f32 0.0, %v1398
        %v1400 = vpop.f32.mrb[0].mxu0
        %v1401 = vpop.f32.mrb[0].mxu0
        %v1402 = vadd.f32 0.0, %v1401
        %v1403 = vpop.f32.mrb[0].mxu0
        %1404 = vmatprep.mubr.bf16.mxu0 %v993
        %1405 = vmatmul.mubr.bf16.gmra.mrb[0].mxu0 %v992
        %v1406 = vpop.f32.mrb[0].mxu0
        %v1407 = vadd.f32 0.0, %v1406
        %v1408 = vpop.f32.mrb[0].mxu0
        %v1409 = vpop.f32.mrb[0].mxu0
        %v1410 = vadd.f32 0.0, %v1409
        %v1411 = vpop.f32.mrb[0].mxu0
        %1412 = vmatprep.mubr.bf16.mxu0 %v998
        %1413 = vmatmul.mubr.bf16.gmra.mrb[0].mxu0 %v997
        %v1414 = vpop.f32.mrb[0].mxu0
        %v1415 = vadd.f32 0.0, %v1414
        %v1416 = vpop.f32.mrb[0].mxu0
        %v1417 = vpop.f32.mrb[0].mxu0
        %v1418 = vadd.f32 0.0, %v1417
        %v1419 = vpop.f32.mrb[0].mxu0
        %1420 = vmatprep.mubr.bf16.mxu0 %v1003
        %1421 = vmatmul.mubr.bf16.gmra.mrb[0].mxu0 %v1002
        %v1422 = vpop.f32.mrb[0].mxu0
        %v1423 = vadd.f32 0.0, %v1422
        %v1424 = vpop.f32.mrb[0].mxu0
        %v1425 = vpop.f32.mrb[0].mxu0
        %v1426 = vadd.f32 0.0, %v1425
        %v1427 = vpop.f32.mrb[0].mxu0
        %1428 = vmatprep.mubr.bf16.mxu0 %v1008
        %1429 = vmatmul.mubr.bf16.gmra.mrb[0].mxu0 %v1007
        %v1430 = vpop.f32.mrb[0].mxu0
        %v1431 = vadd.f32 0.0, %v1430
        %v1432 = vpop.f32.mrb[0].mxu0
        %v1433 = vpop.f32.mrb[0].mxu0
        %v1434 = vadd.f32 0.0, %v1433
        %v1435 = vpop.f32.mrb[0].mxu0
        %1436 = vmatprep.mubr.bf16.mxu0 %v1013
        %1437 = vmatmul.mubr.bf16.gmra.mrb[0].mxu0 %v1012
        %v1438 = vpop.f32.mrb[0].mxu0
        %v1439 = vadd.f32 0.0, %v1438
        %v1440 = vpop.f32.mrb[0].mxu0
        %v1441 = vpop.f32.mrb[0].mxu0
        %v1442 = vadd.f32 0.0, %v1441
        %v1443 = vpop.f32.mrb[0].mxu0
        %1444 = vdwg.mxu0
        %1445 = vmatprep.subr.bf16.mxu0 0
        %1446 = vmatpush1.bf16.msra.mxu0 %v1268
        %1447 = vmatprep.subr.bf16.mxu0 0
        %1448 = vmatpush1.bf16.msra.mxu0 %v1269
        %1449 = vmatprep.subr.bf16.mxu0 0
        %1450 = vmatpush1.bf16.msra.mxu0 %v1270
        %1451 = vmatprep.subr.bf16.mxu0 0
        %1452 = vmatpush1.bf16.msra.mxu0 %v1271
        %1453 = vmatprep.subr.bf16.mxu0 0
        %1454 = vmatpush1.bf16.msra.mxu0 %v1272
        %1455 = vmatprep.subr.bf16.mxu0 0
        %1456 = vmatpush1.bf16.msra.mxu0 %v1273
        %1457 = vmatprep.subr.bf16.mxu0 0
        %1458 = vmatpush1.bf16.msra.mxu0 %v1274
        %1459 = vmatprep.subr.bf16.mxu0 0
        %1460 = vmatpush1.bf16.msra.mxu0 %v1275
        %1461 = vmatprep.subr.bf16.mxu0 0
        %1462 = vmatpush1.bf16.msra.mxu0 %v1276
        %1463 = vmatprep.subr.bf16.mxu0 0
        %1464 = vmatpush1.bf16.msra.mxu0 %v1277
        %1465 = vmatprep.subr.bf16.mxu0 0
        %1466 = vmatpush1.bf16.msra.mxu0 %v1278
        %1467 = vmatprep.subr.bf16.mxu0 0
        %1468 = vmatpush1.bf16.msra.mxu0 %v1279
        %1469 = vmatprep.subr.bf16.mxu0 0
        %1470 = vmatpush1.bf16.msra.mxu0 %v1280
        %1471 = vmatprep.subr.bf16.mxu0 0
        %1472 = vmatpush1.bf16.msra.mxu0 %v1281
        %1473 = vmatprep.subr.bf16.mxu0 0
        %1474 = vmatpush1.bf16.msra.mxu0 %v1282
        %1475 = vmatprep.subr.bf16.mxu0 0
        %1476 = vmatpush1.bf16.msra.mxu0 %v1283
        %1477 = vmatprep.mubr.bf16.mxu0 %v980
        %1478 = vmatmul.mubr.bf16.gmra.mrb[0].mxu0 %v979
        %v1479 = vpop.f32.mrb[0].mxu0
        %v1480 = vadd.f32 %v1383, %v1479
        %v1481 = vpop.f32.mrb[0].mxu0
        %v1482 = vpop.f32.mrb[0].mxu0
        %v1483 = vadd.f32 %v1386, %v1482
        %v1484 = vpop.f32.mrb[0].mxu0
        %1485 = vmatprep.mubr.bf16.mxu0 %v985
        %1486 = vmatmul.mubr.bf16.gmra.mrb[0].mxu0 %v984
        %v1487 = vpop.f32.mrb[0].mxu0
        %v1488 = vadd.f32 %v1391, %v1487
        %v1489 = vpop.f32.mrb[0].mxu0
        %v1490 = vpop.f32.mrb[0].mxu0
        %v1491 = vadd.f32 %v1394, %v1490
        %v1492 = vpop.f32.mrb[0].mxu0
        %1493 = vmatprep.mubr.bf16.mxu0 %v990
        %1494 = vmatmul.mubr.bf16.gmra.mrb[0].mxu0 %v989
        %v1495 = vpop.f32.mrb[0].mxu0
        %v1496 = vadd.f32 %v1399, %v1495
        %v1497 = vpop.f32.mrb[0].mxu0
        %v1498 = vpop.f32.mrb[0].mxu0
        %v1499 = vadd.f32 %v1402, %v1498
        %v1500 = vpop.f32.mrb[0].mxu0
        %1501 = vmatprep.mubr.bf16.mxu0 %v995
        %1502 = vmatmul.mubr.bf16.gmra.mrb[0].mxu0 %v994
        %v1503 = vpop.f32.mrb[0].mxu0
        %v1504 = vadd.f32 %v1407, %v1503
        %v1505 = vpop.f32.mrb[0].mxu0
        %v1506 = vpop.f32.mrb[0].mxu0
        %v1507 = vadd.f32 %v1410, %v1506
        %v1508 = vpop.f32.mrb[0].mxu0
        %1509 = vmatprep.mubr.bf16.mxu0 %v1000
        %1510 = vmatmul.mubr.bf16.gmra.mrb[0].mxu0 %v999
        %v1511 = vpop.f32.mrb[0].mxu0
        %v1512 = vadd.f32 %v1415, %v1511
        %v1513 = vpop.f32.mrb[0].mxu0
        %v1514 = vpop.f32.mrb[0].mxu0
        %v1515 = vadd.f32 %v1418, %v1514
        %v1516 = vpop.f32.mrb[0].mxu0
        %1517 = vmatprep.mubr.bf16.mxu0 %v1005
        %1518 = vmatmul.mubr.bf16.gmra.mrb[0].mxu0 %v1004
        %v1519 = vpop.f32.mrb[0].mxu0
        %v1520 = vadd.f32 %v1423, %v1519
        %v1521 = vpop.f32.mrb[0].mxu0
        %v1522 = vpop.f32.mrb[0].mxu0
        %v1523 = vadd.f32 %v1426, %v1522
        %v1524 = vpop.f32.mrb[0].mxu0
        %1525 = vmatprep.mubr.bf16.mxu0 %v1010
        %1526 = vmatmul.mubr.bf16.gmra.mrb[0].mxu0 %v1009
        %v1527 = vpop.f32.mrb[0].mxu0
        %v1528 = vadd.f32 %v1431, %v1527
        %v1529 = vpop.f32.mrb[0].mxu0
        %v1530 = vpop.f32.mrb[0].mxu0
        %v1531 = vadd.f32 %v1434, %v1530
        %v1532 = vpop.f32.mrb[0].mxu0
        %1533 = vmatprep.mubr.bf16.mxu0 %v1015
        %1534 = vmatmul.mubr.bf16.gmra.mrb[0].mxu0 %v1014
        %v1535 = vpop.f32.mrb[0].mxu0
        %v1536 = vadd.f32 %v1439, %v1535
        %v1537 = vpop.f32.mrb[0].mxu0
        %v1538 = vpop.f32.mrb[0].mxu0
        %v1539 = vadd.f32 %v1442, %v1538
        %v1540 = vpop.f32.mrb[0].mxu0
        %1541 = vdwg.mxu0
        %1542 = vmatprep.subr.bf16.mxu0 0
        %1543 = vmatpush1.bf16.msra.mxu0 %v1284
        %1544 = vmatprep.subr.bf16.mxu0 0
        %1545 = vmatpush1.bf16.msra.mxu0 %v1285
        %1546 = vmatprep.subr.bf16.mxu0 0
        %1547 = vmatpush1.bf16.msra.mxu0 %v1286
        %1548 = vmatprep.subr.bf16.mxu0 0
        %1549 = vmatpush1.bf16.msra.mxu0 %v1287
        %1550 = vmatprep.subr.bf16.mxu0 0
        %1551 = vmatpush1.bf16.msra.mxu0 0
        %1552 = vmatprep.subr.bf16.mxu0 0
        %1553 = vmatpush1.bf16.msra.mxu0 0
        %1554 = vmatprep.subr.bf16.mxu0 0
        %1555 = vmatpush1.bf16.msra.mxu0 0
        %1556 = vmatprep.subr.bf16.mxu0 0
        %1557 = vmatpush1.bf16.msra.mxu0 0
        %1558 = vmatprep.subr.bf16.mxu0 0
        %1559 = vmatpush1.bf16.msra.mxu0 0
        %1560 = vmatprep.subr.bf16.mxu0 0
        %1561 = vmatpush1.bf16.msra.mxu0 0
        %1562 = vmatprep.subr.bf16.mxu0 0
        %1563 = vmatpush1.bf16.msra.mxu0 0
        %1564 = vmatprep.subr.bf16.mxu0 0
        %1565 = vmatpush1.bf16.msra.mxu0 0
        %1566 = vmatprep.subr.bf16.mxu0 0
        %1567 = vmatpush1.bf16.msra.mxu0 0
        %1568 = vmatprep.subr.bf16.mxu0 0
        %1569 = vmatpush1.bf16.msra.mxu0 0
        %1570 = vmatprep.subr.bf16.mxu0 0
        %1571 = vmatpush1.bf16.msra.mxu0 0
        %1572 = vmatprep.subr.bf16.mxu0 0
        %1573 = vmatpush1.bf16.msra.mxu0 0
        %1574 = vmatprep.mubr.bf16.mxu0 0
        %1575 = vmatmul.mubr.bf16.gmra.mrb[0].mxu0 %v1325
        %v1576 = vpop.f32.mrb[0].mxu0
        %v1577 = vadd.f32 %v1480, %v1576
        %v1578 = vpop.f32.mrb[0].mxu0
        %v1579 = vpop.f32.mrb[0].mxu0
        %v1580 = vadd.f32 %v1483, %v1579
        %v1581 = vpop.f32.mrb[0].mxu0
        %1582 = vmatprep.mubr.bf16.mxu0 0
        %1583 = vmatmul.mubr.bf16.gmra.mrb[0].mxu0 %v1328
        %v1584 = vpop.f32.mrb[0].mxu0
        %v1585 = vadd.f32 %v1488, %v1584
        %v1586 = vpop.f32.mrb[0].mxu0
        %v1587 = vpop.f32.mrb[0].mxu0
        %v1588 = vadd.f32 %v1491, %v1587
        %v1589 = vpop.f32.mrb[0].mxu0
        %1590 = vmatprep.mubr.bf16.mxu0 0
        %1591 = vmatmul.mubr.bf16.gmra.mrb[0].mxu0 %v1331
        %v1592 = vpop.f32.mrb[0].mxu0
        %v1593 = vadd.f32 %v1496, %v1592
        %v1594 = vpop.f32.mrb[0].mxu0
        %v1595 = vpop.f32.mrb[0].mxu0
        %v1596 = vadd.f32 %v1499, %v1595
        %v1597 = vpop.f32.mrb[0].mxu0
        %1598 = vmatprep.mubr.bf16.mxu0 0
        %1599 = vmatmul.mubr.bf16.gmra.mrb[0].mxu0 %v1334
        %v1600 = vpop.f32.mrb[0].mxu0
        %v1601 = vadd.f32 %v1504, %v1600
        %v1602 = vpop.f32.mrb[0].mxu0
        %v1603 = vpop.f32.mrb[0].mxu0
        %v1604 = vadd.f32 %v1507, %v1603
        %v1605 = vpop.f32.mrb[0].mxu0
        %1606 = vmatprep.mubr.bf16.mxu0 0
        %1607 = vmatmul.mubr.bf16.gmra.mrb[0].mxu0 %v1337
        %v1608 = vpop.f32.mrb[0].mxu0
        %v1609 = vadd.f32 %v1512, %v1608
        %v1610 = vpop.f32.mrb[0].mxu0
        %v1611 = vpop.f32.mrb[0].mxu0
        %v1612 = vadd.f32 %v1515, %v1611
        %v1613 = vpop.f32.mrb[0].mxu0
        %1614 = vmatprep.mubr.bf16.mxu0 0
        %1615 = vmatmul.mubr.bf16.gmra.mrb[0].mxu0 %v1340
        %v1616 = vpop.f32.mrb[0].mxu0
        %v1617 = vadd.f32 %v1520, %v1616
        %v1618 = vpop.f32.mrb[0].mxu0
        %v1619 = vpop.f32.mrb[0].mxu0
        %v1620 = vadd.f32 %v1523, %v1619
        %v1621 = vpop.f32.mrb[0].mxu0
        %1622 = vmatprep.mubr.bf16.mxu0 0
        %1623 = vmatmul.mubr.bf16.gmra.mrb[0].mxu0 %v1343
        %v1624 = vpop.f32.mrb[0].mxu0
        %v1625 = vadd.f32 %v1528, %v1624
        %v1626 = vpop.f32.mrb[0].mxu0
        %v1627 = vpop.f32.mrb[0].mxu0
        %v1628 = vadd.f32 %v1531, %v1627
        %v1629 = vpop.f32.mrb[0].mxu0
        %1630 = vmatprep.mubr.bf16.mxu0 0
        %1631 = vmatmul.mubr.bf16.gmra.mrb[0].mxu0 %v1346
        %v1632 = vpop.f32.mrb[0].mxu0
        %v1633 = vadd.f32 %v1536, %v1632
        %v1634 = vpop.f32.mrb[0].mxu0
        %v1635 = vpop.f32.mrb[0].mxu0
        %v1636 = vadd.f32 %v1539, %v1635
        %v1637 = vpop.f32.mrb[0].mxu0
        %1638 = vdwg.mxu0
        %v1639 = vadd.f32 %v1017, %v1577
        %v1640 = vadd.f32 %v1018, %v1580
        %v1641 = vadd.f32 %v1019, %v1585
        %v1642 = vadd.f32 %v1020, %v1588
        %v1643 = vadd.f32 %v1021, %v1593
        %v1644 = vadd.f32 %v1022, %v1596
        %v1645 = vadd.f32 %v1023, %v1601
        %v1646 = vadd.f32 %v1024, %v1604
        %v1647 = vadd.f32 %v1025, %v1609
        %v1648 = vadd.f32 %v1026, %v1612
        %v1649 = vadd.f32 %v1027, %v1617
        %v1650 = vadd.f32 %v1028, %v1620
        %v1651 = vadd.f32 %v1029, %v1625
        %v1652 = vadd.f32 %v1030, %v1628
        %v1653 = vadd.f32 %v1031, %v1633
        %v1654 = vadd.f32 %v1032, %v1636
        %1655 = vst.msk [vmem:[#allocation2] sm:$0xff] %vm495, %v1639
        %1656 = vst.msk [vmem:[#allocation2 + $0x8] sm:$0xff] %vm495, %v1640
        %1657 = vst.msk [vmem:[#allocation2 + $0x10] sm:$0xff] %vm495, %v1641
        %1658 = vst.msk [vmem:[#allocation2 + $0x18] sm:$0xff] %vm495, %v1642
        %1659 = vst.msk [vmem:[#allocation2 + $0x20] sm:$0xff] %vm495, %v1643
        %1660 = vst.msk [vmem:[#allocation2 + $0x28] sm:$0xff] %vm495, %v1644
        %1661 = vst.msk [vmem:[#allocation2 + $0x30] sm:$0xff] %vm495, %v1645
        %1662 = vst.msk [vmem:[#allocation2 + $0x38] sm:$0xff] %vm495, %v1646
        %1663 = vst.msk [vmem:[#allocation2 + $0x40] sm:$0xff] %vm495, %v1647
        %1664 = vst.msk [vmem:[#allocation2 + $0x48] sm:$0xff] %vm495, %v1648
        %1665 = vst.msk [vmem:[#allocation2 + $0x50] sm:$0xff] %vm495, %v1649
        %1666 = vst.msk [vmem:[#allocation2 + $0x58] sm:$0xff] %vm495, %v1650
        %1667 = vst.msk [vmem:[#allocation2 + $0x60] sm:$0xff] %vm495, %v1651
        %1668 = vst.msk [vmem:[#allocation2 + $0x68] sm:$0xff] %vm495, %v1652
        %1669 = vst.msk [vmem:[#allocation2 + $0x70] sm:$0xff] %vm495, %v1653
        %1670 = vst.msk [vmem:[#allocation2 + $0x78] sm:$0xff] %vm495, %v1654
      $region48: #{voxres_forward.5} parent=39 // pred_fallthru
        _
      %p1671 = scmp.eq.s32.totalorder %s23, 2
      // Predicated region
      $region49: #{voxres_forward.5} parent=39 // pred_check
        %p1672 = pneg %p1671
      $region50: #{voxres_forward.5} parent=39 // pred_check_branch
        %1674 = sbr.rel (%p1672) target = $region52
      $region51: #{voxres_forward.5} parent=39 // pred_region
        %v1675 = vld [vmem:[#allocation2] sm:$0xff]
        %v1676 = vld [vmem:[#allocation2 + $0x8] sm:$0xff]
        %v1677 = vld [vmem:[#allocation2 + $0x10] sm:$0xff]
        %v1678 = vld [vmem:[#allocation2 + $0x18] sm:$0xff]
        %v1679 = vld [vmem:[#allocation2 + $0x20] sm:$0xff]
        %v1680 = vld [vmem:[#allocation2 + $0x28] sm:$0xff]
        %v1681 = vld [vmem:[#allocation2 + $0x30] sm:$0xff]
        %v1682 = vld [vmem:[#allocation2 + $0x38] sm:$0xff]
        %v1683 = vld [vmem:[#allocation2 + $0x40] sm:$0xff]
        %v1684 = vld [vmem:[#allocation2 + $0x48] sm:$0xff]
        %v1685 = vld [vmem:[#allocation2 + $0x50] sm:$0xff]
        %v1686 = vld [vmem:[#allocation2 + $0x58] sm:$0xff]
        %v1687 = vld [vmem:[#allocation2 + $0x60] sm:$0xff]
        %v1688 = vld [vmem:[#allocation2 + $0x68] sm:$0xff]
        %v1689 = vld [vmem:[#allocation2 + $0x70] sm:$0xff]
        %v1690 = vld [vmem:[#allocation2 + $0x78] sm:$0xff]
        %vm1691 = vcmask 523264
        %1692 = vst.msk [vmem:[%s309] sm:$0xff] %vm1691, %v1675
        %1693 = vst.msk [vmem:[%s309 + $0x8] sm:$0xff] %vm1691, %v1676
        %1694 = vst.msk [vmem:[%s309 + $0x10] sm:$0xff] %vm1691, %v1677
        %1695 = vst.msk [vmem:[%s309 + $0x18] sm:$0xff] %vm1691, %v1678
        %1696 = vst.msk [vmem:[%s309 + $0x20] sm:$0xff] %vm1691, %v1679
        %1697 = vst.msk [vmem:[%s309 + $0x28] sm:$0xff] %vm1691, %v1680
        %1698 = vst.msk [vmem:[%s309 + $0x30] sm:$0xff] %vm1691, %v1681
        %1699 = vst.msk [vmem:[%s309 + $0x38] sm:$0xff] %vm1691, %v1682
        %1700 = vst.msk [vmem:[%s309 + $0x40] sm:$0xff] %vm1691, %v1683
        %1701 = vst.msk [vmem:[%s309 + $0x48] sm:$0xff] %vm1691, %v1684
        %1702 = vst.msk [vmem:[%s309 + $0x50] sm:$0xff] %vm1691, %v1685
        %1703 = vst.msk [vmem:[%s309 + $0x58] sm:$0xff] %vm1691, %v1686
        %1704 = vst.msk [vmem:[%s309 + $0x60] sm:$0xff] %vm1691, %v1687
        %1705 = vst.msk [vmem:[%s309 + $0x68] sm:$0xff] %vm1691, %v1688
        %1706 = vst.msk [vmem:[%s309 + $0x70] sm:$0xff] %vm1691, %v1689
        %1707 = vst.msk [vmem:[%s309 + $0x78] sm:$0xff] %vm1691, %v1690
      $region52: #{voxres_forward.5} parent=39 // pred_fallthru
        _
      %p1708 = scmp.lt.s32.totalorder %s21, 1
      %s1709 = scalar_select %p1708, %s21, 1
      %p1710 = scmp.lt.s32.totalorder %s22, 7
      %s1711 = scalar_select %p1710, %s22, 7
      %s1712 = smul.addr %s1711, 16
      %s1713 = smul.addr %s1709, 128
      %s1714 = sadd.s32 %s1712, %s1713
      %s1715 = smul.addr %s1714, 8
      %s1716 = scalar_lea.vmem %s5, %s1715
      // Predicated region
      $region53: #{voxres_forward.5} parent=39 // pred_check
        %p1717 = pneg %p179
      $region54: #{voxres_forward.5} parent=39 // pred_check_branch
        %1719 = sbr.rel (%p1717) target = $region56
      $region55: #{voxres_forward.5} parent=39 // pred_region
        _
      $region56: #{voxres_forward.5} parent=39 // pred_fallthru
        _
    $region40: #{voxres_forward.5} parent=5 // pred_fallthru
      _
    %p1720 = scmp.le.s32.totalorder 2, %s11
    // Predicated region
    $region57: #{voxres_forward.5} parent=5 // pred_check
      %p1721 = pneg %p1720
    $region58: #{voxres_forward.5} parent=5 // pred_check_branch
      %1723 = sbr.rel (%p1721) target = $region60
    $region59: #{voxres_forward.5} parent=5 // pred_region
      %s1724 = ssub.s32 %s11, 2
      // Predicated region
      $region61: #{voxres_forward.5} parent=59 // pred_check
        %p1725 = pneg %p185
      $region62: #{voxres_forward.5} parent=59 // pred_check_branch
        %1727 = sbr.rel (%p1725) target = $region64
      $region63: #{voxres_forward.5} parent=59 // pred_region
        %p1728 = scmp.lt.s32.totalorder %s24, 1
        %s1729 = scalar_select %p1728, %s24, 1
        %p1730 = scmp.lt.s32.totalorder %s25, 7
        %s1731 = scalar_select %p1730, %s25, 7
        %s1732 = smul.addr %s1731, 16
        %s1733 = smul.addr %s1729, 128
        %s1734 = sadd.s32 %s1732, %s1733
        %s1735 = smul.addr %s1734, 8
        %s1736 = scalar_lea.vmem %s5, %s1735
      $region64: #{voxres_forward.5} parent=59 // pred_fallthru
        _
    $region60: #{voxres_forward.5} parent=5 // pred_fallthru
      _
  $region6: #{voxres_forward.5} parent=0 // loop_footer
    %s15 = sadd.s32 1, %s11
  $region7: #{voxres_forward.5} parent=0 // loop_footer_branch
    %10 = sbr.rel target = $region3
  $region8: #{voxres_forward.5} parent=0 // loop_exit
    _

</llo_original>
